<compile_context>
chip_gen: v7x
topology: tpu7x:2x2x1
jax: 0.10.0
libtpu: 0.0.40
codegen_flags: <defaults>
</compile_context>

<pallas_src>
import functools

import jax
import jax.numpy as jnp
from jax import lax
from jax.experimental import pallas as pl
from jax.experimental.pallas import tpu as pltpu


# --------------------------------------------------------------------------
# Kernel
# --------------------------------------------------------------------------
def _aspp_kernel(x0_ref, xp_hbm, w0_ref, dw_ref, pw_ref, wproj_ref,
                 bbias_ref, pbias_ref, out_ref,
                 xslab_ref, acc_ref, sem_ref,
                 *, W, Cin, rates, maxd, tile_h):
    """One (batch, row-tile) step of the fused ASPP forward."""
    slab_h = tile_h + 2 * maxd
    b = pl.program_id(0)
    t = pl.program_id(1)
    n_t = pl.num_programs(1)

    # ---------------- manual double-buffered halo-slab DMA ----------------
    def start_slab_copy(t_target, slot):
        row0 = t_target * tile_h
        if tile_h % 8 == 0:
            row0 = pl.multiple_of(row0, 8)
        pltpu.make_async_copy(
            xp_hbm.at[b, pl.ds(row0, slab_h)],   # (slab_h, Wp, Cin) in HBM
            xslab_ref.at[slot],
            sem_ref.at[slot],
        ).start()

    slot = t % 2

    @pl.when(t == 0)                # prime: first row-tile of this batch elem
    def _():
        start_slab_copy(t, slot)

    @pl.when(t + 1 < n_t)           # prefetch next row-tile into other slot
    def _():
        start_slab_copy(t + 1, 1 - slot)

    # wait for the current slab
    pltpu.make_async_copy(
        xp_hbm.at[b, pl.ds(t * tile_h, slab_h)],
        xslab_ref.at[slot],
        sem_ref.at[slot],
    ).wait()

    R = tile_h * W
    bbias = bbias_ref[...]                                    # (5, Cout) f32

    # ---------------- branch 0: 1x1 conv (BN scale folded) + bias + ReLU --
    x0 = x0_ref[0].reshape(R, Cin)                            # bf16, aligned
    z0 = jnp.dot(x0, w0_ref[...], preferred_element_type=jnp.float32)
    b0 = jnp.maximum(z0 + bbias[0], 0.0)
    # concat + projection expressed as a sum of partial matmuls
    acc_ref[...] = jnp.dot(b0.astype(jnp.bfloat16), wproj_ref[0],
                           preferred_element_type=jnp.float32)

    # ---------------- branches 1..4: depthwise 3x3 dilated -> 1x1 ---------
    slab = xslab_ref[slot]                                    # (slab_h, Wp, Cin) bf16
    dw = dw_ref[...]                                          # (4, 3, 3, Cin) f32

    col_cache = {}

    def wcol(c0):
        # One unaligned (sublane) column slice per distinct W-offset, shared
        # across the 3 ky taps and deduped across branches.
        if c0 not in col_cache:
            col_cache[c0] = slab[:, c0:c0 + W, :].astype(jnp.float32)
        return col_cache[c0]

    for k, d in enumerate(rates):
        cols = [wcol(maxd + (kx - 1) * d) for kx in range(3)]
        z = jnp.zeros((tile_h, W, Cin), jnp.float32)
        for ky in range(3):
            r0 = maxd + (ky - 1) * d          # leading-dim slice: cheap
            for kx in range(3):
                z = z + cols[kx][r0:r0 + tile_h] * dw[k, ky, kx]
        y = jnp.dot(z.reshape(R, Cin).astype(jnp.bfloat16), pw_ref[k],
                    preferred_element_type=jnp.float32)
        bk = jnp.maximum(y + bbias[k + 1], 0.0)
        acc_ref[...] += jnp.dot(bk.astype(jnp.bfloat16), wproj_ref[k + 1],
                                preferred_element_type=jnp.float32)

    # ---------------- projection BN bias + ReLU ----------------------------
    out = jnp.maximum(acc_ref[...] + pbias_ref[...], 0.0)
    out_ref[0] = out.reshape(tile_h, W, out_ref.shape[-1]).astype(out_ref.dtype)


# --------------------------------------------------------------------------
# Host-side parameter folding (BN scale -> weights)
# --------------------------------------------------------------------------
def fold_params(params):
    """Fold BN scales into the 1x1-conv weights (exact, per-output-channel)."""
    Cout = params["w0"].shape[1]
    bscale = params["bscale"]                                  # (5, Cout)
    w0_s = params["w0"] * bscale[0][None, :]                   # (Cin, Cout)
    pw_s = params["pw"] * bscale[1:, None, :]                  # (4, Cin, Cout)
    wproj_s = (params["wproj"] * params["pscale"]).reshape(5, Cout, Cout)
    return (w0_s, params["dw"].astype(jnp.float32), pw_s, wproj_s,
            params["bbias"].astype(jnp.float32),
            params["pbias"].astype(jnp.float32))


# --------------------------------------------------------------------------
# Wrapper
# --------------------------------------------------------------------------
def aspp_forward(x_nchw, params, rates, *, tile_h=8):
    """Fused ASPP forward.  Input/output are NCHW (PyTorch layout)."""
    rates = tuple(int(r) for r in rates)
    maxd = max(rates)

    x = jnp.transpose(x_nchw, (0, 2, 3, 1))                    # -> NHWC
    B, H, W, Cin = x.shape
    Cout = params["w0"].shape[1]
    assert H % tile_h == 0, "H must be divisible by tile_h"
    n_t = H // tile_h
    Wp = W + 2 * maxd
    slab_h = tile_h + 2 * maxd
    R = tile_h * W

    # one-time host prep: BN folding + bf16 casting of matmul operands
    w0_s, dw, pw_s, wproj_s, bbias, pbias = fold_params(params)
    w0_bf = w0_s.astype(jnp.bfloat16)
    pw_bf = pw_s.astype(jnp.bfloat16)
    wproj_bf = wproj_s.astype(jnp.bfloat16)

    x_bf = x.astype(jnp.bfloat16)
    # TODO(synk): the padded HBM copy costs one extra read+write of x; a
    # halo-aware index_map / in-kernel boundary zero-fill could remove it.
    xp = jnp.pad(x_bf, ((0, 0), (maxd, maxd), (maxd, maxd), (0, 0)))

    kernel = functools.partial(_aspp_kernel, W=W, Cin=Cin,
                               rates=rates, maxd=maxd, tile_h=tile_h)

    out = pl.pallas_call(
        kernel,
        out_shape=jax.ShapeDtypeStruct((B, H, W, Cout), jnp.float32),
        grid=(B, n_t),
        in_specs=[
            # unpadded x tile for branch 0 (aligned, auto-pipelined)
            pl.BlockSpec((1, tile_h, W, Cin), lambda b, t: (b, t, 0, 0)),
            # padded x stays in HBM; halo'd slabs are DMA'd manually
            pl.BlockSpec(memory_space=pl.ANY),
            # weights: constant index maps -> resident in VMEM across steps
            pl.BlockSpec((Cin, Cout), lambda b, t: (0, 0)),
            pl.BlockSpec((4, 3, 3, Cin), lambda b, t: (0, 0, 0, 0)),
            pl.BlockSpec((4, Cin, Cout), lambda b, t: (0, 0, 0)),
            pl.BlockSpec((5, Cout, Cout), lambda b, t: (0, 0, 0)),
            pl.BlockSpec((5, Cout), lambda b, t: (0, 0)),
            pl.BlockSpec((1, Cout), lambda b, t: (0, 0)),
        ],
        out_specs=pl.BlockSpec((1, tile_h, W, Cout), lambda b, t: (b, t, 0, 0)),
        scratch_shapes=[
            pltpu.VMEM((2, slab_h, Wp, Cin), jnp.bfloat16),   # double-buffered slab
            pltpu.VMEM((R, Cout), jnp.float32),               # projection accumulator
            pltpu.SemaphoreType.DMA((2,)),
        ],
        compiler_params=pltpu.CompilerParams(
            dimension_semantics=("parallel", "arbitrary"),
            vmem_limit_bytes=48 * 1024 * 1024,
        ),
    )(x_bf, xp, w0_bf, dw, pw_bf, wproj_bf, bbias, pbias)

    return jnp.transpose(out, (0, 3, 1, 2))                   # back to NCHW


# --------------------------------------------------------------------------
# Synthetic parameters + pure-JAX reference
# --------------------------------------------------------------------------
def make_params(key, Cin, Cout):
    """Deterministic synthetic parameters (BN folded to scale/bias)."""
    ks = jax.random.split(key, 12)
    w0 = 0.1 * jax.random.normal(ks[0], (Cin, Cout), jnp.float32)
    dw = 0.1 * jax.random.normal(ks[1], (4, 3, 3, Cin), jnp.float32)
    pw = 0.1 * jax.random.normal(ks[2], (4, Cin, Cout), jnp.float32)
    wproj = 0.1 * jax.random.normal(ks[3], (5 * Cout, Cout), jnp.float32)

    # branch BN params (eps = 1e-3), inference mode (running stats)
    gamma = 1.0 + 0.1 * jax.random.normal(ks[4], (5, Cout), jnp.float32)
    beta = 0.1 * jax.random.normal(ks[5], (5, Cout), jnp.float32)
    mean = 0.1 * jax.random.normal(ks[6], (5, Cout), jnp.float32)
    var = 1.0 + 0.1 * jnp.abs(jax.random.normal(ks[7], (5, Cout), jnp.float32))
    bscale = gamma / jnp.sqrt(var + 1e-3)
    bbias = beta - mean * bscale

    # project BN params (eps = 1e-5)
    pgamma = 1.0 + 0.1 * jax.random.normal(ks[8], (1, Cout), jnp.float32)
    pbeta = 0.1 * jax.random.normal(ks[9], (1, Cout), jnp.float32)
    pmean = 0.1 * jax.random.normal(ks[10], (1, Cout), jnp.float32)
    pvar = 1.0 + 0.1 * jnp.abs(jax.random.normal(ks[11], (1, Cout), jnp.float32))
    pscale = pgamma / jnp.sqrt(pvar + 1e-5)
    pbias = pbeta - pmean * pscale

    # TODO(synk): PyTorch BN in train mode uses batch statistics; we implement
    # inference-mode BN with (synthetic) running stats.
    return dict(w0=w0, dw=dw, pw=pw, wproj=wproj, bscale=bscale, bbias=bbias,
                pscale=pscale, pbias=pbias)


def ref_aspp(x_nhwc, w0_s, dw, pw_s, wproj_s, bbias, pbias, rates):
    """Pure-JAX reference (NHWC) on the folded parameterization."""
    Cin = x_nhwc.shape[-1]
    feats = []
    y0 = jnp.einsum("bhwc,co->bhwo", x_nhwc, w0_s)
    feats.append(jnp.maximum(y0 + bbias[0], 0.0))
    for k, d in enumerate(rates):
        dwk = dw[k][:, :, None, :]            # (3,3,1,Cin) HWIO, groups=Cin
        z = lax.conv_general_dilated(
            x_nhwc, dwk, window_strides=(1, 1), padding=[(d, d), (d, d)],
            rhs_dilation=(d, d), dimension_numbers=("NHWC", "HWIO", "NHWC"),
            feature_group_count=Cin)
        y = jnp.einsum("bhwc,co->bhwo", z, pw_s[k])
        feats.append(jnp.maximum(y + bbias[k + 1], 0.0))
    yp = sum(jnp.einsum("bhwc,co->bhwo", f, wproj_s[j])
             for j, f in enumerate(feats))
    return jnp.maximum(yp + pbias, 0.0)


# --------------------------------------------------------------------------
if __name__ == "__main__":
    # Small but lane-efficient test shapes (Cout = 128 -> lane-dense output).
    B, Cin, H, W, Cout = 2, 128, 16, 16, 128
    rates = (1, 2, 3, 4)

    key = jax.random.PRNGKey(0)
    kx_, kp_ = jax.random.split(key)
    x_nchw = jax.random.normal(kx_, (B, Cin, H, W), jnp.float32)
    params = make_params(kp_, Cin, Cout)

    out = aspp_forward(x_nchw, params, rates, tile_h=8)
    out = jax.block_until_ready(out)
    assert out.shape == (B, Cout, H, W), out.shape

    # Reference on bf16-rounded operands (the kernel feeds bf16 to the MXU
    # with f32 accumulation), computed in f32.
    q = lambda a: a.astype(jnp.bfloat16).astype(jnp.float32)
    w0_s, dw, pw_s, wproj_s, bbias, pbias = fold_params(params)
    x_nhwc = q(jnp.transpose(x_nchw, (0, 2, 3, 1)))
    ref = ref_aspp(x_nhwc, q(w0_s), dw, q(pw_s), q(wproj_s), bbias, pbias, rates)
    ref_nchw = jnp.transpose(ref, (0, 3, 1, 2))

    max_err = float(jnp.max(jnp.abs(out - ref_nchw)))
    assert jnp.allclose(out, ref_nchw, atol=5e-2, rtol=5e-2), max_err
    print("KERNEL_OK")
</pallas_src>

<mosaic_0001>
module attributes {stable_mosaic.version = 11 : i64} {
  func.func @_aspp_kernel(%arg0: i32, %arg1: i32, %arg2: memref<1x8x16x128xbf16, #tpu.memory_space<vmem>>, %arg3: memref<2x24x24x128xbf16, #tpu.memory_space<any>>, %arg4: memref<128x128xbf16, #tpu.memory_space<vmem>>, %arg5: memref<4x3x3x128xf32, #tpu.memory_space<vmem>>, %arg6: memref<4x128x128xbf16, #tpu.memory_space<vmem>>, %arg7: memref<5x128x128xbf16, #tpu.memory_space<vmem>>, %arg8: memref<5x128xf32, #tpu.memory_space<vmem>>, %arg9: memref<1x128xf32, #tpu.memory_space<vmem>>, %arg10: memref<1x8x16x128xf32, #tpu.memory_space<vmem>>, %arg11: memref<2x16x24x128xbf16, #tpu.memory_space<vmem>>, %arg12: memref<128x128xf32, #tpu.memory_space<vmem>>, %arg13: memref<2x!tpu.dma_semaphore, #tpu.memory_space<semaphore_mem>>) attributes {dimension_semantics = [#tpu.dimension_semantics<parallel>, #tpu.dimension_semantics<arbitrary>], iteration_bounds = array<i64: 2, 2>, scalar_prefetch = 0 : i64, scratch_operands = 3 : i64, tpu.core_type = #tpu.core_type<tc>, window_params = [{transform_indices = @transform_0, window_bounds = array<i64: 1, 8, 16, 128>}, {}, {pipeline_mode = #tpu.pipeline_mode<synchronous>, transform_indices = @transform_2, window_bounds = array<i64: 128, 128>}, {pipeline_mode = #tpu.pipeline_mode<synchronous>, transform_indices = @transform_3, window_bounds = array<i64: 4, 3, 3, 128>}, {pipeline_mode = #tpu.pipeline_mode<synchronous>, transform_indices = @transform_4, window_bounds = array<i64: 4, 128, 128>}, {pipeline_mode = #tpu.pipeline_mode<synchronous>, transform_indices = @transform_5, window_bounds = array<i64: 5, 128, 128>}, {pipeline_mode = #tpu.pipeline_mode<synchronous>, transform_indices = @transform_6, window_bounds = array<i64: 5, 128>}, {pipeline_mode = #tpu.pipeline_mode<synchronous>, transform_indices = @transform_7, window_bounds = array<i64: 1, 128>}, {transform_indices = @transform_8, window_bounds = array<i64: 1, 8, 16, 128>}]} {
    %c2_i32 = arith.constant 2 : i32
    %c0_i32 = arith.constant 0 : i32
    %0 = arith.cmpi eq, %c2_i32, %c0_i32 : i32
    %c1_i32 = arith.constant 1 : i32
    %1 = arith.select %0, %c1_i32, %c2_i32 : i32
    %2 = arith.remsi %arg1, %1 : i32
    %c0_i32_0 = arith.constant 0 : i32
    %3 = arith.cmpi ne, %2, %c0_i32_0 : i32
    %c0_i32_1 = arith.constant 0 : i32
    %4 = arith.cmpi slt, %2, %c0_i32_1 : i32
    %c0_i32_2 = arith.constant 0 : i32
    %5 = arith.cmpi slt, %1, %c0_i32_2 : i32
    %6 = arith.xori %4, %5 : i1
    %7 = arith.andi %6, %3 : i1
    %8 = arith.addi %2, %1 : i32
    %9 = arith.select %7, %8, %2 : i32
    %c0_i32_3 = arith.constant 0 : i32
    %10 = arith.cmpi eq, %arg1, %c0_i32_3 : i32
    %11 = arith.extui %10 : i1 to i32
    %c0_i32_4 = arith.constant 0 : i32
    %12 = arith.cmpi ne, %11, %c0_i32_4 : i32
    scf.if %12 {
      %c8_i32_95 = arith.constant 8 : i32
      %406 = arith.muli %arg1, %c8_i32_95 : i32
      %407 = tpu.assume_multiple %406, 8 : i32
      %c0_i32_96 = arith.constant 0 : i32
      %c0_i32_97 = arith.constant 0 : i32
      %408 = tpu.memref_slice %arg3[%arg0, %407, %c0_i32_96, %c0_i32_97] : memref<2x24x24x128xbf16, #tpu.memory_space<any>> -> memref<1x16x24x128xbf16, #tpu.memory_space<any>>
      %409 = tpu.memref_squeeze %408 : memref<1x16x24x128xbf16, #tpu.memory_space<any>> -> memref<16x24x128xbf16, #tpu.memory_space<any>>
      %c0_i32_98 = arith.constant 0 : i32
      %c0_i32_99 = arith.constant 0 : i32
      %c0_i32_100 = arith.constant 0 : i32
      %410 = tpu.memref_slice %arg11[%9, %c0_i32_98, %c0_i32_99, %c0_i32_100] : memref<2x16x24x128xbf16, #tpu.memory_space<vmem>> -> memref<1x16x24x128xbf16, #tpu.memory_space<vmem>>
      %411 = tpu.memref_squeeze %410 : memref<1x16x24x128xbf16, #tpu.memory_space<vmem>> -> memref<16x24x128xbf16, #tpu.memory_space<vmem>>
      %412 = tpu.memref_slice %arg13[%9] : memref<2x!tpu.dma_semaphore, #tpu.memory_space<semaphore_mem>> -> memref<1x!tpu.dma_semaphore, #tpu.memory_space<semaphore_mem>>
      %413 = tpu.memref_squeeze %412 : memref<1x!tpu.dma_semaphore, #tpu.memory_space<semaphore_mem>> -> memref<!tpu.dma_semaphore, #tpu.memory_space<semaphore_mem>>
      tpu.enqueue_dma source(%409 : memref<16x24x128xbf16, #tpu.memory_space<any>>) target(%411 : memref<16x24x128xbf16, #tpu.memory_space<vmem>>) target_semaphore(%413 : memref<!tpu.dma_semaphore, #tpu.memory_space<semaphore_mem>>)
    } else {
    }
    %c1_i32_5 = arith.constant 1 : i32
    %13 = arith.addi %arg1, %c1_i32_5 : i32
    %c2_i32_6 = arith.constant 2 : i32
    %14 = arith.cmpi slt, %13, %c2_i32_6 : i32
    %15 = arith.extui %14 : i1 to i32
    %c0_i32_7 = arith.constant 0 : i32
    %16 = arith.cmpi ne, %15, %c0_i32_7 : i32
    scf.if %16 {
      %c1_i32_95 = arith.constant 1 : i32
      %406 = arith.addi %arg1, %c1_i32_95 : i32
      %c1_i32_96 = arith.constant 1 : i32
      %407 = arith.subi %c1_i32_96, %9 : i32
      %c8_i32_97 = arith.constant 8 : i32
      %408 = arith.muli %406, %c8_i32_97 : i32
      %409 = tpu.assume_multiple %408, 8 : i32
      %c0_i32_98 = arith.constant 0 : i32
      %c0_i32_99 = arith.constant 0 : i32
      %410 = tpu.memref_slice %arg3[%arg0, %409, %c0_i32_98, %c0_i32_99] : memref<2x24x24x128xbf16, #tpu.memory_space<any>> -> memref<1x16x24x128xbf16, #tpu.memory_space<any>>
      %411 = tpu.memref_squeeze %410 : memref<1x16x24x128xbf16, #tpu.memory_space<any>> -> memref<16x24x128xbf16, #tpu.memory_space<any>>
      %c0_i32_100 = arith.constant 0 : i32
      %c0_i32_101 = arith.constant 0 : i32
      %c0_i32_102 = arith.constant 0 : i32
      %412 = tpu.memref_slice %arg11[%407, %c0_i32_100, %c0_i32_101, %c0_i32_102] : memref<2x16x24x128xbf16, #tpu.memory_space<vmem>> -> memref<1x16x24x128xbf16, #tpu.memory_space<vmem>>
      %413 = tpu.memref_squeeze %412 : memref<1x16x24x128xbf16, #tpu.memory_space<vmem>> -> memref<16x24x128xbf16, #tpu.memory_space<vmem>>
      %414 = tpu.memref_slice %arg13[%407] : memref<2x!tpu.dma_semaphore, #tpu.memory_space<semaphore_mem>> -> memref<1x!tpu.dma_semaphore, #tpu.memory_space<semaphore_mem>>
      %415 = tpu.memref_squeeze %414 : memref<1x!tpu.dma_semaphore, #tpu.memory_space<semaphore_mem>> -> memref<!tpu.dma_semaphore, #tpu.memory_space<semaphore_mem>>
      tpu.enqueue_dma source(%411 : memref<16x24x128xbf16, #tpu.memory_space<any>>) target(%413 : memref<16x24x128xbf16, #tpu.memory_space<vmem>>) target_semaphore(%415 : memref<!tpu.dma_semaphore, #tpu.memory_space<semaphore_mem>>)
    } else {
    }
    %c8_i32 = arith.constant 8 : i32
    %17 = arith.muli %arg1, %c8_i32 : i32
    %c0_i32_8 = arith.constant 0 : i32
    %c0_i32_9 = arith.constant 0 : i32
    %18 = tpu.memref_slice %arg3[%arg0, %17, %c0_i32_8, %c0_i32_9] : memref<2x24x24x128xbf16, #tpu.memory_space<any>> -> memref<1x16x24x128xbf16, #tpu.memory_space<any>>
    %19 = tpu.memref_squeeze %18 : memref<1x16x24x128xbf16, #tpu.memory_space<any>> -> memref<16x24x128xbf16, #tpu.memory_space<any>>
    %c0_i32_10 = arith.constant 0 : i32
    %c0_i32_11 = arith.constant 0 : i32
    %c0_i32_12 = arith.constant 0 : i32
    %20 = tpu.memref_slice %arg11[%9, %c0_i32_10, %c0_i32_11, %c0_i32_12] : memref<2x16x24x128xbf16, #tpu.memory_space<vmem>> -> memref<1x16x24x128xbf16, #tpu.memory_space<vmem>>
    %21 = tpu.memref_squeeze %20 : memref<1x16x24x128xbf16, #tpu.memory_space<vmem>> -> memref<16x24x128xbf16, #tpu.memory_space<vmem>>
    %22 = tpu.memref_slice %arg13[%9] : memref<2x!tpu.dma_semaphore, #tpu.memory_space<semaphore_mem>> -> memref<1x!tpu.dma_semaphore, #tpu.memory_space<semaphore_mem>>
    %23 = tpu.memref_squeeze %22 : memref<1x!tpu.dma_semaphore, #tpu.memory_space<semaphore_mem>> -> memref<!tpu.dma_semaphore, #tpu.memory_space<semaphore_mem>>
    tpu.wait_dma2 semaphore(%23 : memref<!tpu.dma_semaphore, #tpu.memory_space<semaphore_mem>>) src(%19 : memref<16x24x128xbf16, #tpu.memory_space<any>>) dst(%21 : memref<16x24x128xbf16, #tpu.memory_space<vmem>>)
    %c0 = arith.constant 0 : index
    %c0_13 = arith.constant 0 : index
    %24 = vector.load %arg8[%c0, %c0_13] : memref<5x128xf32, #tpu.memory_space<vmem>>, vector<5x128xf32>
    %c0_14 = arith.constant 0 : index
    %c0_15 = arith.constant 0 : index
    %c0_16 = arith.constant 0 : index
    %c0_17 = arith.constant 0 : index
    %25 = vector.load %arg2[%c0_14, %c0_15, %c0_16, %c0_17] : memref<1x8x16x128xbf16, #tpu.memory_space<vmem>>, vector<1x8x16x128xbf16>
    %26 = vector.shape_cast %25 : vector<1x8x16x128xbf16> to vector<8x16x128xbf16>
    %27 = vector.shape_cast %26 : vector<8x16x128xbf16> to vector<128x128xbf16>
    %c0_18 = arith.constant 0 : index
    %c0_19 = arith.constant 0 : index
    %28 = vector.load %arg4[%c0_18, %c0_19] : memref<128x128xbf16, #tpu.memory_space<vmem>>, vector<128x128xbf16>
    %cst = arith.constant dense<0.000000e+00> : vector<128x128xf32>
    %29 = tpu.matmul %27, %28, %cst {dimension_numbers = #tpu.dot_dimension_numbers<[1], [0], [0], [1], [0, 0, 1, 1], [], []>} : vector<128x128xbf16>, vector<128x128xbf16>, vector<128x128xf32> -> vector<128x128xf32>
    %30 = vector.extract_strided_slice %24 {offsets = [0, 0], sizes = [1, 128], strides = [1, 1]} : vector<5x128xf32> to vector<1x128xf32>
    %31 = vector.shape_cast %30 : vector<1x128xf32> to vector<128xf32>
    %32 = vector.shape_cast %31 : vector<128xf32> to vector<1x128xf32>
    %33 = vector.broadcast %32 : vector<1x128xf32> to vector<128x128xf32>
    %34 = arith.addf %29, %33 : vector<128x128xf32>
    %cst_20 = arith.constant 0.000000e+00 : f32
    %35 = vector.broadcast %cst_20 : f32 to vector<128x128xf32>
    %36 = arith.maximumf %34, %35 : vector<128x128xf32>
    %37 = arith.truncf %36 : vector<128x128xf32> to vector<128x128xbf16>
    %c0_21 = arith.constant 0 : index
    %c0_22 = arith.constant 0 : index
    %c0_23 = arith.constant 0 : index
    %38 = vector.load %arg7[%c0_21, %c0_22, %c0_23] : memref<5x128x128xbf16, #tpu.memory_space<vmem>>, vector<1x128x128xbf16>
    %39 = vector.shape_cast %38 : vector<1x128x128xbf16> to vector<128x128xbf16>
    %cst_24 = arith.constant dense<0.000000e+00> : vector<128x128xf32>
    %40 = tpu.matmul %37, %39, %cst_24 {dimension_numbers = #tpu.dot_dimension_numbers<[1], [0], [0], [1], [0, 0, 1, 1], [], []>} : vector<128x128xbf16>, vector<128x128xbf16>, vector<128x128xf32> -> vector<128x128xf32>
    %c0_25 = arith.constant 0 : index
    %c0_26 = arith.constant 0 : index
    %41 = vector.load %arg12[%c0_25, %c0_26] : memref<128x128xf32, #tpu.memory_space<vmem>>, vector<128x128xf32>
    tpu.vector_store %arg12[%c0_25, %c0_26], %40 {strides = array<i32>} : memref<128x128xf32, #tpu.memory_space<vmem>>, vector<128x128xf32>,
    %42 = arith.index_cast %9 : i32 to index
    %c0_27 = arith.constant 0 : index
    %c0_28 = arith.constant 0 : index
    %c0_29 = arith.constant 0 : index
    %43 = vector.load %arg11[%42, %c0_27, %c0_28, %c0_29] : memref<2x16x24x128xbf16, #tpu.memory_space<vmem>>, vector<1x16x24x128xbf16>
    %44 = vector.shape_cast %43 : vector<1x16x24x128xbf16> to vector<16x24x128xbf16>
    %c0_30 = arith.constant 0 : index
    %c0_31 = arith.constant 0 : index
    %c0_32 = arith.constant 0 : index
    %c0_33 = arith.constant 0 : index
    %45 = vector.load %arg5[%c0_30, %c0_31, %c0_32, %c0_33] : memref<4x3x3x128xf32, #tpu.memory_space<vmem>>, vector<4x3x3x128xf32>
    %46 = vector.extract_strided_slice %44 {offsets = [0, 3, 0], sizes = [16, 16, 128], strides = [1, 1, 1]} : vector<16x24x128xbf16> to vector<16x16x128xbf16>
    %47 = arith.extf %46 : vector<16x16x128xbf16> to vector<16x16x128xf32>
    %48 = vector.extract_strided_slice %44 {offsets = [0, 4, 0], sizes = [16, 16, 128], strides = [1, 1, 1]} : vector<16x24x128xbf16> to vector<16x16x128xbf16>
    %49 = arith.extf %48 : vector<16x16x128xbf16> to vector<16x16x128xf32>
    %50 = vector.extract_strided_slice %44 {offsets = [0, 5, 0], sizes = [16, 16, 128], strides = [1, 1, 1]} : vector<16x24x128xbf16> to vector<16x16x128xbf16>
    %51 = arith.extf %50 : vector<16x16x128xbf16> to vector<16x16x128xf32>
    %cst_34 = arith.constant 0.000000e+00 : f32
    %52 = vector.broadcast %cst_34 : f32 to vector<8x16x128xf32>
    %53 = vector.extract_strided_slice %47 {offsets = [3, 0, 0], sizes = [8, 16, 128], strides = [1, 1, 1]} : vector<16x16x128xf32> to vector<8x16x128xf32>
    %54 = vector.extract_strided_slice %45 {offsets = [0, 0, 0, 0], sizes = [1, 1, 1, 128], strides = [1, 1, 1, 1]} : vector<4x3x3x128xf32> to vector<1x1x1x128xf32>
    %55 = vector.shape_cast %54 : vector<1x1x1x128xf32> to vector<128xf32>
    %56 = vector.shape_cast %55 : vector<128xf32> to vector<1x1x128xf32>
    %57 = vector.broadcast %56 : vector<1x1x128xf32> to vector<8x16x128xf32>
    %58 = arith.mulf %53, %57 : vector<8x16x128xf32>
    %59 = arith.addf %52, %58 : vector<8x16x128xf32>
    %60 = vector.extract_strided_slice %49 {offsets = [3, 0, 0], sizes = [8, 16, 128], strides = [1, 1, 1]} : vector<16x16x128xf32> to vector<8x16x128xf32>
    %61 = vector.extract_strided_slice %45 {offsets = [0, 0, 1, 0], sizes = [1, 1, 1, 128], strides = [1, 1, 1, 1]} : vector<4x3x3x128xf32> to vector<1x1x1x128xf32>
    %62 = vector.shape_cast %61 : vector<1x1x1x128xf32> to vector<128xf32>
    %63 = vector.shape_cast %62 : vector<128xf32> to vector<1x1x128xf32>
    %64 = vector.broadcast %63 : vector<1x1x128xf32> to vector<8x16x128xf32>
    %65 = arith.mulf %60, %64 : vector<8x16x128xf32>
    %66 = arith.addf %59, %65 : vector<8x16x128xf32>
    %67 = vector.extract_strided_slice %51 {offsets = [3, 0, 0], sizes = [8, 16, 128], strides = [1, 1, 1]} : vector<16x16x128xf32> to vector<8x16x128xf32>
    %68 = vector.extract_strided_slice %45 {offsets = [0, 0, 2, 0], sizes = [1, 1, 1, 128], strides = [1, 1, 1, 1]} : vector<4x3x3x128xf32> to vector<1x1x1x128xf32>
    %69 = vector.shape_cast %68 : vector<1x1x1x128xf32> to vector<128xf32>
    %70 = vector.shape_cast %69 : vector<128xf32> to vector<1x1x128xf32>
    %71 = vector.broadcast %70 : vector<1x1x128xf32> to vector<8x16x128xf32>
    %72 = arith.mulf %67, %71 : vector<8x16x128xf32>
    %73 = arith.addf %66, %72 : vector<8x16x128xf32>
    %74 = vector.extract_strided_slice %47 {offsets = [4, 0, 0], sizes = [8, 16, 128], strides = [1, 1, 1]} : vector<16x16x128xf32> to vector<8x16x128xf32>
    %75 = vector.extract_strided_slice %45 {offsets = [0, 1, 0, 0], sizes = [1, 1, 1, 128], strides = [1, 1, 1, 1]} : vector<4x3x3x128xf32> to vector<1x1x1x128xf32>
    %76 = vector.shape_cast %75 : vector<1x1x1x128xf32> to vector<128xf32>
    %77 = vector.shape_cast %76 : vector<128xf32> to vector<1x1x128xf32>
    %78 = vector.broadcast %77 : vector<1x1x128xf32> to vector<8x16x128xf32>
    %79 = arith.mulf %74, %78 : vector<8x16x128xf32>
    %80 = arith.addf %73, %79 : vector<8x16x128xf32>
    %81 = vector.extract_strided_slice %49 {offsets = [4, 0, 0], sizes = [8, 16, 128], strides = [1, 1, 1]} : vector<16x16x128xf32> to vector<8x16x128xf32>
    %82 = vector.extract_strided_slice %45 {offsets = [0, 1, 1, 0], sizes = [1, 1, 1, 128], strides = [1, 1, 1, 1]} : vector<4x3x3x128xf32> to vector<1x1x1x128xf32>
    %83 = vector.shape_cast %82 : vector<1x1x1x128xf32> to vector<128xf32>
    %84 = vector.shape_cast %83 : vector<128xf32> to vector<1x1x128xf32>
    %85 = vector.broadcast %84 : vector<1x1x128xf32> to vector<8x16x128xf32>
    %86 = arith.mulf %81, %85 : vector<8x16x128xf32>
    %87 = arith.addf %80, %86 : vector<8x16x128xf32>
    %88 = vector.extract_strided_slice %51 {offsets = [4, 0, 0], sizes = [8, 16, 128], strides = [1, 1, 1]} : vector<16x16x128xf32> to vector<8x16x128xf32>
    %89 = vector.extract_strided_slice %45 {offsets = [0, 1, 2, 0], sizes = [1, 1, 1, 128], strides = [1, 1, 1, 1]} : vector<4x3x3x128xf32> to vector<1x1x1x128xf32>
    %90 = vector.shape_cast %89 : vector<1x1x1x128xf32> to vector<128xf32>
    %91 = vector.shape_cast %90 : vector<128xf32> to vector<1x1x128xf32>
    %92 = vector.broadcast %91 : vector<1x1x128xf32> to vector<8x16x128xf32>
    %93 = arith.mulf %88, %92 : vector<8x16x128xf32>
    %94 = arith.addf %87, %93 : vector<8x16x128xf32>
    %95 = vector.extract_strided_slice %47 {offsets = [5, 0, 0], sizes = [8, 16, 128], strides = [1, 1, 1]} : vector<16x16x128xf32> to vector<8x16x128xf32>
    %96 = vector.extract_strided_slice %45 {offsets = [0, 2, 0, 0], sizes = [1, 1, 1, 128], strides = [1, 1, 1, 1]} : vector<4x3x3x128xf32> to vector<1x1x1x128xf32>
    %97 = vector.shape_cast %96 : vector<1x1x1x128xf32> to vector<128xf32>
    %98 = vector.shape_cast %97 : vector<128xf32> to vector<1x1x128xf32>
    %99 = vector.broadcast %98 : vector<1x1x128xf32> to vector<8x16x128xf32>
    %100 = arith.mulf %95, %99 : vector<8x16x128xf32>
    %101 = arith.addf %94, %100 : vector<8x16x128xf32>
    %102 = vector.extract_strided_slice %49 {offsets = [5, 0, 0], sizes = [8, 16, 128], strides = [1, 1, 1]} : vector<16x16x128xf32> to vector<8x16x128xf32>
    %103 = vector.extract_strided_slice %45 {offsets = [0, 2, 1, 0], sizes = [1, 1, 1, 128], strides = [1, 1, 1, 1]} : vector<4x3x3x128xf32> to vector<1x1x1x128xf32>
    %104 = vector.shape_cast %103 : vector<1x1x1x128xf32> to vector<128xf32>
    %105 = vector.shape_cast %104 : vector<128xf32> to vector<1x1x128xf32>
    %106 = vector.broadcast %105 : vector<1x1x128xf32> to vector<8x16x128xf32>
    %107 = arith.mulf %102, %106 : vector<8x16x128xf32>
    %108 = arith.addf %101, %107 : vector<8x16x128xf32>
    %109 = vector.extract_strided_slice %51 {offsets = [5, 0, 0], sizes = [8, 16, 128], strides = [1, 1, 1]} : vector<16x16x128xf32> to vector<8x16x128xf32>
    %110 = vector.extract_strided_slice %45 {offsets = [0, 2, 2, 0], sizes = [1, 1, 1, 128], strides = [1, 1, 1, 1]} : vector<4x3x3x128xf32> to vector<1x1x1x128xf32>
    %111 = vector.shape_cast %110 : vector<1x1x1x128xf32> to vector<128xf32>
    %112 = vector.shape_cast %111 : vector<128xf32> to vector<1x1x128xf32>
    %113 = vector.broadcast %112 : vector<1x1x128xf32> to vector<8x16x128xf32>
    %114 = arith.mulf %109, %113 : vector<8x16x128xf32>
    %115 = arith.addf %108, %114 : vector<8x16x128xf32>
    %116 = vector.shape_cast %115 : vector<8x16x128xf32> to vector<128x128xf32>
    %117 = arith.truncf %116 : vector<128x128xf32> to vector<128x128xbf16>
    %c0_35 = arith.constant 0 : index
    %c0_36 = arith.constant 0 : index
    %c0_37 = arith.constant 0 : index
    %118 = vector.load %arg6[%c0_35, %c0_36, %c0_37] : memref<4x128x128xbf16, #tpu.memory_space<vmem>>, vector<1x128x128xbf16>
    %119 = vector.shape_cast %118 : vector<1x128x128xbf16> to vector<128x128xbf16>
    %cst_38 = arith.constant dense<0.000000e+00> : vector<128x128xf32>
    %120 = tpu.matmul %117, %119, %cst_38 {dimension_numbers = #tpu.dot_dimension_numbers<[1], [0], [0], [1], [0, 0, 1, 1], [], []>} : vector<128x128xbf16>, vector<128x128xbf16>, vector<128x128xf32> -> vector<128x128xf32>
    %121 = vector.extract_strided_slice %24 {offsets = [1, 0], sizes = [1, 128], strides = [1, 1]} : vector<5x128xf32> to vector<1x128xf32>
    %122 = vector.shape_cast %121 : vector<1x128xf32> to vector<128xf32>
    %123 = vector.shape_cast %122 : vector<128xf32> to vector<1x128xf32>
    %124 = vector.broadcast %123 : vector<1x128xf32> to vector<128x128xf32>
    %125 = arith.addf %120, %124 : vector<128x128xf32>
    %cst_39 = arith.constant 0.000000e+00 : f32
    %126 = vector.broadcast %cst_39 : f32 to vector<128x128xf32>
    %127 = arith.maximumf %125, %126 : vector<128x128xf32>
    %c0_40 = arith.constant 0 : index
    %c0_41 = arith.constant 0 : index
    %128 = vector.load %arg12[%c0_40, %c0_41] : memref<128x128xf32, #tpu.memory_space<vmem>>, vector<128x128xf32>
    %129 = arith.truncf %127 : vector<128x128xf32> to vector<128x128xbf16>
    %c1 = arith.constant 1 : index
    %c0_42 = arith.constant 0 : index
    %c0_43 = arith.constant 0 : index
    %130 = vector.load %arg7[%c1, %c0_42, %c0_43] : memref<5x128x128xbf16, #tpu.memory_space<vmem>>, vector<1x128x128xbf16>
    %131 = vector.shape_cast %130 : vector<1x128x128xbf16> to vector<128x128xbf16>
    %cst_44 = arith.constant dense<0.000000e+00> : vector<128x128xf32>
    %132 = tpu.matmul %129, %131, %cst_44 {dimension_numbers = #tpu.dot_dimension_numbers<[1], [0], [0], [1], [0, 0, 1, 1], [], []>} : vector<128x128xbf16>, vector<128x128xbf16>, vector<128x128xf32> -> vector<128x128xf32>
    %133 = arith.addf %128, %132 : vector<128x128xf32>
    %c0_45 = arith.constant 0 : index
    %c0_46 = arith.constant 0 : index
    %134 = vector.load %arg12[%c0_45, %c0_46] : memref<128x128xf32, #tpu.memory_space<vmem>>, vector<128x128xf32>
    tpu.vector_store %arg12[%c0_45, %c0_46], %133 {strides = array<i32>} : memref<128x128xf32, #tpu.memory_space<vmem>>, vector<128x128xf32>,
    %135 = vector.extract_strided_slice %44 {offsets = [0, 2, 0], sizes = [16, 16, 128], strides = [1, 1, 1]} : vector<16x24x128xbf16> to vector<16x16x128xbf16>
    %136 = arith.extf %135 : vector<16x16x128xbf16> to vector<16x16x128xf32>
    %137 = vector.extract_strided_slice %44 {offsets = [0, 6, 0], sizes = [16, 16, 128], strides = [1, 1, 1]} : vector<16x24x128xbf16> to vector<16x16x128xbf16>
    %138 = arith.extf %137 : vector<16x16x128xbf16> to vector<16x16x128xf32>
    %cst_47 = arith.constant 0.000000e+00 : f32
    %139 = vector.broadcast %cst_47 : f32 to vector<8x16x128xf32>
    %140 = vector.extract_strided_slice %136 {offsets = [2, 0, 0], sizes = [8, 16, 128], strides = [1, 1, 1]} : vector<16x16x128xf32> to vector<8x16x128xf32>
    %141 = vector.extract_strided_slice %45 {offsets = [1, 0, 0, 0], sizes = [1, 1, 1, 128], strides = [1, 1, 1, 1]} : vector<4x3x3x128xf32> to vector<1x1x1x128xf32>
    %142 = vector.shape_cast %141 : vector<1x1x1x128xf32> to vector<128xf32>
    %143 = vector.shape_cast %142 : vector<128xf32> to vector<1x1x128xf32>
    %144 = vector.broadcast %143 : vector<1x1x128xf32> to vector<8x16x128xf32>
    %145 = arith.mulf %140, %144 : vector<8x16x128xf32>
    %146 = arith.addf %139, %145 : vector<8x16x128xf32>
    %147 = vector.extract_strided_slice %49 {offsets = [2, 0, 0], sizes = [8, 16, 128], strides = [1, 1, 1]} : vector<16x16x128xf32> to vector<8x16x128xf32>
    %148 = vector.extract_strided_slice %45 {offsets = [1, 0, 1, 0], sizes = [1, 1, 1, 128], strides = [1, 1, 1, 1]} : vector<4x3x3x128xf32> to vector<1x1x1x128xf32>
    %149 = vector.shape_cast %148 : vector<1x1x1x128xf32> to vector<128xf32>
    %150 = vector.shape_cast %149 : vector<128xf32> to vector<1x1x128xf32>
    %151 = vector.broadcast %150 : vector<1x1x128xf32> to vector<8x16x128xf32>
    %152 = arith.mulf %147, %151 : vector<8x16x128xf32>
    %153 = arith.addf %146, %152 : vector<8x16x128xf32>
    %154 = vector.extract_strided_slice %138 {offsets = [2, 0, 0], sizes = [8, 16, 128], strides = [1, 1, 1]} : vector<16x16x128xf32> to vector<8x16x128xf32>
    %155 = vector.extract_strided_slice %45 {offsets = [1, 0, 2, 0], sizes = [1, 1, 1, 128], strides = [1, 1, 1, 1]} : vector<4x3x3x128xf32> to vector<1x1x1x128xf32>
    %156 = vector.shape_cast %155 : vector<1x1x1x128xf32> to vector<128xf32>
    %157 = vector.shape_cast %156 : vector<128xf32> to vector<1x1x128xf32>
    %158 = vector.broadcast %157 : vector<1x1x128xf32> to vector<8x16x128xf32>
    %159 = arith.mulf %154, %158 : vector<8x16x128xf32>
    %160 = arith.addf %153, %159 : vector<8x16x128xf32>
    %161 = vector.extract_strided_slice %136 {offsets = [4, 0, 0], sizes = [8, 16, 128], strides = [1, 1, 1]} : vector<16x16x128xf32> to vector<8x16x128xf32>
    %162 = vector.extract_strided_slice %45 {offsets = [1, 1, 0, 0], sizes = [1, 1, 1, 128], strides = [1, 1, 1, 1]} : vector<4x3x3x128xf32> to vector<1x1x1x128xf32>
    %163 = vector.shape_cast %162 : vector<1x1x1x128xf32> to vector<128xf32>
    %164 = vector.shape_cast %163 : vector<128xf32> to vector<1x1x128xf32>
    %165 = vector.broadcast %164 : vector<1x1x128xf32> to vector<8x16x128xf32>
    %166 = arith.mulf %161, %165 : vector<8x16x128xf32>
    %167 = arith.addf %160, %166 : vector<8x16x128xf32>
    %168 = vector.extract_strided_slice %49 {offsets = [4, 0, 0], sizes = [8, 16, 128], strides = [1, 1, 1]} : vector<16x16x128xf32> to vector<8x16x128xf32>
    %169 = vector.extract_strided_slice %45 {offsets = [1, 1, 1, 0], sizes = [1, 1, 1, 128], strides = [1, 1, 1, 1]} : vector<4x3x3x128xf32> to vector<1x1x1x128xf32>
    %170 = vector.shape_cast %169 : vector<1x1x1x128xf32> to vector<128xf32>
    %171 = vector.shape_cast %170 : vector<128xf32> to vector<1x1x128xf32>
    %172 = vector.broadcast %171 : vector<1x1x128xf32> to vector<8x16x128xf32>
    %173 = arith.mulf %168, %172 : vector<8x16x128xf32>
    %174 = arith.addf %167, %173 : vector<8x16x128xf32>
    %175 = vector.extract_strided_slice %138 {offsets = [4, 0, 0], sizes = [8, 16, 128], strides = [1, 1, 1]} : vector<16x16x128xf32> to vector<8x16x128xf32>
    %176 = vector.extract_strided_slice %45 {offsets = [1, 1, 2, 0], sizes = [1, 1, 1, 128], strides = [1, 1, 1, 1]} : vector<4x3x3x128xf32> to vector<1x1x1x128xf32>
    %177 = vector.shape_cast %176 : vector<1x1x1x128xf32> to vector<128xf32>
    %178 = vector.shape_cast %177 : vector<128xf32> to vector<1x1x128xf32>
    %179 = vector.broadcast %178 : vector<1x1x128xf32> to vector<8x16x128xf32>
    %180 = arith.mulf %175, %179 : vector<8x16x128xf32>
    %181 = arith.addf %174, %180 : vector<8x16x128xf32>
    %182 = vector.extract_strided_slice %136 {offsets = [6, 0, 0], sizes = [8, 16, 128], strides = [1, 1, 1]} : vector<16x16x128xf32> to vector<8x16x128xf32>
    %183 = vector.extract_strided_slice %45 {offsets = [1, 2, 0, 0], sizes = [1, 1, 1, 128], strides = [1, 1, 1, 1]} : vector<4x3x3x128xf32> to vector<1x1x1x128xf32>
    %184 = vector.shape_cast %183 : vector<1x1x1x128xf32> to vector<128xf32>
    %185 = vector.shape_cast %184 : vector<128xf32> to vector<1x1x128xf32>
    %186 = vector.broadcast %185 : vector<1x1x128xf32> to vector<8x16x128xf32>
    %187 = arith.mulf %182, %186 : vector<8x16x128xf32>
    %188 = arith.addf %181, %187 : vector<8x16x128xf32>
    %189 = vector.extract_strided_slice %49 {offsets = [6, 0, 0], sizes = [8, 16, 128], strides = [1, 1, 1]} : vector<16x16x128xf32> to vector<8x16x128xf32>
    %190 = vector.extract_strided_slice %45 {offsets = [1, 2, 1, 0], sizes = [1, 1, 1, 128], strides = [1, 1, 1, 1]} : vector<4x3x3x128xf32> to vector<1x1x1x128xf32>
    %191 = vector.shape_cast %190 : vector<1x1x1x128xf32> to vector<128xf32>
    %192 = vector.shape_cast %191 : vector<128xf32> to vector<1x1x128xf32>
    %193 = vector.broadcast %192 : vector<1x1x128xf32> to vector<8x16x128xf32>
    %194 = arith.mulf %189, %193 : vector<8x16x128xf32>
    %195 = arith.addf %188, %194 : vector<8x16x128xf32>
    %196 = vector.extract_strided_slice %138 {offsets = [6, 0, 0], sizes = [8, 16, 128], strides = [1, 1, 1]} : vector<16x16x128xf32> to vector<8x16x128xf32>
    %197 = vector.extract_strided_slice %45 {offsets = [1, 2, 2, 0], sizes = [1, 1, 1, 128], strides = [1, 1, 1, 1]} : vector<4x3x3x128xf32> to vector<1x1x1x128xf32>
    %198 = vector.shape_cast %197 : vector<1x1x1x128xf32> to vector<128xf32>
    %199 = vector.shape_cast %198 : vector<128xf32> to vector<1x1x128xf32>
    %200 = vector.broadcast %199 : vector<1x1x128xf32> to vector<8x16x128xf32>
    %201 = arith.mulf %196, %200 : vector<8x16x128xf32>
    %202 = arith.addf %195, %201 : vector<8x16x128xf32>
    %203 = vector.shape_cast %202 : vector<8x16x128xf32> to vector<128x128xf32>
    %204 = arith.truncf %203 : vector<128x128xf32> to vector<128x128xbf16>
    %c1_48 = arith.constant 1 : index
    %c0_49 = arith.constant 0 : index
    %c0_50 = arith.constant 0 : index
    %205 = vector.load %arg6[%c1_48, %c0_49, %c0_50] : memref<4x128x128xbf16, #tpu.memory_space<vmem>>, vector<1x128x128xbf16>
    %206 = vector.shape_cast %205 : vector<1x128x128xbf16> to vector<128x128xbf16>
    %cst_51 = arith.constant dense<0.000000e+00> : vector<128x128xf32>
    %207 = tpu.matmul %204, %206, %cst_51 {dimension_numbers = #tpu.dot_dimension_numbers<[1], [0], [0], [1], [0, 0, 1, 1], [], []>} : vector<128x128xbf16>, vector<128x128xbf16>, vector<128x128xf32> -> vector<128x128xf32>
    %208 = vector.extract_strided_slice %24 {offsets = [2, 0], sizes = [1, 128], strides = [1, 1]} : vector<5x128xf32> to vector<1x128xf32>
    %209 = vector.shape_cast %208 : vector<1x128xf32> to vector<128xf32>
    %210 = vector.shape_cast %209 : vector<128xf32> to vector<1x128xf32>
    %211 = vector.broadcast %210 : vector<1x128xf32> to vector<128x128xf32>
    %212 = arith.addf %207, %211 : vector<128x128xf32>
    %cst_52 = arith.constant 0.000000e+00 : f32
    %213 = vector.broadcast %cst_52 : f32 to vector<128x128xf32>
    %214 = arith.maximumf %212, %213 : vector<128x128xf32>
    %c0_53 = arith.constant 0 : index
    %c0_54 = arith.constant 0 : index
    %215 = vector.load %arg12[%c0_53, %c0_54] : memref<128x128xf32, #tpu.memory_space<vmem>>, vector<128x128xf32>
    %216 = arith.truncf %214 : vector<128x128xf32> to vector<128x128xbf16>
    %c2 = arith.constant 2 : index
    %c0_55 = arith.constant 0 : index
    %c0_56 = arith.constant 0 : index
    %217 = vector.load %arg7[%c2, %c0_55, %c0_56] : memref<5x128x128xbf16, #tpu.memory_space<vmem>>, vector<1x128x128xbf16>
    %218 = vector.shape_cast %217 : vector<1x128x128xbf16> to vector<128x128xbf16>
    %cst_57 = arith.constant dense<0.000000e+00> : vector<128x128xf32>
    %219 = tpu.matmul %216, %218, %cst_57 {dimension_numbers = #tpu.dot_dimension_numbers<[1], [0], [0], [1], [0, 0, 1, 1], [], []>} : vector<128x128xbf16>, vector<128x128xbf16>, vector<128x128xf32> -> vector<128x128xf32>
    %220 = arith.addf %215, %219 : vector<128x128xf32>
    %c0_58 = arith.constant 0 : index
    %c0_59 = arith.constant 0 : index
    %221 = vector.load %arg12[%c0_58, %c0_59] : memref<128x128xf32, #tpu.memory_space<vmem>>, vector<128x128xf32>
    tpu.vector_store %arg12[%c0_58, %c0_59], %220 {strides = array<i32>} : memref<128x128xf32, #tpu.memory_space<vmem>>, vector<128x128xf32>,
    %222 = vector.extract_strided_slice %44 {offsets = [0, 1, 0], sizes = [16, 16, 128], strides = [1, 1, 1]} : vector<16x24x128xbf16> to vector<16x16x128xbf16>
    %223 = arith.extf %222 : vector<16x16x128xbf16> to vector<16x16x128xf32>
    %224 = vector.extract_strided_slice %44 {offsets = [0, 7, 0], sizes = [16, 16, 128], strides = [1, 1, 1]} : vector<16x24x128xbf16> to vector<16x16x128xbf16>
    %225 = arith.extf %224 : vector<16x16x128xbf16> to vector<16x16x128xf32>
    %cst_60 = arith.constant 0.000000e+00 : f32
    %226 = vector.broadcast %cst_60 : f32 to vector<8x16x128xf32>
    %227 = vector.extract_strided_slice %223 {offsets = [1, 0, 0], sizes = [8, 16, 128], strides = [1, 1, 1]} : vector<16x16x128xf32> to vector<8x16x128xf32>
    %228 = vector.extract_strided_slice %45 {offsets = [2, 0, 0, 0], sizes = [1, 1, 1, 128], strides = [1, 1, 1, 1]} : vector<4x3x3x128xf32> to vector<1x1x1x128xf32>
    %229 = vector.shape_cast %228 : vector<1x1x1x128xf32> to vector<128xf32>
    %230 = vector.shape_cast %229 : vector<128xf32> to vector<1x1x128xf32>
    %231 = vector.broadcast %230 : vector<1x1x128xf32> to vector<8x16x128xf32>
    %232 = arith.mulf %227, %231 : vector<8x16x128xf32>
    %233 = arith.addf %226, %232 : vector<8x16x128xf32>
    %234 = vector.extract_strided_slice %49 {offsets = [1, 0, 0], sizes = [8, 16, 128], strides = [1, 1, 1]} : vector<16x16x128xf32> to vector<8x16x128xf32>
    %235 = vector.extract_strided_slice %45 {offsets = [2, 0, 1, 0], sizes = [1, 1, 1, 128], strides = [1, 1, 1, 1]} : vector<4x3x3x128xf32> to vector<1x1x1x128xf32>
    %236 = vector.shape_cast %235 : vector<1x1x1x128xf32> to vector<128xf32>
    %237 = vector.shape_cast %236 : vector<128xf32> to vector<1x1x128xf32>
    %238 = vector.broadcast %237 : vector<1x1x128xf32> to vector<8x16x128xf32>
    %239 = arith.mulf %234, %238 : vector<8x16x128xf32>
    %240 = arith.addf %233, %239 : vector<8x16x128xf32>
    %241 = vector.extract_strided_slice %225 {offsets = [1, 0, 0], sizes = [8, 16, 128], strides = [1, 1, 1]} : vector<16x16x128xf32> to vector<8x16x128xf32>
    %242 = vector.extract_strided_slice %45 {offsets = [2, 0, 2, 0], sizes = [1, 1, 1, 128], strides = [1, 1, 1, 1]} : vector<4x3x3x128xf32> to vector<1x1x1x128xf32>
    %243 = vector.shape_cast %242 : vector<1x1x1x128xf32> to vector<128xf32>
    %244 = vector.shape_cast %243 : vector<128xf32> to vector<1x1x128xf32>
    %245 = vector.broadcast %244 : vector<1x1x128xf32> to vector<8x16x128xf32>
    %246 = arith.mulf %241, %245 : vector<8x16x128xf32>
    %247 = arith.addf %240, %246 : vector<8x16x128xf32>
    %248 = vector.extract_strided_slice %223 {offsets = [4, 0, 0], sizes = [8, 16, 128], strides = [1, 1, 1]} : vector<16x16x128xf32> to vector<8x16x128xf32>
    %249 = vector.extract_strided_slice %45 {offsets = [2, 1, 0, 0], sizes = [1, 1, 1, 128], strides = [1, 1, 1, 1]} : vector<4x3x3x128xf32> to vector<1x1x1x128xf32>
    %250 = vector.shape_cast %249 : vector<1x1x1x128xf32> to vector<128xf32>
    %251 = vector.shape_cast %250 : vector<128xf32> to vector<1x1x128xf32>
    %252 = vector.broadcast %251 : vector<1x1x128xf32> to vector<8x16x128xf32>
    %253 = arith.mulf %248, %252 : vector<8x16x128xf32>
    %254 = arith.addf %247, %253 : vector<8x16x128xf32>
    %255 = vector.extract_strided_slice %49 {offsets = [4, 0, 0], sizes = [8, 16, 128], strides = [1, 1, 1]} : vector<16x16x128xf32> to vector<8x16x128xf32>
    %256 = vector.extract_strided_slice %45 {offsets = [2, 1, 1, 0], sizes = [1, 1, 1, 128], strides = [1, 1, 1, 1]} : vector<4x3x3x128xf32> to vector<1x1x1x128xf32>
    %257 = vector.shape_cast %256 : vector<1x1x1x128xf32> to vector<128xf32>
    %258 = vector.shape_cast %257 : vector<128xf32> to vector<1x1x128xf32>
    %259 = vector.broadcast %258 : vector<1x1x128xf32> to vector<8x16x128xf32>
    %260 = arith.mulf %255, %259 : vector<8x16x128xf32>
    %261 = arith.addf %254, %260 : vector<8x16x128xf32>
    %262 = vector.extract_strided_slice %225 {offsets = [4, 0, 0], sizes = [8, 16, 128], strides = [1, 1, 1]} : vector<16x16x128xf32> to vector<8x16x128xf32>
    %263 = vector.extract_strided_slice %45 {offsets = [2, 1, 2, 0], sizes = [1, 1, 1, 128], strides = [1, 1, 1, 1]} : vector<4x3x3x128xf32> to vector<1x1x1x128xf32>
    %264 = vector.shape_cast %263 : vector<1x1x1x128xf32> to vector<128xf32>
    %265 = vector.shape_cast %264 : vector<128xf32> to vector<1x1x128xf32>
    %266 = vector.broadcast %265 : vector<1x1x128xf32> to vector<8x16x128xf32>
    %267 = arith.mulf %262, %266 : vector<8x16x128xf32>
    %268 = arith.addf %261, %267 : vector<8x16x128xf32>
    %269 = vector.extract_strided_slice %223 {offsets = [7, 0, 0], sizes = [8, 16, 128], strides = [1, 1, 1]} : vector<16x16x128xf32> to vector<8x16x128xf32>
    %270 = vector.extract_strided_slice %45 {offsets = [2, 2, 0, 0], sizes = [1, 1, 1, 128], strides = [1, 1, 1, 1]} : vector<4x3x3x128xf32> to vector<1x1x1x128xf32>
    %271 = vector.shape_cast %270 : vector<1x1x1x128xf32> to vector<128xf32>
    %272 = vector.shape_cast %271 : vector<128xf32> to vector<1x1x128xf32>
    %273 = vector.broadcast %272 : vector<1x1x128xf32> to vector<8x16x128xf32>
    %274 = arith.mulf %269, %273 : vector<8x16x128xf32>
    %275 = arith.addf %268, %274 : vector<8x16x128xf32>
    %276 = vector.extract_strided_slice %49 {offsets = [7, 0, 0], sizes = [8, 16, 128], strides = [1, 1, 1]} : vector<16x16x128xf32> to vector<8x16x128xf32>
    %277 = vector.extract_strided_slice %45 {offsets = [2, 2, 1, 0], sizes = [1, 1, 1, 128], strides = [1, 1, 1, 1]} : vector<4x3x3x128xf32> to vector<1x1x1x128xf32>
    %278 = vector.shape_cast %277 : vector<1x1x1x128xf32> to vector<128xf32>
    %279 = vector.shape_cast %278 : vector<128xf32> to vector<1x1x128xf32>
    %280 = vector.broadcast %279 : vector<1x1x128xf32> to vector<8x16x128xf32>
    %281 = arith.mulf %276, %280 : vector<8x16x128xf32>
    %282 = arith.addf %275, %281 : vector<8x16x128xf32>
    %283 = vector.extract_strided_slice %225 {offsets = [7, 0, 0], sizes = [8, 16, 128], strides = [1, 1, 1]} : vector<16x16x128xf32> to vector<8x16x128xf32>
    %284 = vector.extract_strided_slice %45 {offsets = [2, 2, 2, 0], sizes = [1, 1, 1, 128], strides = [1, 1, 1, 1]} : vector<4x3x3x128xf32> to vector<1x1x1x128xf32>
    %285 = vector.shape_cast %284 : vector<1x1x1x128xf32> to vector<128xf32>
    %286 = vector.shape_cast %285 : vector<128xf32> to vector<1x1x128xf32>
    %287 = vector.broadcast %286 : vector<1x1x128xf32> to vector<8x16x128xf32>
    %288 = arith.mulf %283, %287 : vector<8x16x128xf32>
    %289 = arith.addf %282, %288 : vector<8x16x128xf32>
    %290 = vector.shape_cast %289 : vector<8x16x128xf32> to vector<128x128xf32>
    %291 = arith.truncf %290 : vector<128x128xf32> to vector<128x128xbf16>
    %c2_61 = arith.constant 2 : index
    %c0_62 = arith.constant 0 : index
    %c0_63 = arith.constant 0 : index
    %292 = vector.load %arg6[%c2_61, %c0_62, %c0_63] : memref<4x128x128xbf16, #tpu.memory_space<vmem>>, vector<1x128x128xbf16>
    %293 = vector.shape_cast %292 : vector<1x128x128xbf16> to vector<128x128xbf16>
    %cst_64 = arith.constant dense<0.000000e+00> : vector<128x128xf32>
    %294 = tpu.matmul %291, %293, %cst_64 {dimension_numbers = #tpu.dot_dimension_numbers<[1], [0], [0], [1], [0, 0, 1, 1], [], []>} : vector<128x128xbf16>, vector<128x128xbf16>, vector<128x128xf32> -> vector<128x128xf32>
    %295 = vector.extract_strided_slice %24 {offsets = [3, 0], sizes = [1, 128], strides = [1, 1]} : vector<5x128xf32> to vector<1x128xf32>
    %296 = vector.shape_cast %295 : vector<1x128xf32> to vector<128xf32>
    %297 = vector.shape_cast %296 : vector<128xf32> to vector<1x128xf32>
    %298 = vector.broadcast %297 : vector<1x128xf32> to vector<128x128xf32>
    %299 = arith.addf %294, %298 : vector<128x128xf32>
    %cst_65 = arith.constant 0.000000e+00 : f32
    %300 = vector.broadcast %cst_65 : f32 to vector<128x128xf32>
    %301 = arith.maximumf %299, %300 : vector<128x128xf32>
    %c0_66 = arith.constant 0 : index
    %c0_67 = arith.constant 0 : index
    %302 = vector.load %arg12[%c0_66, %c0_67] : memref<128x128xf32, #tpu.memory_space<vmem>>, vector<128x128xf32>
    %303 = arith.truncf %301 : vector<128x128xf32> to vector<128x128xbf16>
    %c3 = arith.constant 3 : index
    %c0_68 = arith.constant 0 : index
    %c0_69 = arith.constant 0 : index
    %304 = vector.load %arg7[%c3, %c0_68, %c0_69] : memref<5x128x128xbf16, #tpu.memory_space<vmem>>, vector<1x128x128xbf16>
    %305 = vector.shape_cast %304 : vector<1x128x128xbf16> to vector<128x128xbf16>
    %cst_70 = arith.constant dense<0.000000e+00> : vector<128x128xf32>
    %306 = tpu.matmul %303, %305, %cst_70 {dimension_numbers = #tpu.dot_dimension_numbers<[1], [0], [0], [1], [0, 0, 1, 1], [], []>} : vector<128x128xbf16>, vector<128x128xbf16>, vector<128x128xf32> -> vector<128x128xf32>
    %307 = arith.addf %302, %306 : vector<128x128xf32>
    %c0_71 = arith.constant 0 : index
    %c0_72 = arith.constant 0 : index
    %308 = vector.load %arg12[%c0_71, %c0_72] : memref<128x128xf32, #tpu.memory_space<vmem>>, vector<128x128xf32>
    tpu.vector_store %arg12[%c0_71, %c0_72], %307 {strides = array<i32>} : memref<128x128xf32, #tpu.memory_space<vmem>>, vector<128x128xf32>,
    %309 = vector.extract_strided_slice %44 {offsets = [0, 0, 0], sizes = [16, 16, 128], strides = [1, 1, 1]} : vector<16x24x128xbf16> to vector<16x16x128xbf16>
    %310 = arith.extf %309 : vector<16x16x128xbf16> to vector<16x16x128xf32>
    %311 = vector.extract_strided_slice %44 {offsets = [0, 8, 0], sizes = [16, 16, 128], strides = [1, 1, 1]} : vector<16x24x128xbf16> to vector<16x16x128xbf16>
    %312 = arith.extf %311 : vector<16x16x128xbf16> to vector<16x16x128xf32>
    %cst_73 = arith.constant 0.000000e+00 : f32
    %313 = vector.broadcast %cst_73 : f32 to vector<8x16x128xf32>
    %314 = vector.extract_strided_slice %310 {offsets = [0, 0, 0], sizes = [8, 16, 128], strides = [1, 1, 1]} : vector<16x16x128xf32> to vector<8x16x128xf32>
    %315 = vector.extract_strided_slice %45 {offsets = [3, 0, 0, 0], sizes = [1, 1, 1, 128], strides = [1, 1, 1, 1]} : vector<4x3x3x128xf32> to vector<1x1x1x128xf32>
    %316 = vector.shape_cast %315 : vector<1x1x1x128xf32> to vector<128xf32>
    %317 = vector.shape_cast %316 : vector<128xf32> to vector<1x1x128xf32>
    %318 = vector.broadcast %317 : vector<1x1x128xf32> to vector<8x16x128xf32>
    %319 = arith.mulf %314, %318 : vector<8x16x128xf32>
    %320 = arith.addf %313, %319 : vector<8x16x128xf32>
    %321 = vector.extract_strided_slice %49 {offsets = [0, 0, 0], sizes = [8, 16, 128], strides = [1, 1, 1]} : vector<16x16x128xf32> to vector<8x16x128xf32>
    %322 = vector.extract_strided_slice %45 {offsets = [3, 0, 1, 0], sizes = [1, 1, 1, 128], strides = [1, 1, 1, 1]} : vector<4x3x3x128xf32> to vector<1x1x1x128xf32>
    %323 = vector.shape_cast %322 : vector<1x1x1x128xf32> to vector<128xf32>
    %324 = vector.shape_cast %323 : vector<128xf32> to vector<1x1x128xf32>
    %325 = vector.broadcast %324 : vector<1x1x128xf32> to vector<8x16x128xf32>
    %326 = arith.mulf %321, %325 : vector<8x16x128xf32>
    %327 = arith.addf %320, %326 : vector<8x16x128xf32>
    %328 = vector.extract_strided_slice %312 {offsets = [0, 0, 0], sizes = [8, 16, 128], strides = [1, 1, 1]} : vector<16x16x128xf32> to vector<8x16x128xf32>
    %329 = vector.extract_strided_slice %45 {offsets = [3, 0, 2, 0], sizes = [1, 1, 1, 128], strides = [1, 1, 1, 1]} : vector<4x3x3x128xf32> to vector<1x1x1x128xf32>
    %330 = vector.shape_cast %329 : vector<1x1x1x128xf32> to vector<128xf32>
    %331 = vector.shape_cast %330 : vector<128xf32> to vector<1x1x128xf32>
    %332 = vector.broadcast %331 : vector<1x1x128xf32> to vector<8x16x128xf32>
    %333 = arith.mulf %328, %332 : vector<8x16x128xf32>
    %334 = arith.addf %327, %333 : vector<8x16x128xf32>
    %335 = vector.extract_strided_slice %310 {offsets = [4, 0, 0], sizes = [8, 16, 128], strides = [1, 1, 1]} : vector<16x16x128xf32> to vector<8x16x128xf32>
    %336 = vector.extract_strided_slice %45 {offsets = [3, 1, 0, 0], sizes = [1, 1, 1, 128], strides = [1, 1, 1, 1]} : vector<4x3x3x128xf32> to vector<1x1x1x128xf32>
    %337 = vector.shape_cast %336 : vector<1x1x1x128xf32> to vector<128xf32>
    %338 = vector.shape_cast %337 : vector<128xf32> to vector<1x1x128xf32>
    %339 = vector.broadcast %338 : vector<1x1x128xf32> to vector<8x16x128xf32>
    %340 = arith.mulf %335, %339 : vector<8x16x128xf32>
    %341 = arith.addf %334, %340 : vector<8x16x128xf32>
    %342 = vector.extract_strided_slice %49 {offsets = [4, 0, 0], sizes = [8, 16, 128], strides = [1, 1, 1]} : vector<16x16x128xf32> to vector<8x16x128xf32>
    %343 = vector.extract_strided_slice %45 {offsets = [3, 1, 1, 0], sizes = [1, 1, 1, 128], strides = [1, 1, 1, 1]} : vector<4x3x3x128xf32> to vector<1x1x1x128xf32>
    %344 = vector.shape_cast %343 : vector<1x1x1x128xf32> to vector<128xf32>
    %345 = vector.shape_cast %344 : vector<128xf32> to vector<1x1x128xf32>
    %346 = vector.broadcast %345 : vector<1x1x128xf32> to vector<8x16x128xf32>
    %347 = arith.mulf %342, %346 : vector<8x16x128xf32>
    %348 = arith.addf %341, %347 : vector<8x16x128xf32>
    %349 = vector.extract_strided_slice %312 {offsets = [4, 0, 0], sizes = [8, 16, 128], strides = [1, 1, 1]} : vector<16x16x128xf32> to vector<8x16x128xf32>
    %350 = vector.extract_strided_slice %45 {offsets = [3, 1, 2, 0], sizes = [1, 1, 1, 128], strides = [1, 1, 1, 1]} : vector<4x3x3x128xf32> to vector<1x1x1x128xf32>
    %351 = vector.shape_cast %350 : vector<1x1x1x128xf32> to vector<128xf32>
    %352 = vector.shape_cast %351 : vector<128xf32> to vector<1x1x128xf32>
    %353 = vector.broadcast %352 : vector<1x1x128xf32> to vector<8x16x128xf32>
    %354 = arith.mulf %349, %353 : vector<8x16x128xf32>
    %355 = arith.addf %348, %354 : vector<8x16x128xf32>
    %356 = vector.extract_strided_slice %310 {offsets = [8, 0, 0], sizes = [8, 16, 128], strides = [1, 1, 1]} : vector<16x16x128xf32> to vector<8x16x128xf32>
    %357 = vector.extract_strided_slice %45 {offsets = [3, 2, 0, 0], sizes = [1, 1, 1, 128], strides = [1, 1, 1, 1]} : vector<4x3x3x128xf32> to vector<1x1x1x128xf32>
    %358 = vector.shape_cast %357 : vector<1x1x1x128xf32> to vector<128xf32>
    %359 = vector.shape_cast %358 : vector<128xf32> to vector<1x1x128xf32>
    %360 = vector.broadcast %359 : vector<1x1x128xf32> to vector<8x16x128xf32>
    %361 = arith.mulf %356, %360 : vector<8x16x128xf32>
    %362 = arith.addf %355, %361 : vector<8x16x128xf32>
    %363 = vector.extract_strided_slice %49 {offsets = [8, 0, 0], sizes = [8, 16, 128], strides = [1, 1, 1]} : vector<16x16x128xf32> to vector<8x16x128xf32>
    %364 = vector.extract_strided_slice %45 {offsets = [3, 2, 1, 0], sizes = [1, 1, 1, 128], strides = [1, 1, 1, 1]} : vector<4x3x3x128xf32> to vector<1x1x1x128xf32>
    %365 = vector.shape_cast %364 : vector<1x1x1x128xf32> to vector<128xf32>
    %366 = vector.shape_cast %365 : vector<128xf32> to vector<1x1x128xf32>
    %367 = vector.broadcast %366 : vector<1x1x128xf32> to vector<8x16x128xf32>
    %368 = arith.mulf %363, %367 : vector<8x16x128xf32>
    %369 = arith.addf %362, %368 : vector<8x16x128xf32>
    %370 = vector.extract_strided_slice %312 {offsets = [8, 0, 0], sizes = [8, 16, 128], strides = [1, 1, 1]} : vector<16x16x128xf32> to vector<8x16x128xf32>
    %371 = vector.extract_strided_slice %45 {offsets = [3, 2, 2, 0], sizes = [1, 1, 1, 128], strides = [1, 1, 1, 1]} : vector<4x3x3x128xf32> to vector<1x1x1x128xf32>
    %372 = vector.shape_cast %371 : vector<1x1x1x128xf32> to vector<128xf32>
    %373 = vector.shape_cast %372 : vector<128xf32> to vector<1x1x128xf32>
    %374 = vector.broadcast %373 : vector<1x1x128xf32> to vector<8x16x128xf32>
    %375 = arith.mulf %370, %374 : vector<8x16x128xf32>
    %376 = arith.addf %369, %375 : vector<8x16x128xf32>
    %377 = vector.shape_cast %376 : vector<8x16x128xf32> to vector<128x128xf32>
    %378 = arith.truncf %377 : vector<128x128xf32> to vector<128x128xbf16>
    %c3_74 = arith.constant 3 : index
    %c0_75 = arith.constant 0 : index
    %c0_76 = arith.constant 0 : index
    %379 = vector.load %arg6[%c3_74, %c0_75, %c0_76] : memref<4x128x128xbf16, #tpu.memory_space<vmem>>, vector<1x128x128xbf16>
    %380 = vector.shape_cast %379 : vector<1x128x128xbf16> to vector<128x128xbf16>
    %cst_77 = arith.constant dense<0.000000e+00> : vector<128x128xf32>
    %381 = tpu.matmul %378, %380, %cst_77 {dimension_numbers = #tpu.dot_dimension_numbers<[1], [0], [0], [1], [0, 0, 1, 1], [], []>} : vector<128x128xbf16>, vector<128x128xbf16>, vector<128x128xf32> -> vector<128x128xf32>
    %382 = vector.extract_strided_slice %24 {offsets = [4, 0], sizes = [1, 128], strides = [1, 1]} : vector<5x128xf32> to vector<1x128xf32>
    %383 = vector.shape_cast %382 : vector<1x128xf32> to vector<128xf32>
    %384 = vector.shape_cast %383 : vector<128xf32> to vector<1x128xf32>
    %385 = vector.broadcast %384 : vector<1x128xf32> to vector<128x128xf32>
    %386 = arith.addf %381, %385 : vector<128x128xf32>
    %cst_78 = arith.constant 0.000000e+00 : f32
    %387 = vector.broadcast %cst_78 : f32 to vector<128x128xf32>
    %388 = arith.maximumf %386, %387 : vector<128x128xf32>
    %c0_79 = arith.constant 0 : index
    %c0_80 = arith.constant 0 : index
    %389 = vector.load %arg12[%c0_79, %c0_80] : memref<128x128xf32, #tpu.memory_space<vmem>>, vector<128x128xf32>
    %390 = arith.truncf %388 : vector<128x128xf32> to vector<128x128xbf16>
    %c4 = arith.constant 4 : index
    %c0_81 = arith.constant 0 : index
    %c0_82 = arith.constant 0 : index
    %391 = vector.load %arg7[%c4, %c0_81, %c0_82] : memref<5x128x128xbf16, #tpu.memory_space<vmem>>, vector<1x128x128xbf16>
    %392 = vector.shape_cast %391 : vector<1x128x128xbf16> to vector<128x128xbf16>
    %cst_83 = arith.constant dense<0.000000e+00> : vector<128x128xf32>
    %393 = tpu.matmul %390, %392, %cst_83 {dimension_numbers = #tpu.dot_dimension_numbers<[1], [0], [0], [1], [0, 0, 1, 1], [], []>} : vector<128x128xbf16>, vector<128x128xbf16>, vector<128x128xf32> -> vector<128x128xf32>
    %394 = arith.addf %389, %393 : vector<128x128xf32>
    %c0_84 = arith.constant 0 : index
    %c0_85 = arith.constant 0 : index
    %395 = vector.load %arg12[%c0_84, %c0_85] : memref<128x128xf32, #tpu.memory_space<vmem>>, vector<128x128xf32>
    tpu.vector_store %arg12[%c0_84, %c0_85], %394 {strides = array<i32>} : memref<128x128xf32, #tpu.memory_space<vmem>>, vector<128x128xf32>,
    %c0_86 = arith.constant 0 : index
    %c0_87 = arith.constant 0 : index
    %396 = vector.load %arg12[%c0_86, %c0_87] : memref<128x128xf32, #tpu.memory_space<vmem>>, vector<128x128xf32>
    %c0_88 = arith.constant 0 : index
    %c0_89 = arith.constant 0 : index
    %397 = vector.load %arg9[%c0_88, %c0_89] : memref<1x128xf32, #tpu.memory_space<vmem>>, vector<1x128xf32>
    %398 = vector.broadcast %397 : vector<1x128xf32> to vector<128x128xf32>
    %399 = arith.addf %396, %398 : vector<128x128xf32>
    %cst_90 = arith.constant 0.000000e+00 : f32
    %400 = vector.broadcast %cst_90 : f32 to vector<128x128xf32>
    %401 = arith.maximumf %399, %400 : vector<128x128xf32>
    %402 = vector.shape_cast %401 : vector<128x128xf32> to vector<8x16x128xf32>
    %c0_91 = arith.constant 0 : index
    %c0_92 = arith.constant 0 : index
    %c0_93 = arith.constant 0 : index
    %c0_94 = arith.constant 0 : index
    %403 = vector.load %arg10[%c0_91, %c0_92, %c0_93, %c0_94] : memref<1x8x16x128xf32, #tpu.memory_space<vmem>>, vector<1x8x16x128xf32>
    %404 = vector.shape_cast %403 : vector<1x8x16x128xf32> to vector<8x16x128xf32>
    %405 = vector.shape_cast %402 : vector<8x16x128xf32> to vector<1x8x16x128xf32>
    tpu.vector_store %arg10[%c0_91, %c0_92, %c0_93, %c0_94], %405 {strides = array<i32>} : memref<1x8x16x128xf32, #tpu.memory_space<vmem>>, vector<1x8x16x128xf32>,
    return
  }
  func.func @transform_0(%arg0: i32, %arg1: i32) -> (i32, i32, i32, i32) {
    %c0_i32 = arith.constant 0 : i32
    %c0_i32_0 = arith.constant 0 : i32
    %c0_i32_1 = arith.constant 0 : i32
    return %arg0, %arg1, %c0_i32, %c0_i32_0 : i32, i32, i32, i32
  }
  func.func @transform_2(%arg0: i32, %arg1: i32) -> (i32, i32) {
    %c0_i32 = arith.constant 0 : i32
    %c0_i32_0 = arith.constant 0 : i32
    %c0_i32_1 = arith.constant 0 : i32
    return %c0_i32, %c0_i32_0 : i32, i32
  }
  func.func @transform_3(%arg0: i32, %arg1: i32) -> (i32, i32, i32, i32) {
    %c0_i32 = arith.constant 0 : i32
    %c0_i32_0 = arith.constant 0 : i32
    %c0_i32_1 = arith.constant 0 : i32
    %c0_i32_2 = arith.constant 0 : i32
    %c0_i32_3 = arith.constant 0 : i32
    return %c0_i32, %c0_i32_0, %c0_i32_1, %c0_i32_2 : i32, i32, i32, i32
  }
  func.func @transform_4(%arg0: i32, %arg1: i32) -> (i32, i32, i32) {
    %c0_i32 = arith.constant 0 : i32
    %c0_i32_0 = arith.constant 0 : i32
    %c0_i32_1 = arith.constant 0 : i32
    %c0_i32_2 = arith.constant 0 : i32
    return %c0_i32, %c0_i32_0, %c0_i32_1 : i32, i32, i32
  }
  func.func @transform_5(%arg0: i32, %arg1: i32) -> (i32, i32, i32) {
    %c0_i32 = arith.constant 0 : i32
    %c0_i32_0 = arith.constant 0 : i32
    %c0_i32_1 = arith.constant 0 : i32
    %c0_i32_2 = arith.constant 0 : i32
    return %c0_i32, %c0_i32_0, %c0_i32_1 : i32, i32, i32
  }
  func.func @transform_6(%arg0: i32, %arg1: i32) -> (i32, i32) {
    %c0_i32 = arith.constant 0 : i32
    %c0_i32_0 = arith.constant 0 : i32
    %c0_i32_1 = arith.constant 0 : i32
    return %c0_i32, %c0_i32_0 : i32, i32
  }
  func.func @transform_7(%arg0: i32, %arg1: i32) -> (i32, i32) {
    %c0_i32 = arith.constant 0 : i32
    %c0_i32_0 = arith.constant 0 : i32
    %c0_i32_1 = arith.constant 0 : i32
    return %c0_i32, %c0_i32_0 : i32, i32
  }
  func.func @transform_8(%arg0: i32, %arg1: i32) -> (i32, i32, i32, i32) {
    %c0_i32 = arith.constant 0 : i32
    %c0_i32_0 = arith.constant 0 : i32
    %c0_i32_1 = arith.constant 0 : i32
    return %arg0, %arg1, %c0_i32, %c0_i32_0 : i32, i32, i32, i32
  }
}

</mosaic_0001>

<llo_original>
// kernel: tpu_custom_call.1
$region0: #{tpu_custom_call.1}
  #allocation0 [shape = 'u32[]', space=smem, size = 0x4, offset = 0x4, fixed_abs, tag = 'smem constant byte address 0x4 - core index']
  #allocation1 [shape = 'u32[144,128]{1,0:T(1,128)}', space=vmem, size = 0x12000, scoped, tag = 'internal scratch']
  #allocation2 [shape = 'bf16[2,16,24,128]{3,2,1,0:T(8,128)(2,1)}', space=vmem, size = 0x30000, scoped, tag = 'scratch operand']
  #allocation3 [shape = 'f32[128,128]{1,0:T(8,128)}', space=vmem, size = 0x10000, scoped, tag = 'scratch operand']
  #allocation4 [shape = 's32[2]{0}', space=sflag, size = 0x8, scoped, tag = 'scratch operand']
  #allocation12 [shape = 's32[]', space=sflag, size = 0x4, offset = 0, fixed_abs, tag = 'sflag constant byte address 0x0 - dummy sync flag']
  #allocation13 [shape = 's32[]', space=sflag, size = 0x4, offset = 0, fixed_abs, tag = 'sflag constant byte address 0x0 - dummy sync flag']
  #allocation14 [shape = 'u32[]', space=smem, size = 0x4, offset = 0x44, fixed_abs, tag = 'smem constant byte address 0x44 - assertion arg 0']
  #allocation15 [shape = 'u32[]', space=smem, size = 0x4, offset = 0x48, fixed_abs, tag = 'smem constant byte address 0x48 - assertion arg 1']
  #allocation16 [shape = 's32[]', space=sflag, size = 0x4, offset = 0, fixed_abs, tag = 'sflag constant byte address 0x0 - dummy sync flag']
  #allocation17 [shape = 's32[]', space=sflag, size = 0x4, offset = 0, fixed_abs, tag = 'sflag constant byte address 0x0 - dummy sync flag']
  %s0 = inlined_call_operand.hbm [shape: bf16[2,16,16,128], index: 0, kind: input, shape index: {}]
  %s1 = inlined_call_operand.hbm [shape: bf16[2,24,24,128], index: 1, kind: input, shape index: {}]
  %s2 = inlined_call_operand.vmem [shape: bf16[128,128], index: 2, kind: input, shape index: {}]
  %s3 = inlined_call_operand.vmem [shape: f32[4,3,3,128], index: 3, kind: input, shape index: {}]
  %s4 = inlined_call_operand.hbm [shape: bf16[4,128,128], index: 4, kind: input, shape index: {}]
  %s5 = inlined_call_operand.hbm [shape: bf16[5,128,128], index: 5, kind: input, shape index: {}]
  %s6 = inlined_call_operand.vmem [shape: f32[5,128], index: 6, kind: input, shape index: {}]
  %s7 = inlined_call_operand.vmem [shape: f32[1,128], index: 7, kind: input, shape index: {}]
  %s8 = inlined_call_operand.hbm [shape: f32[2,16,16,128], index: 8, kind: output, shape index: {}]
  %s9 = sld [smem:[#allocation0]]
  $region89: #{tpu_custom_call.1} parent=0
    _
  %s11 = ssub.s32 1, %s9
  %s12 = scalar_select 0, %s11, %s9
  $region1: #{tpu_custom_call.1} parent=0
    #allocation5 [shape = 'u8[65536]{0}', space=vmem, size = 0x10000, scoped, tag = 'input window, operand 0']
    #allocation6 [shape = 's32[2]{0}', space=sflag, size = 0x8, scoped, tag = 'scoped memory for tpu_custom_call.1']
    #allocation7 [shape = 's32[2]{0}', space=sflag, size = 0x8, scoped, tag = 'scoped memory for tpu_custom_call.1']
    #allocation8 [shape = 'u8[131072]{0}', space=vmem, size = 0x20000, scoped, tag = 'input window, operand 4, single buffered']
    #allocation9 [shape = 's32[1]{0}', space=sflag, size = 0x4, scoped, tag = 'scoped memory for tpu_custom_call.1']
    #allocation10 [shape = 'u8[163840]{0}', space=vmem, size = 0x28000, scoped, tag = 'input window, operand 5, single buffered']
    #allocation11 [shape = 'u8[131072]{0}', space=vmem, size = 0x20000, scoped, tag = 'output window, operand 0']
    %13 = vsyncpa [#allocation6], 0
    %s14 = scalar_lea.sflag [#allocation6], 1
    %15 = vsyncpa %s14, 0
    %16 = vsyncpa [#allocation9], 0
    %17 = vsyncpa [#allocation7], 0
    %s18 = scalar_lea.sflag [#allocation7], 1
    %19 = vsyncpa %s18, 0
    loop: start=0, step=1, limit=6
    $region2: #{tpu_custom_call.1} parent=1 // loop_pre_header
      _
    $region3: #{tpu_custom_call.1} parent=1 // loop_header
      %s21 = sphi 0, %s25
      %p22 = scmp.ge.s32.totalorder %s21, 6
      %s28 = sphi 0, %s40
      %s29 = sphi 0, %s36
      %s30 = sphi 0, %s28
      %s31 = sphi 0, %s29
      %s32 = sphi 0, %s30
      %s33 = sphi 0, %s31
      %s45 = sphi 0, %s47
      %s48 = sphi 0, %s45
      %s49 = sphi 0, %s48
      %s65 = sphi 0, %s49
      %s69 = sphi 0, %s69
      %s71 = sphi 0, %s69
      %s72 = sphi 0, %s71
      %s86 = sphi 0, %s72
      %s90 = sphi 0, %s90
      %s92 = sphi 0, %s90
      %s93 = sphi 0, %s92
      %s107 = sphi 0, %s93
      %s111 = sphi 0, %s111
      %s113 = sphi 0, %s111
      %s114 = sphi 0, %s113
      %s128 = sphi 0, %s114
      %s132 = sphi 0, %s132
      %s134 = sphi 0, %s132
      %s135 = sphi 0, %s134
      %s149 = sphi 0, %s135
      %s153 = sphi 0, %s153
      %s155 = sphi 0, %s153
      %s156 = sphi 0, %s155
      %s170 = sphi 0, %s156
      %s174 = sphi 0, %s174
      %s176 = sphi 0, %s174
      %s177 = sphi 0, %s176
      %s191 = sphi 0, %s177
      %s199 = sphi 0, %s201
      %s202 = sphi 0, %s199
      %s203 = sphi 0, %s202
      %s219 = sphi 0, %s203
    $region4: #{tpu_custom_call.1} parent=1 // loop_header_branch
      %24 = sbr.rel (%p22) target = $region8
    $region5: #{tpu_custom_call.1} parent=1 // loop_body
      %s26 = ssub.s32 %s21, 1
      %s27 = ssub.s32 %s21, 2
      %s34 = sadd.s32 1, %s29
      %p35 = scmp.ge.s32.totalorder %s34, 2
      %s36 = scalar_select %p35, 0, %s34
      %s37 = sadd.s32 1, %s28
      %s38 = scalar_select %p35, %s37, %s28
      %p39 = scmp.ge.s32.totalorder %s38, 2
      %s40 = scalar_select %p39, 0, %s38
      %s41 = ssub.s32 %s28, %s40
      %s42 = ssub.s32 %s29, %s36
      %s43 = sor.u32 %s41, %s42
      %p44 = scmp.eq.s32.totalorder %s43, 0
      %s46 = sadd.s32 %s45, 1
      %s47 = scalar_select %p44, %s45, %s46
      %p50 = pneg %p44
      %p51 = scmp.eq.s32.totalorder %s21, 3
      %p52 = por %p50, %p51
      %p53 = scmp.ne.s32.totalorder %s45, %s48
      %p54 = scmp.eq.s32.totalorder %s21, 0
      %p55 = por %p53, %p54
      %p56 = scmp.ne.s32.totalorder %s45, %s48
      %p57 = scmp.eq.s32.totalorder %s26, 3
      %p58 = por %p56, %p57
      %p59 = scmp.ne.s32.totalorder %s48, %s49
      %p60 = scmp.eq.s32.totalorder %s26, 0
      %p61 = por %p59, %p60
      %p62 = scmp.ne.s32.totalorder %s48, %s49
      %p63 = scmp.eq.s32.totalorder %s27, 3
      %p64 = por %p62, %p63
      %p66 = scmp.ne.s32.totalorder %s49, %s65
      %p67 = scmp.eq.s32.totalorder %s27, 0
      %p68 = por %p66, %p67
      %s70 = sadd.s32 %s69, 1
      %p73 = scmp.eq.s32.totalorder %s21, 3
      %p74 = scmp.ne.s32.totalorder %s69, %s71
      %p75 = scmp.eq.s32.totalorder %s21, 0
      %p76 = por %p74, %p75
      %p77 = scmp.ne.s32.totalorder %s69, %s71
      %p78 = scmp.eq.s32.totalorder %s26, 3
      %p79 = por %p77, %p78
      %p80 = scmp.ne.s32.totalorder %s71, %s72
      %p81 = scmp.eq.s32.totalorder %s26, 0
      %p82 = por %p80, %p81
      %p83 = scmp.ne.s32.totalorder %s71, %s72
      %p84 = scmp.eq.s32.totalorder %s27, 3
      %p85 = por %p83, %p84
      %p87 = scmp.ne.s32.totalorder %s72, %s86
      %p88 = scmp.eq.s32.totalorder %s27, 0
      %p89 = por %p87, %p88
      %s91 = sadd.s32 %s90, 1
      %p94 = scmp.eq.s32.totalorder %s21, 3
      %p95 = scmp.ne.s32.totalorder %s90, %s92
      %p96 = scmp.eq.s32.totalorder %s21, 0
      %p97 = por %p95, %p96
      %p98 = scmp.ne.s32.totalorder %s90, %s92
      %p99 = scmp.eq.s32.totalorder %s26, 3
      %p100 = por %p98, %p99
      %p101 = scmp.ne.s32.totalorder %s92, %s93
      %p102 = scmp.eq.s32.totalorder %s26, 0
      %p103 = por %p101, %p102
      %p104 = scmp.ne.s32.totalorder %s92, %s93
      %p105 = scmp.eq.s32.totalorder %s27, 3
      %p106 = por %p104, %p105
      %p108 = scmp.ne.s32.totalorder %s93, %s107
      %p109 = scmp.eq.s32.totalorder %s27, 0
      %p110 = por %p108, %p109
      %s112 = sadd.s32 %s111, 1
      %p115 = scmp.eq.s32.totalorder %s21, 3
      %p116 = scmp.ne.s32.totalorder %s111, %s113
      %p117 = scmp.eq.s32.totalorder %s21, 0
      %p118 = por %p116, %p117
      %p119 = scmp.ne.s32.totalorder %s111, %s113
      %p120 = scmp.eq.s32.totalorder %s26, 3
      %p121 = por %p119, %p120
      %p122 = scmp.ne.s32.totalorder %s113, %s114
      %p123 = scmp.eq.s32.totalorder %s26, 0
      %p124 = por %p122, %p123
      %p125 = scmp.ne.s32.totalorder %s113, %s114
      %p126 = scmp.eq.s32.totalorder %s27, 3
      %p127 = por %p125, %p126
      %p129 = scmp.ne.s32.totalorder %s114, %s128
      %p130 = scmp.eq.s32.totalorder %s27, 0
      %p131 = por %p129, %p130
      %s133 = sadd.s32 %s132, 1
      %p136 = scmp.eq.s32.totalorder %s21, 3
      %p137 = scmp.ne.s32.totalorder %s132, %s134
      %p138 = scmp.eq.s32.totalorder %s21, 0
      %p139 = por %p137, %p138
      %p140 = scmp.ne.s32.totalorder %s132, %s134
      %p141 = scmp.eq.s32.totalorder %s26, 3
      %p142 = por %p140, %p141
      %p143 = scmp.ne.s32.totalorder %s134, %s135
      %p144 = scmp.eq.s32.totalorder %s26, 0
      %p145 = por %p143, %p144
      %p146 = scmp.ne.s32.totalorder %s134, %s135
      %p147 = scmp.eq.s32.totalorder %s27, 3
      %p148 = por %p146, %p147
      %p150 = scmp.ne.s32.totalorder %s135, %s149
      %p151 = scmp.eq.s32.totalorder %s27, 0
      %p152 = por %p150, %p151
      %s154 = sadd.s32 %s153, 1
      %p157 = scmp.eq.s32.totalorder %s21, 3
      %p158 = scmp.ne.s32.totalorder %s153, %s155
      %p159 = scmp.eq.s32.totalorder %s21, 0
      %p160 = por %p158, %p159
      %p161 = scmp.ne.s32.totalorder %s153, %s155
      %p162 = scmp.eq.s32.totalorder %s26, 3
      %p163 = por %p161, %p162
      %p164 = scmp.ne.s32.totalorder %s155, %s156
      %p165 = scmp.eq.s32.totalorder %s26, 0
      %p166 = por %p164, %p165
      %p167 = scmp.ne.s32.totalorder %s155, %s156
      %p168 = scmp.eq.s32.totalorder %s27, 3
      %p169 = por %p167, %p168
      %p171 = scmp.ne.s32.totalorder %s156, %s170
      %p172 = scmp.eq.s32.totalorder %s27, 0
      %p173 = por %p171, %p172
      %s175 = sadd.s32 %s174, 1
      %p178 = scmp.eq.s32.totalorder %s21, 3
      %p179 = scmp.ne.s32.totalorder %s174, %s176
      %p180 = scmp.eq.s32.totalorder %s21, 0
      %p181 = por %p179, %p180
      %p182 = scmp.ne.s32.totalorder %s174, %s176
      %p183 = scmp.eq.s32.totalorder %s26, 3
      %p184 = por %p182, %p183
      %p185 = scmp.ne.s32.totalorder %s176, %s177
      %p186 = scmp.eq.s32.totalorder %s26, 0
      %p187 = por %p185, %p186
      %p188 = scmp.ne.s32.totalorder %s176, %s177
      %p189 = scmp.eq.s32.totalorder %s27, 3
      %p190 = por %p188, %p189
      %p192 = scmp.ne.s32.totalorder %s177, %s191
      %p193 = scmp.eq.s32.totalorder %s27, 0
      %p194 = por %p192, %p193
      %s195 = ssub.s32 %s28, %s40
      %s196 = ssub.s32 %s29, %s36
      %s197 = sor.u32 %s195, %s196
      %p198 = scmp.eq.s32.totalorder %s197, 0
      %s200 = sadd.s32 %s199, 1
      %s201 = scalar_select %p198, %s199, %s200
      %p204 = pneg %p198
      %p205 = scmp.eq.s32.totalorder %s21, 3
      %p206 = por %p204, %p205
      %p207 = scmp.ne.s32.totalorder %s199, %s202
      %p208 = scmp.eq.s32.totalorder %s21, 0
      %p209 = por %p207, %p208
      %p210 = scmp.ne.s32.totalorder %s199, %s202
      %p211 = scmp.eq.s32.totalorder %s26, 3
      %p212 = por %p210, %p211
      %p213 = scmp.ne.s32.totalorder %s202, %s203
      %p214 = scmp.eq.s32.totalorder %s26, 0
      %p215 = por %p213, %p214
      %p216 = scmp.ne.s32.totalorder %s202, %s203
      %p217 = scmp.eq.s32.totalorder %s27, 3
      %p218 = por %p216, %p217
      %p220 = scmp.ne.s32.totalorder %s203, %s219
      %p221 = scmp.eq.s32.totalorder %s27, 0
      %p222 = por %p220, %p221
      %p223 = scmp.le.s32.totalorder 1, %s21
      %p224 = scmp.lt.s32.totalorder %s21, 5
      %p225 = pnand %p223, %p224
      %p226 = pneg %p225
      // Predicated region
      $region9: #{tpu_custom_call.1} parent=5 // pred_check
        _
      $region10: #{tpu_custom_call.1} parent=5 // pred_check_branch
        %228 = sbr.rel (%p225) target = $region12
      $region11: #{tpu_custom_call.1} parent=5 // pred_region
        %s229 = ssub.s32 %s21, 1
        // Predicated region
        $region13: #{tpu_custom_call.1} parent=11 // pred_check
          %p230 = pneg %p82
        $region14: #{tpu_custom_call.1} parent=11 // pred_check_branch
          %232 = sbr.rel (%p230) target = $region16
        $region15: #{tpu_custom_call.1} parent=11 // pred_region
          _
        $region16: #{tpu_custom_call.1} parent=11 // pred_fallthru
          _
        // Predicated region
        $region17: #{tpu_custom_call.1} parent=11 // pred_check
          %p233 = pneg %p103
        $region18: #{tpu_custom_call.1} parent=11 // pred_check_branch
          %235 = sbr.rel (%p233) target = $region20
        $region19: #{tpu_custom_call.1} parent=11 // pred_region
          _
        $region20: #{tpu_custom_call.1} parent=11 // pred_fallthru
          _
        // Predicated region
        $region21: #{tpu_custom_call.1} parent=11 // pred_check
          %p236 = pneg %p124
        $region22: #{tpu_custom_call.1} parent=11 // pred_check_branch
          %238 = sbr.rel (%p236) target = $region24
        $region23: #{tpu_custom_call.1} parent=11 // pred_region
          %s240 = ssub.s32 4096, 4096
          %241 = vsyncadd [#allocation9], %s240
          %s242 = sshll.u32 [#allocation8], 4
          %s243 = int_to_ptr.vmem [resolvable:$true] %s242
          %248 = dma.hbm_to_vmem [thread:$0]  %s4, 4096, %s243, [#allocation9], 64, 64, 4
        $region24: #{tpu_custom_call.1} parent=11 // pred_fallthru
          _
        // Predicated region
        $region25: #{tpu_custom_call.1} parent=11 // pred_check
          %p249 = pneg %p145
        $region26: #{tpu_custom_call.1} parent=11 // pred_check_branch
          %251 = sbr.rel (%p249) target = $region28
        $region27: #{tpu_custom_call.1} parent=11 // pred_region
          %s253 = ssub.s32 5120, 5120
          %254 = vsyncadd [#allocation9], %s253
          %s255 = sshll.u32 [#allocation10], 4
          %s256 = int_to_ptr.vmem [resolvable:$true] %s255
          %261 = dma.hbm_to_vmem [thread:$0]  %s5, 5120, %s256, [#allocation9], 64, 64, 4
        $region28: #{tpu_custom_call.1} parent=11 // pred_fallthru
          _
        // Predicated region
        $region29: #{tpu_custom_call.1} parent=11 // pred_check
          %p262 = pneg %p166
        $region30: #{tpu_custom_call.1} parent=11 // pred_check_branch
          %264 = sbr.rel (%p262) target = $region32
        $region31: #{tpu_custom_call.1} parent=11 // pred_region
          _
        $region32: #{tpu_custom_call.1} parent=11 // pred_fallthru
          _
        // Predicated region
        $region33: #{tpu_custom_call.1} parent=11 // pred_check
          %p265 = pneg %p187
        $region34: #{tpu_custom_call.1} parent=11 // pred_check_branch
          %267 = sbr.rel (%p265) target = $region36
        $region35: #{tpu_custom_call.1} parent=11 // pred_region
          _
        $region36: #{tpu_custom_call.1} parent=11 // pred_fallthru
          _
      $region12: #{tpu_custom_call.1} parent=5 // pred_fallthru
        _
      %p268 = scmp.lt.s32.totalorder %s21, 4
      // Predicated region
      $region37: #{tpu_custom_call.1} parent=5 // pred_check
        %p269 = pneg %p268
      $region38: #{tpu_custom_call.1} parent=5 // pred_check_branch
        %271 = sbr.rel (%p269) target = $region40
      $region39: #{tpu_custom_call.1} parent=5 // pred_region
        // Predicated region
        $region41: #{tpu_custom_call.1} parent=39 // pred_check
          %p272 = pneg %p55
        $region42: #{tpu_custom_call.1} parent=39 // pred_check_branch
          %274 = sbr.rel (%p272) target = $region44
        $region43: #{tpu_custom_call.1} parent=39 // pred_region
          %s275 = sand.u32 %s45, 1
          %s276 = scalar_lea.sflag [#allocation6], %s275
          %s277 = sand.u32 %s45, 1
          %s278 = smul.addr %s277, 64
          %s279 = scalar_lea.vmem [#allocation5], %s278
          %s280 = smul.u32 8, %s29
          %s282 = ssub.s32 1024, 1024
          %283 = vsyncadd %s276, %s282
          %s284 = smul.addr %s280, 2
          %s285 = smul.addr %s28, 32
          %s286 = sadd.s32 %s284, %s285
          %s287 = smul.addr %s286, 64
          %s288 = scalar_lea.hbm %s0, %s287
          %s289 = sshll.u32 %s279, 4
          %s290 = int_to_ptr.vmem [resolvable:$true] %s289
          %295 = dma.hbm_to_vmem [thread:$0]  %s288, 1024, %s290, %s276, 64, 64, 4
        $region44: #{tpu_custom_call.1} parent=39 // pred_fallthru
          _
      $region40: #{tpu_custom_call.1} parent=5 // pred_fallthru
        _
      %p296 = scmp.le.s32.totalorder 1, %s21
      %p297 = scmp.lt.s32.totalorder %s21, 5
      %p298 = pnand %p296, %p297
      %p299 = pneg %p298
      // Predicated region
      $region45: #{tpu_custom_call.1} parent=5 // pred_check
        _
      $region46: #{tpu_custom_call.1} parent=5 // pred_check_branch
        %301 = sbr.rel (%p298) target = $region48
      $region47: #{tpu_custom_call.1} parent=5 // pred_region
        %s302 = ssub.s32 %s21, 1
        %s303 = sand.u32 %s48, 1
        %s304 = scalar_lea.sflag [#allocation6], %s303
        %s305 = sand.u32 %s48, 1
        %s306 = smul.addr %s305, 64
        %s307 = scalar_lea.vmem [#allocation5], %s306
        // Predicated region
        $region49: #{tpu_custom_call.1} parent=47 // pred_check
          %p308 = pneg %p61
        $region50: #{tpu_custom_call.1} parent=47 // pred_check_branch
          %310 = sbr.rel (%p308) target = $region52
        $region51: #{tpu_custom_call.1} parent=47 // pred_region
          %311 = dma.done %s304, 1024
        $region52: #{tpu_custom_call.1} parent=47 // pred_fallthru
          _
        // Predicated region
        $region53: #{tpu_custom_call.1} parent=47 // pred_check
          %p312 = pneg %p124
        $region54: #{tpu_custom_call.1} parent=47 // pred_check_branch
          %314 = sbr.rel (%p312) target = $region56
        $region55: #{tpu_custom_call.1} parent=47 // pred_region
          %315 = dma.done [#allocation9], 4096
        $region56: #{tpu_custom_call.1} parent=47 // pred_fallthru
          _
        // Predicated region
        $region57: #{tpu_custom_call.1} parent=47 // pred_check
          %p316 = pneg %p145
        $region58: #{tpu_custom_call.1} parent=47 // pred_check_branch
          %318 = sbr.rel (%p316) target = $region60
        $region59: #{tpu_custom_call.1} parent=47 // pred_region
          %319 = dma.done [#allocation9], 5120
        $region60: #{tpu_custom_call.1} parent=47 // pred_fallthru
          _
        %s320 = sand.u32 %s48, 1
        %s321 = scalar_lea.sflag [#allocation6], %s320
        %s322 = sand.u32 %s48, 1
        %s323 = smul.addr %s322, 64
        %s324 = scalar_lea.vmem [#allocation5], %s323
        %p325 = pneg %p61
        %p326 = pneg %p58
        %p327 = pneg %p82
        %p328 = pneg %p79
        %p329 = pneg %p103
        %p330 = pneg %p100
        %p331 = pneg %p124
        %p332 = pneg %p121
        %p333 = pneg %p145
        %p334 = pneg %p142
        %p335 = pneg %p166
        %p336 = pneg %p163
        %p337 = pneg %p187
        %p338 = pneg %p184
        %p339 = pneg %p215
        %p340 = pneg %p212
        %s341 = sand.u32 %s202, 1
        %s342 = scalar_lea.sflag [#allocation7], %s341
        %s343 = sand.u32 %s202, 1
        %s344 = smul.addr %s343, 128
        %s345 = scalar_lea.vmem [#allocation11], %s344
        %s346 = smul.u32 8, %s31
        %s347 = smul.u32 8, %s31
        %p349 = scmp.lt.s32.totalorder %s31, 0
        %s350 = ssub.s32 0, %s31
        %s351 = scalar_select %p349, %s350, %s31
        %s352 = sand.u32 %s351, 1
        %s353 = ssub.s32 0, %s352
        %s354 = scalar_select %p349, %s353, %s352
        %p355 = scmp.ne.s32.totalorder %s354, 0
        %p356 = scmp.lt.s32.totalorder %s354, 0
        %p357 = pnand %p356, %p355
        %p358 = pneg %p357
        %s359 = sadd.s32 %s354, 2
        %s360 = scalar_select %p358, %s359, %s354
        %p361 = scmp.eq.s32.totalorder %s31, 0
        // Predicated region
        $region61: #{tpu_custom_call.1} parent=47 // pred_check
          %p362 = pneg %p361
        $region62: #{tpu_custom_call.1} parent=47 // pred_check_branch
          %364 = sbr.rel (%p362) target = $region64
        $region63: #{tpu_custom_call.1} parent=47 // pred_region
          %s365 = smul.u32 %s31, 8
          %s366 = smul.u32 %s365, 3
          %s367 = smul.u32 %s30, 72
          %s368 = sadd.s32 %s366, %s367
          %s369 = smul.addr %s368, 64
          %s370 = scalar_lea.hbm %s1, %s369
          %s371 = smul.u32 %s360, 48
          %s372 = smul.addr %s371, 4
          %s373 = scalar_lea.vmem [#allocation2], %s372
          %s374 = scalar_lea.sflag [#allocation4], %s360
          // Predicated region
          $region65: #{tpu_custom_call.1} parent=63 // pred_check
            _
          $region66: #{tpu_custom_call.1} parent=63 // pred_check_branch
            %376 = sbr.rel target = $region68
          $region67: #{tpu_custom_call.1} parent=63 // pred_region
            %377 = sst [smem:[#allocation14]] [#allocation13]
            %378 = sst [smem:[#allocation15]] [#allocation12]
          $region68: #{tpu_custom_call.1} parent=63 // pred_fallthru
            _
          %380 = shalt.err (0)
          %s382 = sshll.u32 %s373, 4
          %s383 = int_to_ptr.vmem [resolvable:$true] %s382
          %385 = dma.hbm_to_vmem [thread:$0]  %s370, 3072, %s383, %s374
        $region64: #{tpu_custom_call.1} parent=47 // pred_fallthru
          _
        %s386 = sadd.s32 %s31, 1
        %p387 = scmp.lt.s32.totalorder %s386, 2
        // Predicated region
        $region69: #{tpu_custom_call.1} parent=47 // pred_check
          %p388 = pneg %p387
        $region70: #{tpu_custom_call.1} parent=47 // pred_check_branch
          %390 = sbr.rel (%p388) target = $region72
        $region71: #{tpu_custom_call.1} parent=47 // pred_region
          %s391 = ssub.s32 1, %s360
          %s392 = smul.u32 %s386, 8
          %s393 = smul.u32 %s392, 3
          %s394 = smul.u32 %s30, 72
          %s395 = sadd.s32 %s393, %s394
          %s396 = smul.addr %s395, 64
          %s397 = scalar_lea.hbm %s1, %s396
          %s398 = smul.u32 %s391, 48
          %s399 = smul.addr %s398, 4
          %s400 = scalar_lea.vmem [#allocation2], %s399
          %s401 = scalar_lea.sflag [#allocation4], %s391
          // Predicated region
          $region73: #{tpu_custom_call.1} parent=71 // pred_check
            _
          $region74: #{tpu_custom_call.1} parent=71 // pred_check_branch
            %403 = sbr.rel target = $region76
          $region75: #{tpu_custom_call.1} parent=71 // pred_region
            %404 = sst [smem:[#allocation14]] [#allocation17]
            %405 = sst [smem:[#allocation15]] [#allocation16]
          $region76: #{tpu_custom_call.1} parent=71 // pred_fallthru
            _
          %407 = shalt.err (0)
          %s409 = sshll.u32 %s400, 4
          %s410 = int_to_ptr.vmem [resolvable:$true] %s409
          %412 = dma.hbm_to_vmem [thread:$0]  %s397, 3072, %s410, %s401
        $region72: #{tpu_custom_call.1} parent=47 // pred_fallthru
          _
        %s413 = smul.u32 %s360, 48
        %s414 = smul.addr %s413, 4
        %s415 = scalar_lea.vmem [#allocation2], %s414
        %s416 = scalar_lea.sflag [#allocation4], %s360
        %s417 = smul.u32 4, 16
        %s418 = smul.u32 %s417, 3
        %s419 = smul.u32 %s418, 1
        %s420 = sshll.u32 %s419, 4
        %421 = dma.done %s416, %s420
        %v422 = vld [vmem:[%s6] sm:$0x1f]
        %v423 = vld [vmem:[%s307] sm:$0xf]
        %v424 = vld [vmem:[%s307 + $0x4] sm:$0xf]
        %v425 = vld [vmem:[%s307 + $0x8] sm:$0xf]
        %v426 = vld [vmem:[%s307 + $0xc] sm:$0xf]
        %v427 = vld [vmem:[%s307 + $0x10] sm:$0xf]
        %v428 = vld [vmem:[%s307 + $0x14] sm:$0xf]
        %v429 = vld [vmem:[%s307 + $0x18] sm:$0xf]
        %v430 = vld [vmem:[%s307 + $0x1c] sm:$0xf]
        %v431 = vld [vmem:[%s307 + $0x20] sm:$0xf]
        %v432 = vld [vmem:[%s307 + $0x24] sm:$0xf]
        %v433 = vld [vmem:[%s307 + $0x28] sm:$0xf]
        %v434 = vld [vmem:[%s307 + $0x2c] sm:$0xf]
        %v435 = vld [vmem:[%s307 + $0x30] sm:$0xf]
        %v436 = vld [vmem:[%s307 + $0x34] sm:$0xf]
        %v437 = vld [vmem:[%s307 + $0x38] sm:$0xf]
        %v438 = vld [vmem:[%s307 + $0x3c] sm:$0xf]
        %v439 = vld [vmem:[%s2] sm:$0xf]
        %v440 = vld [vmem:[%s2 + $0x4] sm:$0xf]
        %v441 = vld [vmem:[%s2 + $0x8] sm:$0xf]
        %v442 = vld [vmem:[%s2 + $0xc] sm:$0xf]
        %v443 = vld [vmem:[%s2 + $0x10] sm:$0xf]
        %v444 = vld [vmem:[%s2 + $0x14] sm:$0xf]
        %v445 = vld [vmem:[%s2 + $0x18] sm:$0xf]
        %v446 = vld [vmem:[%s2 + $0x1c] sm:$0xf]
        %v447 = vld [vmem:[%s2 + $0x20] sm:$0xf]
        %v448 = vld [vmem:[%s2 + $0x24] sm:$0xf]
        %v449 = vld [vmem:[%s2 + $0x28] sm:$0xf]
        %v450 = vld [vmem:[%s2 + $0x2c] sm:$0xf]
        %v451 = vld [vmem:[%s2 + $0x30] sm:$0xf]
        %v452 = vld [vmem:[%s2 + $0x34] sm:$0xf]
        %v453 = vld [vmem:[%s2 + $0x38] sm:$0xf]
        %v454 = vld [vmem:[%s2 + $0x3c] sm:$0xf]
        %v455 = vlaneseq
        %v456 = vshrl.u32 %v455, 7
        %v457 = vsub.s32 0, %v456
        %v458 = vrot.slane %v422, %v457
        %v475 = vunpack.c.l.b16 %v423
        %v476 = vunpack.c.l.b16 %v424
        %v477 = vunpack.c.l.b16 %v425
        %v478 = vunpack.c.l.b16 %v426
        %v479 = vunpack.c.l.b16 %v427
        %v480 = vunpack.c.l.b16 %v428
        %v481 = vunpack.c.l.b16 %v429
        %v482 = vunpack.c.l.b16 %v430
        %v483 = vunpack.c.l.b16 %v431
        %v484 = vunpack.c.l.b16 %v432
        %v485 = vunpack.c.l.b16 %v433
        %v486 = vunpack.c.l.b16 %v434
        %v487 = vunpack.c.l.b16 %v435
        %v488 = vunpack.c.l.b16 %v436
        %v489 = vunpack.c.l.b16 %v437
        %v490 = vunpack.c.l.b16 %v438
        %v491 = vpack.c.b16 %v476, %v475
        %v492 = vpack.c.b16 %v478, %v477
        %v493 = vpack.c.b16 %v480, %v479
        %v494 = vpack.c.b16 %v482, %v481
        %v495 = vpack.c.b16 %v484, %v483
        %v496 = vpack.c.b16 %v486, %v485
        %v497 = vpack.c.b16 %v488, %v487
        %v498 = vpack.c.b16 %v490, %v489
        %v523 = vunpack.c.l.b16 %v439
        %v524 = vunpack.c.l.b16 %v440
        %v525 = vunpack.c.l.b16 %v441
        %v526 = vunpack.c.l.b16 %v442
        %v527 = vunpack.c.l.b16 %v443
        %v528 = vunpack.c.l.b16 %v444
        %v529 = vunpack.c.l.b16 %v445
        %v530 = vunpack.c.l.b16 %v446
        %v531 = vunpack.c.l.b16 %v447
        %v532 = vunpack.c.l.b16 %v448
        %v533 = vunpack.c.l.b16 %v449
        %v534 = vunpack.c.l.b16 %v450
        %v535 = vunpack.c.l.b16 %v451
        %v536 = vunpack.c.l.b16 %v452
        %v537 = vunpack.c.l.b16 %v453
        %v538 = vunpack.c.l.b16 %v454
        %v539 = vpack.c.b16 %v524, %v523
        %v540 = vpack.c.b16 %v526, %v525
        %v541 = vpack.c.b16 %v528, %v527
        %v542 = vpack.c.b16 %v530, %v529
        %v543 = vpack.c.b16 %v532, %v531
        %v544 = vpack.c.b16 %v534, %v533
        %v545 = vpack.c.b16 %v536, %v535
        %v546 = vpack.c.b16 %v538, %v537
        %555 = vmatprep.subr.bf16.mxu0 0
        %556 = vmatpush1.bf16.msra.mxu0 %v539
        %557 = vmatprep.subr.bf16.mxu0 0
        %558 = vmatpush1.bf16.msra.mxu0 %v540
        %559 = vmatprep.subr.bf16.mxu0 0
        %560 = vmatpush1.bf16.msra.mxu0 %v541
        %561 = vmatprep.subr.bf16.mxu0 0
        %562 = vmatpush1.bf16.msra.mxu0 %v542
        %563 = vmatprep.subr.bf16.mxu0 0
        %564 = vmatpush1.bf16.msra.mxu0 %v543
        %565 = vmatprep.subr.bf16.mxu0 0
        %566 = vmatpush1.bf16.msra.mxu0 %v544
        %567 = vmatprep.subr.bf16.mxu0 0
        %568 = vmatpush1.bf16.msra.mxu0 %v545
        %569 = vmatprep.subr.bf16.mxu0 0
        %570 = vmatpush1.bf16.msra.mxu0 %v546
        %571 = vmatprep.subr.bf16.mxu0 0
        %572 = vmatpush1.bf16.msra.mxu0 0
        %573 = vmatprep.subr.bf16.mxu0 0
        %574 = vmatpush1.bf16.msra.mxu0 0
        %575 = vmatprep.subr.bf16.mxu0 0
        %576 = vmatpush1.bf16.msra.mxu0 0
        %577 = vmatprep.subr.bf16.mxu0 0
        %578 = vmatpush1.bf16.msra.mxu0 0
        %579 = vmatprep.subr.bf16.mxu0 0
        %580 = vmatpush1.bf16.msra.mxu0 0
        %581 = vmatprep.subr.bf16.mxu0 0
        %582 = vmatpush1.bf16.msra.mxu0 0
        %583 = vmatprep.subr.bf16.mxu0 0
        %584 = vmatpush1.bf16.msra.mxu0 0
        %585 = vmatprep.subr.bf16.mxu0 0
        %586 = vmatpush1.bf16.msra.mxu0 0
        %587 = vmatprep.mubr.bf16.mxu0 0
        %588 = vmatmul.mubr.bf16.gmra.mrb[0].mxu0 %v491
        %v589 = vpop.f32.mrb[0].mxu0
        %v590 = vadd.f32 %v458, %v589
        %v591 = vpop.f32.mrb[0].mxu0
        %v592 = vpop.f32.mrb[0].mxu0
        %v593 = vadd.f32 %v458, %v592
        %v594 = vpop.f32.mrb[0].mxu0
        %595 = vmatprep.mubr.bf16.mxu0 0
        %596 = vmatmul.mubr.bf16.gmra.mrb[0].mxu0 %v492
        %v597 = vpop.f32.mrb[0].mxu0
        %v598 = vadd.f32 %v458, %v597
        %v599 = vpop.f32.mrb[0].mxu0
        %v600 = vpop.f32.mrb[0].mxu0
        %v601 = vadd.f32 %v458, %v600
        %v602 = vpop.f32.mrb[0].mxu0
        %603 = vmatprep.mubr.bf16.mxu0 0
        %604 = vmatmul.mubr.bf16.gmra.mrb[0].mxu0 %v493
        %v605 = vpop.f32.mrb[0].mxu0
        %v606 = vadd.f32 %v458, %v605
        %v607 = vpop.f32.mrb[0].mxu0
        %v608 = vpop.f32.mrb[0].mxu0
        %v609 = vadd.f32 %v458, %v608
        %v610 = vpop.f32.mrb[0].mxu0
        %611 = vmatprep.mubr.bf16.mxu0 0
        %612 = vmatmul.mubr.bf16.gmra.mrb[0].mxu0 %v494
        %v613 = vpop.f32.mrb[0].mxu0
        %v614 = vadd.f32 %v458, %v613
        %v615 = vpop.f32.mrb[0].mxu0
        %v616 = vpop.f32.mrb[0].mxu0
        %v617 = vadd.f32 %v458, %v616
        %v618 = vpop.f32.mrb[0].mxu0
        %619 = vmatprep.mubr.bf16.mxu0 0
        %620 = vmatmul.mubr.bf16.gmra.mrb[0].mxu0 %v495
        %v621 = vpop.f32.mrb[0].mxu0
        %v622 = vadd.f32 %v458, %v621
        %v623 = vpop.f32.mrb[0].mxu0
        %v624 = vpop.f32.mrb[0].mxu0
        %v625 = vadd.f32 %v458, %v624
        %v626 = vpop.f32.mrb[0].mxu0
        %627 = vmatprep.mubr.bf16.mxu0 0
        %628 = vmatmul.mubr.bf16.gmra.mrb[0].mxu0 %v496
        %v629 = vpop.f32.mrb[0].mxu0
        %v630 = vadd.f32 %v458, %v629
        %v631 = vpop.f32.mrb[0].mxu0
        %v632 = vpop.f32.mrb[0].mxu0
        %v633 = vadd.f32 %v458, %v632
        %v634 = vpop.f32.mrb[0].mxu0
        %635 = vmatprep.mubr.bf16.mxu0 0
        %636 = vmatmul.mubr.bf16.gmra.mrb[0].mxu0 %v497
        %v637 = vpop.f32.mrb[0].mxu0
        %v638 = vadd.f32 %v458, %v637
        %v639 = vpop.f32.mrb[0].mxu0
        %v640 = vpop.f32.mrb[0].mxu0
        %v641 = vadd.f32 %v458, %v640
        %v642 = vpop.f32.mrb[0].mxu0
        %643 = vmatprep.mubr.bf16.mxu0 0
        %644 = vmatmul.mubr.bf16.gmra.mrb[0].mxu0 %v498
        %v645 = vpop.f32.mrb[0].mxu0
        %v646 = vadd.f32 %v458, %v645
        %v647 = vpop.f32.mrb[0].mxu0
        %v648 = vpop.f32.mrb[0].mxu0
        %v649 = vadd.f32 %v458, %v648
        %v650 = vpop.f32.mrb[0].mxu0
        %651 = vdwg.mxu0
        %v652 = vmax.f32 %v590, 0.0
        %v653 = vmax.f32 %v593, 0.0
        %v654 = vmax.f32 %v598, 0.0
        %v655 = vmax.f32 %v601, 0.0
        %v656 = vmax.f32 %v606, 0.0
        %v657 = vmax.f32 %v609, 0.0
        %v658 = vmax.f32 %v614, 0.0
        %v659 = vmax.f32 %v617, 0.0
        %v660 = vmax.f32 %v622, 0.0
        %v661 = vmax.f32 %v625, 0.0
        %v662 = vmax.f32 %v630, 0.0
        %v663 = vmax.f32 %v633, 0.0
        %v664 = vmax.f32 %v638, 0.0
        %v665 = vmax.f32 %v641, 0.0
        %v666 = vmax.f32 %v646, 0.0
        %v667 = vmax.f32 %v649, 0.0
        %v668 = vpack.c.bf16 %v653, %v652
        %v669 = vpack.c.bf16 %v655, %v654
        %v670 = vpack.c.bf16 %v657, %v656
        %v671 = vpack.c.bf16 %v659, %v658
        %v672 = vpack.c.bf16 %v661, %v660
        %v673 = vpack.c.bf16 %v663, %v662
        %v674 = vpack.c.bf16 %v665, %v664
        %v675 = vpack.c.bf16 %v667, %v666
        %v676 = vld [vmem:[#allocation10] sm:$0xf]
        %v677 = vld [vmem:[#allocation10 + $0x4] sm:$0xf]
        %v678 = vld [vmem:[#allocation10 + $0x8] sm:$0xf]
        %v679 = vld [vmem:[#allocation10 + $0xc] sm:$0xf]
        %v680 = vld [vmem:[#allocation10 + $0x10] sm:$0xf]
        %v681 = vld [vmem:[#allocation10 + $0x14] sm:$0xf]
        %v682 = vld [vmem:[#allocation10 + $0x18] sm:$0xf]
        %v683 = vld [vmem:[#allocation10 + $0x1c] sm:$0xf]
        %v684 = vld [vmem:[#allocation10 + $0x20] sm:$0xf]
        %v685 = vld [vmem:[#allocation10 + $0x24] sm:$0xf]
        %v686 = vld [vmem:[#allocation10 + $0x28] sm:$0xf]
        %v687 = vld [vmem:[#allocation10 + $0x2c] sm:$0xf]
        %v688 = vld [vmem:[#allocation10 + $0x30] sm:$0xf]
        %v689 = vld [vmem:[#allocation10 + $0x34] sm:$0xf]
        %v690 = vld [vmem:[#allocation10 + $0x38] sm:$0xf]
        %v691 = vld [vmem:[#allocation10 + $0x3c] sm:$0xf]
        %v708 = vunpack.c.l.b16 %v676
        %v709 = vunpack.c.l.b16 %v677
        %v710 = vunpack.c.l.b16 %v678
        %v711 = vunpack.c.l.b16 %v679
        %v712 = vunpack.c.l.b16 %v680
        %v713 = vunpack.c.l.b16 %v681
        %v714 = vunpack.c.l.b16 %v682
        %v715 = vunpack.c.l.b16 %v683
        %v716 = vunpack.c.l.b16 %v684
        %v717 = vunpack.c.l.b16 %v685
        %v718 = vunpack.c.l.b16 %v686
        %v719 = vunpack.c.l.b16 %v687
        %v720 = vunpack.c.l.b16 %v688
        %v721 = vunpack.c.l.b16 %v689
        %v722 = vunpack.c.l.b16 %v690
        %v723 = vunpack.c.l.b16 %v691
        %v724 = vpack.c.b16 %v709, %v708
        %v725 = vpack.c.b16 %v711, %v710
        %v726 = vpack.c.b16 %v713, %v712
        %v727 = vpack.c.b16 %v715, %v714
        %v728 = vpack.c.b16 %v717, %v716
        %v729 = vpack.c.b16 %v719, %v718
        %v730 = vpack.c.b16 %v721, %v720
        %v731 = vpack.c.b16 %v723, %v722
        %740 = vmatprep.subr.bf16.mxu0 0
        %741 = vmatpush1.bf16.msra.mxu0 %v724
        %742 = vmatprep.subr.bf16.mxu0 0
        %743 = vmatpush1.bf16.msra.mxu0 %v725
        %744 = vmatprep.subr.bf16.mxu0 0
        %745 = vmatpush1.bf16.msra.mxu0 %v726
        %746 = vmatprep.subr.bf16.mxu0 0
        %747 = vmatpush1.bf16.msra.mxu0 %v727
        %748 = vmatprep.subr.bf16.mxu0 0
        %749 = vmatpush1.bf16.msra.mxu0 %v728
        %750 = vmatprep.subr.bf16.mxu0 0
        %751 = vmatpush1.bf16.msra.mxu0 %v729
        %752 = vmatprep.subr.bf16.mxu0 0
        %753 = vmatpush1.bf16.msra.mxu0 %v730
        %754 = vmatprep.subr.bf16.mxu0 0
        %755 = vmatpush1.bf16.msra.mxu0 %v731
        %756 = vmatprep.subr.bf16.mxu0 0
        %757 = vmatpush1.bf16.msra.mxu0 0
        %758 = vmatprep.subr.bf16.mxu0 0
        %759 = vmatpush1.bf16.msra.mxu0 0
        %760 = vmatprep.subr.bf16.mxu0 0
        %761 = vmatpush1.bf16.msra.mxu0 0
        %762 = vmatprep.subr.bf16.mxu0 0
        %763 = vmatpush1.bf16.msra.mxu0 0
        %764 = vmatprep.subr.bf16.mxu0 0
        %765 = vmatpush1.bf16.msra.mxu0 0
        %766 = vmatprep.subr.bf16.mxu0 0
        %767 = vmatpush1.bf16.msra.mxu0 0
        %768 = vmatprep.subr.bf16.mxu0 0
        %769 = vmatpush1.bf16.msra.mxu0 0
        %770 = vmatprep.subr.bf16.mxu0 0
        %771 = vmatpush1.bf16.msra.mxu0 0
        %772 = vmatprep.mubr.bf16.mxu0 0
        %773 = vmatmul.mubr.bf16.gmra.mrb[0].mxu0 %v668
        %v774 = vpop.f32.mrb[0].mxu0
        %v775 = vadd.f32 0.0, %v774
        %v776 = vpop.f32.mrb[0].mxu0
        %v777 = vpop.f32.mrb[0].mxu0
        %v778 = vadd.f32 0.0, %v777
        %v779 = vpop.f32.mrb[0].mxu0
        %780 = vmatprep.mubr.bf16.mxu0 0
        %781 = vmatmul.mubr.bf16.gmra.mrb[0].mxu0 %v669
        %v782 = vpop.f32.mrb[0].mxu0
        %v783 = vadd.f32 0.0, %v782
        %v784 = vpop.f32.mrb[0].mxu0
        %v785 = vpop.f32.mrb[0].mxu0
        %v786 = vadd.f32 0.0, %v785
        %v787 = vpop.f32.mrb[0].mxu0
        %788 = vmatprep.mubr.bf16.mxu0 0
        %789 = vmatmul.mubr.bf16.gmra.mrb[0].mxu0 %v670
        %v790 = vpop.f32.mrb[0].mxu0
        %v791 = vadd.f32 0.0, %v790
        %v792 = vpop.f32.mrb[0].mxu0
        %v793 = vpop.f32.mrb[0].mxu0
        %v794 = vadd.f32 0.0, %v793
        %v795 = vpop.f32.mrb[0].mxu0
        %796 = vmatprep.mubr.bf16.mxu0 0
        %797 = vmatmul.mubr.bf16.gmra.mrb[0].mxu0 %v671
        %v798 = vpop.f32.mrb[0].mxu0
        %v799 = vadd.f32 0.0, %v798
        %v800 = vpop.f32.mrb[0].mxu0
        %v801 = vpop.f32.mrb[0].mxu0
        %v802 = vadd.f32 0.0, %v801
        %v803 = vpop.f32.mrb[0].mxu0
        %804 = vmatprep.mubr.bf16.mxu0 0
        %805 = vmatmul.mubr.bf16.gmra.mrb[0].mxu0 %v672
        %v806 = vpop.f32.mrb[0].mxu0
        %v807 = vadd.f32 0.0, %v806
        %v808 = vpop.f32.mrb[0].mxu0
        %v809 = vpop.f32.mrb[0].mxu0
        %v810 = vadd.f32 0.0, %v809
        %v811 = vpop.f32.mrb[0].mxu0
        %812 = vmatprep.mubr.bf16.mxu0 0
        %813 = vmatmul.mubr.bf16.gmra.mrb[0].mxu0 %v673
        %v814 = vpop.f32.mrb[0].mxu0
        %v815 = vadd.f32 0.0, %v814
        %v816 = vpop.f32.mrb[0].mxu0
        %v817 = vpop.f32.mrb[0].mxu0
        %v818 = vadd.f32 0.0, %v817
        %v819 = vpop.f32.mrb[0].mxu0
        %820 = vmatprep.mubr.bf16.mxu0 0
        %821 = vmatmul.mubr.bf16.gmra.mrb[0].mxu0 %v674
        %v822 = vpop.f32.mrb[0].mxu0
        %v823 = vadd.f32 0.0, %v822
        %v824 = vpop.f32.mrb[0].mxu0
        %v825 = vpop.f32.mrb[0].mxu0
        %v826 = vadd.f32 0.0, %v825
        %v827 = vpop.f32.mrb[0].mxu0
        %828 = vmatprep.mubr.bf16.mxu0 0
        %829 = vmatmul.mubr.bf16.gmra.mrb[0].mxu0 %v675
        %v830 = vpop.f32.mrb[0].mxu0
        %v831 = vadd.f32 0.0, %v830
        %v832 = vpop.f32.mrb[0].mxu0
        %v833 = vpop.f32.mrb[0].mxu0
        %v834 = vadd.f32 0.0, %v833
        %v835 = vpop.f32.mrb[0].mxu0
        %836 = vdwg.mxu0
        %837 = vst [vmem:[#allocation3] sm:$0xff] %v775
        %838 = vst [vmem:[#allocation3 + $0x8] sm:$0xff] %v778
        %839 = vst [vmem:[#allocation3 + $0x10] sm:$0xff] %v783
        %840 = vst [vmem:[#allocation3 + $0x18] sm:$0xff] %v786
        %841 = vst [vmem:[#allocation3 + $0x20] sm:$0xff] %v791
        %842 = vst [vmem:[#allocation3 + $0x28] sm:$0xff] %v794
        %843 = vst [vmem:[#allocation3 + $0x30] sm:$0xff] %v799
        %844 = vst [vmem:[#allocation3 + $0x38] sm:$0xff] %v802
        %845 = vst [vmem:[#allocation3 + $0x40] sm:$0xff] %v807
        %846 = vst [vmem:[#allocation3 + $0x48] sm:$0xff] %v810
        %847 = vst [vmem:[#allocation3 + $0x50] sm:$0xff] %v815
        %848 = vst [vmem:[#allocation3 + $0x58] sm:$0xff] %v818
        %849 = vst [vmem:[#allocation3 + $0x60] sm:$0xff] %v823
        %850 = vst [vmem:[#allocation3 + $0x68] sm:$0xff] %v826
        %851 = vst [vmem:[#allocation3 + $0x70] sm:$0xff] %v831
        %852 = vst [vmem:[#allocation3 + $0x78] sm:$0xff] %v834
        %v853 = vld [vmem:[%s415] sm:$0xf]
        %v854 = vld [vmem:[%s415 + $0x4] sm:$0xf]
        %v855 = vld [vmem:[%s415 + $0x8] sm:$0xf]
        %v856 = vld [vmem:[%s415 + $0xc] sm:$0xf]
        %v857 = vld [vmem:[%s415 + $0x10] sm:$0xf]
        %v858 = vld [vmem:[%s415 + $0x14] sm:$0xf]
        %v859 = vld [vmem:[%s415 + $0x18] sm:$0xf]
        %v860 = vld [vmem:[%s415 + $0x1c] sm:$0xf]
        %v861 = vld [vmem:[%s415 + $0x20] sm:$0xf]
        %v862 = vld [vmem:[%s415 + $0x24] sm:$0xf]
        %v863 = vld [vmem:[%s415 + $0x28] sm:$0xf]
        %v864 = vld [vmem:[%s415 + $0x2c] sm:$0xf]
        %v865 = vld [vmem:[%s415 + $0x30] sm:$0xf]
        %v866 = vld [vmem:[%s415 + $0x34] sm:$0xf]
        %v867 = vld [vmem:[%s415 + $0x38] sm:$0xf]
        %v868 = vld [vmem:[%s415 + $0x3c] sm:$0xf]
        %v869 = vld [vmem:[%s415 + $0x40] sm:$0xf]
        %v870 = vld [vmem:[%s415 + $0x44] sm:$0xf]
        %v871 = vld [vmem:[%s415 + $0x48] sm:$0xf]
        %v872 = vld [vmem:[%s415 + $0x4c] sm:$0xf]
        %v873 = vld [vmem:[%s415 + $0x50] sm:$0xf]
        %v874 = vld [vmem:[%s415 + $0x54] sm:$0xf]
        %v875 = vld [vmem:[%s415 + $0x58] sm:$0xf]
        %v876 = vld [vmem:[%s415 + $0x5c] sm:$0xf]
        %v877 = vld [vmem:[%s415 + $0x60] sm:$0xf]
        %v878 = vld [vmem:[%s415 + $0x64] sm:$0xf]
        %v879 = vld [vmem:[%s415 + $0x68] sm:$0xf]
        %v880 = vld [vmem:[%s415 + $0x6c] sm:$0xf]
        %v881 = vld [vmem:[%s415 + $0x70] sm:$0xf]
        %v882 = vld [vmem:[%s415 + $0x74] sm:$0xf]
        %v883 = vld [vmem:[%s415 + $0x78] sm:$0xf]
        %v884 = vld [vmem:[%s415 + $0x7c] sm:$0xf]
        %v885 = vld [vmem:[%s415 + $0x80] sm:$0xf]
        %v886 = vld [vmem:[%s415 + $0x84] sm:$0xf]
        %v887 = vld [vmem:[%s415 + $0x88] sm:$0xf]
        %v888 = vld [vmem:[%s415 + $0x8c] sm:$0xf]
        %v889 = vld [vmem:[%s415 + $0x90] sm:$0xf]
        %v890 = vld [vmem:[%s415 + $0x94] sm:$0xf]
        %v891 = vld [vmem:[%s415 + $0x98] sm:$0xf]
        %v892 = vld [vmem:[%s415 + $0x9c] sm:$0xf]
        %v893 = vld [vmem:[%s415 + $0xa0] sm:$0xf]
        %v894 = vld [vmem:[%s415 + $0xa4] sm:$0xf]
        %v895 = vld [vmem:[%s415 + $0xa8] sm:$0xf]
        %v896 = vld [vmem:[%s415 + $0xac] sm:$0xf]
        %v897 = vld [vmem:[%s415 + $0xb0] sm:$0xf]
        %v898 = vld [vmem:[%s415 + $0xb4] sm:$0xf]
        %v899 = vld [vmem:[%s415 + $0xb8] sm:$0xf]
        %v900 = vld [vmem:[%s415 + $0xbc] sm:$0xf]
        %v901 = vld [vmem:[%s3] sm:$0x7]
        %v902 = vld [vmem:[%s3 + $0x4] sm:$0x7]
        %v903 = vld [vmem:[%s3 + $0x8] sm:$0x7]
        %v904 = vld [vmem:[%s3 + $0xc] sm:$0x7]
        %v905 = vld [vmem:[%s3 + $0x10] sm:$0x7]
        %v906 = vld [vmem:[%s3 + $0x14] sm:$0x7]
        %v907 = vld [vmem:[%s3 + $0x18] sm:$0x7]
        %v908 = vld [vmem:[%s3 + $0x1c] sm:$0x7]
        %v909 = vld [vmem:[%s3 + $0x20] sm:$0x7]
        %v910 = vld [vmem:[%s3 + $0x24] sm:$0x7]
        %v911 = vld [vmem:[%s3 + $0x28] sm:$0x7]
        %v912 = vld [vmem:[%s3 + $0x2c] sm:$0x7]
        %v913 = vunpack.c.l.bf16 %v862
        %v914 = vunpack.c.l.bf16 %v863
        %v915 = vunpack.c.l.bf16 %v864
        %v916 = vunpack.c.l.bf16 %v865
        %v917 = vunpack.c.l.bf16 %v866
        %v918 = vunpack.c.l.bf16 %v867
        %v919 = vunpack.c.l.bf16 %v868
        %v920 = vunpack.c.l.bf16 %v869
        %v921 = vunpack.c.l.bf16 %v870
        %v922 = vunpack.c.l.bf16 %v871
        %v923 = vunpack.c.l.bf16 %v872
        %v924 = vunpack.c.l.bf16 %v873
        %v925 = vunpack.c.l.bf16 %v874
        %v926 = vunpack.c.l.bf16 %v875
        %v927 = vunpack.c.l.bf16 %v876
        %v928 = vunpack.c.l.bf16 %v877
        %v929 = vunpack.c.l.bf16 %v878
        %v930 = vunpack.c.l.bf16 %v879
        %v931 = vunpack.c.l.bf16 %v880
        %v932 = vunpack.c.l.bf16 %v881
        %v933 = vunpack.c.l.bf16 %v882
        %v934 = vunpack.c.l.bf16 %v883
        %v935 = vunpack.c.l.bf16 %v884
        %v936 = vunpack.c.l.bf16 %v885
        %v937 = vunpack.c.l.bf16 %v886
        %v938 = vunpack.c.l.bf16 %v887
        %v939 = vunpack.c.l.bf16 %v888
        %v940 = vunpack.c.l.bf16 %v889
        %v941 = vunpack.c.l.bf16 %v890
        %v942 = vunpack.c.l.bf16 %v891
        %v943 = vunpack.c.l.bf16 %v853
        %v944 = vunpack.c.l.bf16 %v854
        %v945 = vunpack.c.l.bf16 %v855
        %v946 = vunpack.c.l.bf16 %v856
        %v947 = vunpack.c.l.bf16 %v857
        %v948 = vunpack.c.l.bf16 %v858
        %v949 = vunpack.c.l.bf16 %v859
        %v950 = vunpack.c.l.bf16 %v860
        %v951 = vunpack.c.l.bf16 %v861
        %v952 = vunpack.c.l.bf16 %v892
        %v953 = vunpack.c.l.bf16 %v893
        %v954 = vunpack.c.l.bf16 %v894
        %v955 = vunpack.c.l.bf16 %v895
        %v956 = vunpack.c.l.bf16 %v896
        %v957 = vunpack.c.l.bf16 %v897
        %v958 = vunpack.c.l.bf16 %v898
        %v959 = vunpack.c.l.bf16 %v899
        %v960 = vunpack.c.l.bf16 %v900
        %v961 = vlaneseq
        %v962 = vshrl.u32 %v961, 7
        %v963 = vsub.s32 0, %v962
        %v964 = vrot.slane %v901, %v963
        %v965 = vmul.f32 %v913, %v964
        %v966 = vmul.f32 %v914, %v964
        %v967 = vmul.f32 %v915, %v964
        %v968 = vmul.f32 %v916, %v964
        %v969 = vmul.f32 %v917, %v964
        %v970 = vmul.f32 %v918, %v964
        %v971 = vmul.f32 %v919, %v964
        %v972 = vmul.f32 %v920, %v964
        %v973 = vmul.f32 %v921, %v964
        %v974 = vmul.f32 %v922, %v964
        %v975 = vmul.f32 %v923, %v964
        %v976 = vmul.f32 %v924, %v964
        %v977 = vmul.f32 %v925, %v964
        %v978 = vmul.f32 %v926, %v964
        %v979 = vmul.f32 %v927, %v964
        %v980 = vmul.f32 %v928, %v964
        %v981 = vmul.f32 %v929, %v964
        %v982 = vmul.f32 %v930, %v964
        %v983 = vmul.f32 %v931, %v964
        %v984 = vmul.f32 %v932, %v964
        %v985 = vmul.f32 %v933, %v964
        %v986 = vmul.f32 %v934, %v964
        %v987 = vmul.f32 %v935, %v964
        %v988 = vmul.f32 %v936, %v964
        %v989 = vadd.f32 %v965, 0.0
        %v990 = vadd.f32 %v966, 0.0
        %v991 = vadd.f32 %v967, 0.0
        %v992 = vadd.f32 %v968, 0.0
        %v993 = vadd.f32 %v969, 0.0
        %v994 = vadd.f32 %v970, 0.0
        %v995 = vadd.f32 %v971, 0.0
        %v996 = vadd.f32 %v972, 0.0
        %v997 = vadd.f32 %v973, 0.0
        %v998 = vadd.f32 %v974, 0.0
        %v999 = vadd.f32 %v975, 0.0
        %v1000 = vadd.f32 %v976, 0.0
        %v1001 = vadd.f32 %v977, 0.0
        %v1002 = vadd.f32 %v978, 0.0
        %v1003 = vadd.f32 %v979, 0.0
        %v1004 = vadd.f32 %v980, 0.0
        %v1005 = vadd.f32 %v981, 0.0
        %v1006 = vadd.f32 %v982, 0.0
        %v1007 = vadd.f32 %v983, 0.0
        %v1008 = vadd.f32 %v984, 0.0
        %v1009 = vadd.f32 %v985, 0.0
        %v1010 = vadd.f32 %v986, 0.0
        %v1011 = vadd.f32 %v987, 0.0
        %v1012 = vadd.f32 %v988, 0.0
        %v1013 = vlaneseq
        %v1014 = vshrl.u32 %v1013, 7
        %v1015 = vsub.s32 1, %v1014
        %v1016 = vrot.slane %v901, %v1015
        %v1017 = vmul.f32 %v913, %v1016
        %v1018 = vmul.f32 %v914, %v1016
        %v1019 = vmul.f32 %v915, %v1016
        %v1020 = vmul.f32 %v916, %v1016
        %v1021 = vmul.f32 %v917, %v1016
        %v1022 = vmul.f32 %v918, %v1016
        %v1023 = vmul.f32 %v919, %v1016
        %v1024 = vmul.f32 %v920, %v1016
        %v1025 = vmul.f32 %v921, %v1016
        %v1026 = vmul.f32 %v922, %v1016
        %v1027 = vmul.f32 %v923, %v1016
        %v1028 = vmul.f32 %v924, %v1016
        %v1029 = vmul.f32 %v925, %v1016
        %v1030 = vmul.f32 %v926, %v1016
        %v1031 = vmul.f32 %v927, %v1016
        %v1032 = vmul.f32 %v928, %v1016
        %v1033 = vmul.f32 %v929, %v1016
        %v1034 = vmul.f32 %v930, %v1016
        %v1035 = vmul.f32 %v931, %v1016
        %v1036 = vmul.f32 %v932, %v1016
        %v1037 = vmul.f32 %v933, %v1016
        %v1038 = vmul.f32 %v934, %v1016
        %v1039 = vmul.f32 %v935, %v1016
        %v1040 = vmul.f32 %v936, %v1016
        %vm1065 = vcmask 1046528
        %v1066 = vrot.slane %v1017, 1
        %v1067 = vrot.slane %v1018, 1
        %v1068 = vsel %vm1065, %v1066, %v1067
        %v1069 = vrot.slane %v1019, 1
        %v1070 = vsel %vm1065, %v1067, %v1069
        %v1071 = vrot.slane %v1020, 1
        %v1072 = vrot.slane %v1021, 1
        %v1073 = vsel %vm1065, %v1071, %v1072
        %v1074 = vrot.slane %v1022, 1
        %v1075 = vsel %vm1065, %v1072, %v1074
        %v1076 = vrot.slane %v1023, 1
        %v1077 = vrot.slane %v1024, 1
        %v1078 = vsel %vm1065, %v1076, %v1077
        %v1079 = vrot.slane %v1025, 1
        %v1080 = vsel %vm1065, %v1077, %v1079
        %v1081 = vrot.slane %v1026, 1
        %v1082 = vrot.slane %v1027, 1
        %v1083 = vsel %vm1065, %v1081, %v1082
        %v1084 = vrot.slane %v1028, 1
        %v1085 = vsel %vm1065, %v1082, %v1084
        %v1086 = vrot.slane %v1029, 1
        %v1087 = vrot.slane %v1030, 1
        %v1088 = vsel %vm1065, %v1086, %v1087
        %v1089 = vrot.slane %v1031, 1
        %v1090 = vsel %vm1065, %v1087, %v1089
        %v1091 = vrot.slane %v1032, 1
        %v1092 = vrot.slane %v1033, 1
        %v1093 = vsel %vm1065, %v1091, %v1092
        %v1094 = vrot.slane %v1034, 1
        %v1095 = vsel %vm1065, %v1092, %v1094
        %v1096 = vrot.slane %v1035, 1
        %v1097 = vrot.slane %v1036, 1
        %v1098 = vsel %vm1065, %v1096, %v1097
        %v1099 = vrot.slane %v1037, 1
        %v1100 = vsel %vm1065, %v1097, %v1099
        %v1101 = vrot.slane %v1038, 1
        %v1102 = vrot.slane %v1039, 1
        %v1103 = vsel %vm1065, %v1101, %v1102
        %v1104 = vrot.slane %v1040, 1
        %v1105 = vsel %vm1065, %v1102, %v1104
        %v1130 = vadd.f32 %v989, %v1068
        %v1131 = vadd.f32 %v990, %v1070
        %v1132 = vadd.f32 %v991, %v1069
        %v1133 = vadd.f32 %v992, %v1073
        %v1134 = vadd.f32 %v993, %v1075
        %v1135 = vadd.f32 %v994, %v1074
        %v1136 = vadd.f32 %v995, %v1078
        %v1137 = vadd.f32 %v996, %v1080
        %v1138 = vadd.f32 %v997, %v1079
        %v1139 = vadd.f32 %v998, %v1083
        %v1140 = vadd.f32 %v999, %v1085
        %v1141 = vadd.f32 %v1000, %v1084
        %v1142 = vadd.f32 %v1001, %v1088
        %v1143 = vadd.f32 %v1002, %v1090
        %v1144 = vadd.f32 %v1003, %v1089
        %v1145 = vadd.f32 %v1004, %v1093
        %v1146 = vadd.f32 %v1005, %v1095
        %v1147 = vadd.f32 %v1006, %v1094
        %v1148 = vadd.f32 %v1007, %v1098
        %v1149 = vadd.f32 %v1008, %v1100
        %v1150 = vadd.f32 %v1009, %v1099
        %v1151 = vadd.f32 %v1010, %v1103
        %v1152 = vadd.f32 %v1011, %v1105
        %v1153 = vadd.f32 %v1012, %v1104
        %v1154 = vlaneseq
        %v1155 = vshrl.u32 %v1154, 7
        %v1156 = vsub.s32 2, %v1155
        %v1157 = vrot.slane %v901, %v1156
        %v1158 = vmul.f32 %v913, %v1157
        %v1159 = vmul.f32 %v914, %v1157
        %v1160 = vmul.f32 %v915, %v1157
        %v1161 = vmul.f32 %v916, %v1157
        %v1162 = vmul.f32 %v917, %v1157
        %v1163 = vmul.f32 %v918, %v1157
        %v1164 = vmul.f32 %v919, %v1157
        %v1165 = vmul.f32 %v920, %v1157
        %v1166 = vmul.f32 %v921, %v1157
        %v1167 = vmul.f32 %v922, %v1157
        %v1168 = vmul.f32 %v923, %v1157
        %v1169 = vmul.f32 %v924, %v1157
        %v1170 = vmul.f32 %v925, %v1157
        %v1171 = vmul.f32 %v926, %v1157
        %v1172 = vmul.f32 %v927, %v1157
        %v1173 = vmul.f32 %v928, %v1157
        %v1174 = vmul.f32 %v929, %v1157
        %v1175 = vmul.f32 %v930, %v1157
        %v1176 = vmul.f32 %v931, %v1157
        %v1177 = vmul.f32 %v932, %v1157
        %v1178 = vmul.f32 %v933, %v1157
        %v1179 = vmul.f32 %v934, %v1157
        %v1180 = vmul.f32 %v935, %v1157
        %v1181 = vmul.f32 %v936, %v1157
        %vm1206 = vcmask 1045504
        %v1207 = vrot.slane %v1158, 2
        %v1208 = vrot.slane %v1159, 2
        %v1209 = vsel %vm1206, %v1207, %v1208
        %v1210 = vrot.slane %v1160, 2
        %v1211 = vsel %vm1206, %v1208, %v1210
        %v1212 = vrot.slane %v1161, 2
        %v1213 = vrot.slane %v1162, 2
        %v1214 = vsel %vm1206, %v1212, %v1213
        %v1215 = vrot.slane %v1163, 2
        %v1216 = vsel %vm1206, %v1213, %v1215
        %v1217 = vrot.slane %v1164, 2
        %v1218 = vrot.slane %v1165, 2
        %v1219 = vsel %vm1206, %v1217, %v1218
        %v1220 = vrot.slane %v1166, 2
        %v1221 = vsel %vm1206, %v1218, %v1220
        %v1222 = vrot.slane %v1167, 2
        %v1223 = vrot.slane %v1168, 2
        %v1224 = vsel %vm1206, %v1222, %v1223
        %v1225 = vrot.slane %v1169, 2
        %v1226 = vsel %vm1206, %v1223, %v1225
        %v1227 = vrot.slane %v1170, 2
        %v1228 = vrot.slane %v1171, 2
        %v1229 = vsel %vm1206, %v1227, %v1228
        %v1230 = vrot.slane %v1172, 2
        %v1231 = vsel %vm1206, %v1228, %v1230
        %v1232 = vrot.slane %v1173, 2
        %v1233 = vrot.slane %v1174, 2
        %v1234 = vsel %vm1206, %v1232, %v1233
        %v1235 = vrot.slane %v1175, 2
        %v1236 = vsel %vm1206, %v1233, %v1235
        %v1237 = vrot.slane %v1176, 2
        %v1238 = vrot.slane %v1177, 2
        %v1239 = vsel %vm1206, %v1237, %v1238
        %v1240 = vrot.slane %v1178, 2
        %v1241 = vsel %vm1206, %v1238, %v1240
        %v1242 = vrot.slane %v1179, 2
        %v1243 = vrot.slane %v1180, 2
        %v1244 = vsel %vm1206, %v1242, %v1243
        %v1245 = vrot.slane %v1181, 2
        %v1246 = vsel %vm1206, %v1243, %v1245
        %v1271 = vadd.f32 %v1130, %v1209
        %v1272 = vadd.f32 %v1131, %v1211
        %v1273 = vadd.f32 %v1132, %v1210
        %v1274 = vadd.f32 %v1133, %v1214
        %v1275 = vadd.f32 %v1134, %v1216
        %v1276 = vadd.f32 %v1135, %v1215
        %v1277 = vadd.f32 %v1136, %v1219
        %v1278 = vadd.f32 %v1137, %v1221
        %v1279 = vadd.f32 %v1138, %v1220
        %v1280 = vadd.f32 %v1139, %v1224
        %v1281 = vadd.f32 %v1140, %v1226
        %v1282 = vadd.f32 %v1141, %v1225
        %v1283 = vadd.f32 %v1142, %v1229
        %v1284 = vadd.f32 %v1143, %v1231
        %v1285 = vadd.f32 %v1144, %v1230
        %v1286 = vadd.f32 %v1145, %v1234
        %v1287 = vadd.f32 %v1146, %v1236
        %v1288 = vadd.f32 %v1147, %v1235
        %v1289 = vadd.f32 %v1148, %v1239
        %v1290 = vadd.f32 %v1149, %v1241
        %v1291 = vadd.f32 %v1150, %v1240
        %v1292 = vadd.f32 %v1151, %v1244
        %v1293 = vadd.f32 %v1152, %v1246
        %v1294 = vadd.f32 %v1153, %v1245
        %v1295 = vlaneseq
        %v1296 = vshrl.u32 %v1295, 7
        %v1297 = vsub.s32 0, %v1296
        %v1298 = vrot.slane %v902, %v1297
        %v1299 = vmul.f32 %v916, %v1298
        %v1300 = vmul.f32 %v917, %v1298
        %v1301 = vmul.f32 %v918, %v1298
        %v1302 = vmul.f32 %v919, %v1298
        %v1303 = vmul.f32 %v920, %v1298
        %v1304 = vmul.f32 %v921, %v1298
        %v1305 = vmul.f32 %v922, %v1298
        %v1306 = vmul.f32 %v923, %v1298
        %v1307 = vmul.f32 %v924, %v1298
        %v1308 = vmul.f32 %v925, %v1298
        %v1309 = vmul.f32 %v926, %v1298
        %v1310 = vmul.f32 %v927, %v1298
        %v1311 = vmul.f32 %v928, %v1298
        %v1312 = vmul.f32 %v929, %v1298
        %v1313 = vmul.f32 %v930, %v1298
        %v1314 = vmul.f32 %v931, %v1298
        %v1315 = vmul.f32 %v932, %v1298
        %v1316 = vmul.f32 %v933, %v1298
        %v1317 = vmul.f32 %v934, %v1298
        %v1318 = vmul.f32 %v935, %v1298
        %v1319 = vmul.f32 %v936, %v1298
        %v1320 = vmul.f32 %v937, %v1298
        %v1321 = vmul.f32 %v938, %v1298
        %v1322 = vmul.f32 %v939, %v1298
        %v1323 = vadd.f32 %v1271, %v1299
        %v1324 = vadd.f32 %v1272, %v1300
        %v1325 = vadd.f32 %v1273, %v1301
        %v1326 = vadd.f32 %v1274, %v1302
        %v1327 = vadd.f32 %v1275, %v1303
        %v1328 = vadd.f32 %v1276, %v1304
        %v1329 = vadd.f32 %v1277, %v1305
        %v1330 = vadd.f32 %v1278, %v1306
        %v1331 = vadd.f32 %v1279, %v1307
        %v1332 = vadd.f32 %v1280, %v1308
        %v1333 = vadd.f32 %v1281, %v1309
        %v1334 = vadd.f32 %v1282, %v1310
        %v1335 = vadd.f32 %v1283, %v1311
        %v1336 = vadd.f32 %v1284, %v1312
        %v1337 = vadd.f32 %v1285, %v1313
        %v1338 = vadd.f32 %v1286, %v1314
        %v1339 = vadd.f32 %v1287, %v1315
        %v1340 = vadd.f32 %v1288, %v1316
        %v1341 = vadd.f32 %v1289, %v1317
        %v1342 = vadd.f32 %v1290, %v1318
        %v1343 = vadd.f32 %v1291, %v1319
        %v1344 = vadd.f32 %v1292, %v1320
        %v1345 = vadd.f32 %v1293, %v1321
        %v1346 = vadd.f32 %v1294, %v1322
        %v1347 = vlaneseq
        %v1348 = vshrl.u32 %v1347, 7
        %v1349 = vsub.s32 1, %v1348
        %v1350 = vrot.slane %v902, %v1349
        %v1351 = vmul.f32 %v916, %v1350
        %v1352 = vmul.f32 %v917, %v1350
        %v1353 = vmul.f32 %v918, %v1350
        %v1354 = vmul.f32 %v919, %v1350
        %v1355 = vmul.f32 %v920, %v1350
        %v1356 = vmul.f32 %v921, %v1350
        %v1357 = vmul.f32 %v922, %v1350
        %v1358 = vmul.f32 %v923, %v1350
        %v1359 = vmul.f32 %v924, %v1350
        %v1360 = vmul.f32 %v925, %v1350
        %v1361 = vmul.f32 %v926, %v1350
        %v1362 = vmul.f32 %v927, %v1350
        %v1363 = vmul.f32 %v928, %v1350
        %v1364 = vmul.f32 %v929, %v1350
        %v1365 = vmul.f32 %v930, %v1350
        %v1366 = vmul.f32 %v931, %v1350
        %v1367 = vmul.f32 %v932, %v1350
        %v1368 = vmul.f32 %v933, %v1350
        %v1369 = vmul.f32 %v934, %v1350
        %v1370 = vmul.f32 %v935, %v1350
        %v1371 = vmul.f32 %v936, %v1350
        %v1372 = vmul.f32 %v937, %v1350
        %v1373 = vmul.f32 %v938, %v1350
        %v1374 = vmul.f32 %v939, %v1350
        %v1399 = vrot.slane %v1351, 1
        %v1400 = vrot.slane %v1352, 1
        %v1401 = vsel %vm1065, %v1399, %v1400
        %v1402 = vrot.slane %v1353, 1
        %v1403 = vsel %vm1065, %v1400, %v1402
        %v1404 = vrot.slane %v1354, 1
        %v1405 = vrot.slane %v1355, 1
        %v1406 = vsel %vm1065, %v1404, %v1405
        %v1407 = vrot.slane %v1356, 1
        %v1408 = vsel %vm1065, %v1405, %v1407
        %v1409 = vrot.slane %v1357, 1
        %v1410 = vrot.slane %v1358, 1
        %v1411 = vsel %vm1065, %v1409, %v1410
        %v1412 = vrot.slane %v1359, 1
        %v1413 = vsel %vm1065, %v1410, %v1412
        %v1414 = vrot.slane %v1360, 1
        %v1415 = vrot.slane %v1361, 1
        %v1416 = vsel %vm1065, %v1414, %v1415
        %v1417 = vrot.slane %v1362, 1
        %v1418 = vsel %vm1065, %v1415, %v1417
        %v1419 = vrot.slane %v1363, 1
        %v1420 = vrot.slane %v1364, 1
        %v1421 = vsel %vm1065, %v1419, %v1420
        %v1422 = vrot.slane %v1365, 1
        %v1423 = vsel %vm1065, %v1420, %v1422
        %v1424 = vrot.slane %v1366, 1
        %v1425 = vrot.slane %v1367, 1
        %v1426 = vsel %vm1065, %v1424, %v1425
        %v1427 = vrot.slane %v1368, 1
        %v1428 = vsel %vm1065, %v1425, %v1427
        %v1429 = vrot.slane %v1369, 1
        %v1430 = vrot.slane %v1370, 1
        %v1431 = vsel %vm1065, %v1429, %v1430
        %v1432 = vrot.slane %v1371, 1
        %v1433 = vsel %vm1065, %v1430, %v1432
        %v1434 = vrot.slane %v1372, 1
        %v1435 = vrot.slane %v1373, 1
        %v1436 = vsel %vm1065, %v1434, %v1435
        %v1437 = vrot.slane %v1374, 1
        %v1438 = vsel %vm1065, %v1435, %v1437
        %v1463 = vadd.f32 %v1323, %v1401
        %v1464 = vadd.f32 %v1324, %v1403
        %v1465 = vadd.f32 %v1325, %v1402
        %v1466 = vadd.f32 %v1326, %v1406
        %v1467 = vadd.f32 %v1327, %v1408
        %v1468 = vadd.f32 %v1328, %v1407
        %v1469 = vadd.f32 %v1329, %v1411
        %v1470 = vadd.f32 %v1330, %v1413
        %v1471 = vadd.f32 %v1331, %v1412
        %v1472 = vadd.f32 %v1332, %v1416
        %v1473 = vadd.f32 %v1333, %v1418
        %v1474 = vadd.f32 %v1334, %v1417
        %v1475 = vadd.f32 %v1335, %v1421
        %v1476 = vadd.f32 %v1336, %v1423
        %v1477 = vadd.f32 %v1337, %v1422
        %v1478 = vadd.f32 %v1338, %v1426
        %v1479 = vadd.f32 %v1339, %v1428
        %v1480 = vadd.f32 %v1340, %v1427
        %v1481 = vadd.f32 %v1341, %v1431
        %v1482 = vadd.f32 %v1342, %v1433
        %v1483 = vadd.f32 %v1343, %v1432
        %v1484 = vadd.f32 %v1344, %v1436
        %v1485 = vadd.f32 %v1345, %v1438
        %v1486 = vadd.f32 %v1346, %v1437
        %v1487 = vlaneseq
        %v1488 = vshrl.u32 %v1487, 7
        %v1489 = vsub.s32 2, %v1488
        %v1490 = vrot.slane %v902, %v1489
        %v1491 = vmul.f32 %v916, %v1490
        %v1492 = vmul.f32 %v917, %v1490
        %v1493 = vmul.f32 %v918, %v1490
        %v1494 = vmul.f32 %v919, %v1490
        %v1495 = vmul.f32 %v920, %v1490
        %v1496 = vmul.f32 %v921, %v1490
        %v1497 = vmul.f32 %v922, %v1490
        %v1498 = vmul.f32 %v923, %v1490
        %v1499 = vmul.f32 %v924, %v1490
        %v1500 = vmul.f32 %v925, %v1490
        %v1501 = vmul.f32 %v926, %v1490
        %v1502 = vmul.f32 %v927, %v1490
        %v1503 = vmul.f32 %v928, %v1490
        %v1504 = vmul.f32 %v929, %v1490
        %v1505 = vmul.f32 %v930, %v1490
        %v1506 = vmul.f32 %v931, %v1490
        %v1507 = vmul.f32 %v932, %v1490
        %v1508 = vmul.f32 %v933, %v1490
        %v1509 = vmul.f32 %v934, %v1490
        %v1510 = vmul.f32 %v935, %v1490
        %v1511 = vmul.f32 %v936, %v1490
        %v1512 = vmul.f32 %v937, %v1490
        %v1513 = vmul.f32 %v938, %v1490
        %v1514 = vmul.f32 %v939, %v1490
        %v1539 = vrot.slane %v1491, 2
        %v1540 = vrot.slane %v1492, 2
        %v1541 = vsel %vm1206, %v1539, %v1540
        %v1542 = vrot.slane %v1493, 2
        %v1543 = vsel %vm1206, %v1540, %v1542
        %v1544 = vrot.slane %v1494, 2
        %v1545 = vrot.slane %v1495, 2
        %v1546 = vsel %vm1206, %v1544, %v1545
        %v1547 = vrot.slane %v1496, 2
        %v1548 = vsel %vm1206, %v1545, %v1547
        %v1549 = vrot.slane %v1497, 2
        %v1550 = vrot.slane %v1498, 2
        %v1551 = vsel %vm1206, %v1549, %v1550
        %v1552 = vrot.slane %v1499, 2
        %v1553 = vsel %vm1206, %v1550, %v1552
        %v1554 = vrot.slane %v1500, 2
        %v1555 = vrot.slane %v1501, 2
        %v1556 = vsel %vm1206, %v1554, %v1555
        %v1557 = vrot.slane %v1502, 2
        %v1558 = vsel %vm1206, %v1555, %v1557
        %v1559 = vrot.slane %v1503, 2
        %v1560 = vrot.slane %v1504, 2
        %v1561 = vsel %vm1206, %v1559, %v1560
        %v1562 = vrot.slane %v1505, 2
        %v1563 = vsel %vm1206, %v1560, %v1562
        %v1564 = vrot.slane %v1506, 2
        %v1565 = vrot.slane %v1507, 2
        %v1566 = vsel %vm1206, %v1564, %v1565
        %v1567 = vrot.slane %v1508, 2
        %v1568 = vsel %vm1206, %v1565, %v1567
        %v1569 = vrot.slane %v1509, 2
        %v1570 = vrot.slane %v1510, 2
        %v1571 = vsel %vm1206, %v1569, %v1570
        %v1572 = vrot.slane %v1511, 2
        %v1573 = vsel %vm1206, %v1570, %v1572
        %v1574 = vrot.slane %v1512, 2
        %v1575 = vrot.slane %v1513, 2
        %v1576 = vsel %vm1206, %v1574, %v1575
        %v1577 = vrot.slane %v1514, 2
        %v1578 = vsel %vm1206, %v1575, %v1577
        %v1603 = vadd.f32 %v1463, %v1541
        %v1604 = vadd.f32 %v1464, %v1543
        %v1605 = vadd.f32 %v1465, %v1542
        %v1606 = vadd.f32 %v1466, %v1546
        %v1607 = vadd.f32 %v1467, %v1548
        %v1608 = vadd.f32 %v1468, %v1547
        %v1609 = vadd.f32 %v1469, %v1551
        %v1610 = vadd.f32 %v1470, %v1553
        %v1611 = vadd.f32 %v1471, %v1552
        %v1612 = vadd.f32 %v1472, %v1556
        %v1613 = vadd.f32 %v1473, %v1558
        %v1614 = vadd.f32 %v1474, %v1557
        %v1615 = vadd.f32 %v1475, %v1561
        %v1616 = vadd.f32 %v1476, %v1563
        %v1617 = vadd.f32 %v1477, %v1562
        %v1618 = vadd.f32 %v1478, %v1566
        %v1619 = vadd.f32 %v1479, %v1568
        %v1620 = vadd.f32 %v1480, %v1567
        %v1621 = vadd.f32 %v1481, %v1571
        %v1622 = vadd.f32 %v1482, %v1573
        %v1623 = vadd.f32 %v1483, %v1572
        %v1624 = vadd.f32 %v1484, %v1576
        %v1625 = vadd.f32 %v1485, %v1578
        %v1626 = vadd.f32 %v1486, %v1577
        %v1627 = vlaneseq
        %v1628 = vshrl.u32 %v1627, 7
        %v1629 = vsub.s32 0, %v1628
        %v1630 = vrot.slane %v903, %v1629
        %v1631 = vmul.f32 %v919, %v1630
        %v1632 = vmul.f32 %v920, %v1630
        %v1633 = vmul.f32 %v921, %v1630
        %v1634 = vmul.f32 %v922, %v1630
        %v1635 = vmul.f32 %v923, %v1630
        %v1636 = vmul.f32 %v924, %v1630
        %v1637 = vmul.f32 %v925, %v1630
        %v1638 = vmul.f32 %v926, %v1630
        %v1639 = vmul.f32 %v927, %v1630
        %v1640 = vmul.f32 %v928, %v1630
        %v1641 = vmul.f32 %v929, %v1630
        %v1642 = vmul.f32 %v930, %v1630
        %v1643 = vmul.f32 %v931, %v1630
        %v1644 = vmul.f32 %v932, %v1630
        %v1645 = vmul.f32 %v933, %v1630
        %v1646 = vmul.f32 %v934, %v1630
        %v1647 = vmul.f32 %v935, %v1630
        %v1648 = vmul.f32 %v936, %v1630
        %v1649 = vmul.f32 %v937, %v1630
        %v1650 = vmul.f32 %v938, %v1630
        %v1651 = vmul.f32 %v939, %v1630
        %v1652 = vmul.f32 %v940, %v1630
        %v1653 = vmul.f32 %v941, %v1630
        %v1654 = vmul.f32 %v942, %v1630
        %v1655 = vadd.f32 %v1603, %v1631
        %v1656 = vadd.f32 %v1604, %v1632
        %v1657 = vadd.f32 %v1605, %v1633
        %v1658 = vadd.f32 %v1606, %v1634
        %v1659 = vadd.f32 %v1607, %v1635
        %v1660 = vadd.f32 %v1608, %v1636
        %v1661 = vadd.f32 %v1609, %v1637
        %v1662 = vadd.f32 %v1610, %v1638
        %v1663 = vadd.f32 %v1611, %v1639
        %v1664 = vadd.f32 %v1612, %v1640
        %v1665 = vadd.f32 %v1613, %v1641
        %v1666 = vadd.f32 %v1614, %v1642
        %v1667 = vadd.f32 %v1615, %v1643
        %v1668 = vadd.f32 %v1616, %v1644
        %v1669 = vadd.f32 %v1617, %v1645
        %v1670 = vadd.f32 %v1618, %v1646
        %v1671 = vadd.f32 %v1619, %v1647
        %v1672 = vadd.f32 %v1620, %v1648
        %v1673 = vadd.f32 %v1621, %v1649
        %v1674 = vadd.f32 %v1622, %v1650
        %v1675 = vadd.f32 %v1623, %v1651
        %v1676 = vadd.f32 %v1624, %v1652
        %v1677 = vadd.f32 %v1625, %v1653
        %v1678 = vadd.f32 %v1626, %v1654
        %v1679 = vlaneseq
        %v1680 = vshrl.u32 %v1679, 7
        %v1681 = vsub.s32 1, %v1680
        %v1682 = vrot.slane %v903, %v1681
        %v1683 = vmul.f32 %v919, %v1682
        %v1684 = vmul.f32 %v920, %v1682
        %v1685 = vmul.f32 %v921, %v1682
        %v1686 = vmul.f32 %v922, %v1682
        %v1687 = vmul.f32 %v923, %v1682
        %v1688 = vmul.f32 %v924, %v1682
        %v1689 = vmul.f32 %v925, %v1682
        %v1690 = vmul.f32 %v926, %v1682
        %v1691 = vmul.f32 %v927, %v1682
        %v1692 = vmul.f32 %v928, %v1682
        %v1693 = vmul.f32 %v929, %v1682
        %v1694 = vmul.f32 %v930, %v1682
        %v1695 = vmul.f32 %v931, %v1682
        %v1696 = vmul.f32 %v932, %v1682
        %v1697 = vmul.f32 %v933, %v1682
        %v1698 = vmul.f32 %v934, %v1682
        %v1699 = vmul.f32 %v935, %v1682
        %v1700 = vmul.f32 %v936, %v1682
        %v1701 = vmul.f32 %v937, %v1682
        %v1702 = vmul.f32 %v938, %v1682
        %v1703 = vmul.f32 %v939, %v1682
        %v1704 = vmul.f32 %v940, %v1682
        %v1705 = vmul.f32 %v941, %v1682
        %v1706 = vmul.f32 %v942, %v1682
        %v1731 = vrot.slane %v1683, 1
        %v1732 = vrot.slane %v1684, 1
        %v1733 = vsel %vm1065, %v1731, %v1732
        %v1734 = vrot.slane %v1685, 1
        %v1735 = vsel %vm1065, %v1732, %v1734
        %v1736 = vrot.slane %v1686, 1
        %v1737 = vrot.slane %v1687, 1
        %v1738 = vsel %vm1065, %v1736, %v1737
        %v1739 = vrot.slane %v1688, 1
        %v1740 = vsel %vm1065, %v1737, %v1739
        %v1741 = vrot.slane %v1689, 1
        %v1742 = vrot.slane %v1690, 1
        %v1743 = vsel %vm1065, %v1741, %v1742
        %v1744 = vrot.slane %v1691, 1
        %v1745 = vsel %vm1065, %v1742, %v1744
        %v1746 = vrot.slane %v1692, 1
        %v1747 = vrot.slane %v1693, 1
        %v1748 = vsel %vm1065, %v1746, %v1747
        %v1749 = vrot.slane %v1694, 1
        %v1750 = vsel %vm1065, %v1747, %v1749
        %v1751 = vrot.slane %v1695, 1
        %v1752 = vrot.slane %v1696, 1
        %v1753 = vsel %vm1065, %v1751, %v1752
        %v1754 = vrot.slane %v1697, 1
        %v1755 = vsel %vm1065, %v1752, %v1754
        %v1756 = vrot.slane %v1698, 1
        %v1757 = vrot.slane %v1699, 1
        %v1758 = vsel %vm1065, %v1756, %v1757
        %v1759 = vrot.slane %v1700, 1
        %v1760 = vsel %vm1065, %v1757, %v1759
        %v1761 = vrot.slane %v1701, 1
        %v1762 = vrot.slane %v1702, 1
        %v1763 = vsel %vm1065, %v1761, %v1762
        %v1764 = vrot.slane %v1703, 1
        %v1765 = vsel %vm1065, %v1762, %v1764
        %v1766 = vrot.slane %v1704, 1
        %v1767 = vrot.slane %v1705, 1
        %v1768 = vsel %vm1065, %v1766, %v1767
        %v1769 = vrot.slane %v1706, 1
        %v1770 = vsel %vm1065, %v1767, %v1769
        %v1795 = vadd.f32 %v1655, %v1733
        %v1796 = vadd.f32 %v1656, %v1735
        %v1797 = vadd.f32 %v1657, %v1734
        %v1798 = vadd.f32 %v1658, %v1738
        %v1799 = vadd.f32 %v1659, %v1740
        %v1800 = vadd.f32 %v1660, %v1739
        %v1801 = vadd.f32 %v1661, %v1743
        %v1802 = vadd.f32 %v1662, %v1745
        %v1803 = vadd.f32 %v1663, %v1744
        %v1804 = vadd.f32 %v1664, %v1748
        %v1805 = vadd.f32 %v1665, %v1750
        %v1806 = vadd.f32 %v1666, %v1749
        %v1807 = vadd.f32 %v1667, %v1753
        %v1808 = vadd.f32 %v1668, %v1755
        %v1809 = vadd.f32 %v1669, %v1754
        %v1810 = vadd.f32 %v1670, %v1758
        %v1811 = vadd.f32 %v1671, %v1760
        %v1812 = vadd.f32 %v1672, %v1759
        %v1813 = vadd.f32 %v1673, %v1763
        %v1814 = vadd.f32 %v1674, %v1765
        %v1815 = vadd.f32 %v1675, %v1764
        %v1816 = vadd.f32 %v1676, %v1768
        %v1817 = vadd.f32 %v1677, %v1770
        %v1818 = vadd.f32 %v1678, %v1769
        %v1819 = vlaneseq
        %v1820 = vshrl.u32 %v1819, 7
        %v1821 = vsub.s32 2, %v1820
        %v1822 = vrot.slane %v903, %v1821
        %v1823 = vmul.f32 %v919, %v1822
        %v1824 = vmul.f32 %v920, %v1822
        %v1825 = vmul.f32 %v921, %v1822
        %v1826 = vmul.f32 %v922, %v1822
        %v1827 = vmul.f32 %v923, %v1822
        %v1828 = vmul.f32 %v924, %v1822
        %v1829 = vmul.f32 %v925, %v1822
        %v1830 = vmul.f32 %v926, %v1822
        %v1831 = vmul.f32 %v927, %v1822
        %v1832 = vmul.f32 %v928, %v1822
        %v1833 = vmul.f32 %v929, %v1822
        %v1834 = vmul.f32 %v930, %v1822
        %v1835 = vmul.f32 %v931, %v1822
        %v1836 = vmul.f32 %v932, %v1822
        %v1837 = vmul.f32 %v933, %v1822
        %v1838 = vmul.f32 %v934, %v1822
        %v1839 = vmul.f32 %v935, %v1822
        %v1840 = vmul.f32 %v936, %v1822
        %v1841 = vmul.f32 %v937, %v1822
        %v1842 = vmul.f32 %v938, %v1822
        %v1843 = vmul.f32 %v939, %v1822
        %v1844 = vmul.f32 %v940, %v1822
        %v1845 = vmul.f32 %v941, %v1822
        %v1846 = vmul.f32 %v942, %v1822
        %v1871 = vrot.slane %v1823, 2
        %v1872 = vrot.slane %v1824, 2
        %v1873 = vsel %vm1206, %v1871, %v1872
        %v1874 = vrot.slane %v1825, 2
        %v1875 = vsel %vm1206, %v1872, %v1874
        %v1876 = vrot.slane %v1826, 2
        %v1877 = vrot.slane %v1827, 2
        %v1878 = vsel %vm1206, %v1876, %v1877
        %v1879 = vrot.slane %v1828, 2
        %v1880 = vsel %vm1206, %v1877, %v1879
        %v1881 = vrot.slane %v1829, 2
        %v1882 = vrot.slane %v1830, 2
        %v1883 = vsel %vm1206, %v1881, %v1882
        %v1884 = vrot.slane %v1831, 2
        %v1885 = vsel %vm1206, %v1882, %v1884
        %v1886 = vrot.slane %v1832, 2
        %v1887 = vrot.slane %v1833, 2
        %v1888 = vsel %vm1206, %v1886, %v1887
        %v1889 = vrot.slane %v1834, 2
        %v1890 = vsel %vm1206, %v1887, %v1889
        %v1891 = vrot.slane %v1835, 2
        %v1892 = vrot.slane %v1836, 2
        %v1893 = vsel %vm1206, %v1891, %v1892
        %v1894 = vrot.slane %v1837, 2
        %v1895 = vsel %vm1206, %v1892, %v1894
        %v1896 = vrot.slane %v1838, 2
        %v1897 = vrot.slane %v1839, 2
        %v1898 = vsel %vm1206, %v1896, %v1897
        %v1899 = vrot.slane %v1840, 2
        %v1900 = vsel %vm1206, %v1897, %v1899
        %v1901 = vrot.slane %v1841, 2
        %v1902 = vrot.slane %v1842, 2
        %v1903 = vsel %vm1206, %v1901, %v1902
        %v1904 = vrot.slane %v1843, 2
        %v1905 = vsel %vm1206, %v1902, %v1904
        %v1906 = vrot.slane %v1844, 2
        %v1907 = vrot.slane %v1845, 2
        %v1908 = vsel %vm1206, %v1906, %v1907
        %v1909 = vrot.slane %v1846, 2
        %v1910 = vsel %vm1206, %v1907, %v1909
        %v1935 = vadd.f32 %v1795, %v1873
        %v1936 = vadd.f32 %v1796, %v1875
        %v1937 = vadd.f32 %v1797, %v1874
        %v1938 = vadd.f32 %v1798, %v1878
        %v1939 = vadd.f32 %v1799, %v1880
        %v1940 = vadd.f32 %v1800, %v1879
        %v1941 = vadd.f32 %v1801, %v1883
        %v1942 = vadd.f32 %v1802, %v1885
        %v1943 = vadd.f32 %v1803, %v1884
        %v1944 = vadd.f32 %v1804, %v1888
        %v1945 = vadd.f32 %v1805, %v1890
        %v1946 = vadd.f32 %v1806, %v1889
        %v1947 = vadd.f32 %v1807, %v1893
        %v1948 = vadd.f32 %v1808, %v1895
        %v1949 = vadd.f32 %v1809, %v1894
        %v1950 = vadd.f32 %v1810, %v1898
        %v1951 = vadd.f32 %v1811, %v1900
        %v1952 = vadd.f32 %v1812, %v1899
        %v1953 = vadd.f32 %v1813, %v1903
        %v1954 = vadd.f32 %v1814, %v1905
        %v1955 = vadd.f32 %v1815, %v1904
        %v1956 = vadd.f32 %v1816, %v1908
        %v1957 = vadd.f32 %v1817, %v1910
        %v1958 = vadd.f32 %v1818, %v1909
        %vm1983 = vcmask 1044480
        %v1984 = vrot.slane %v1935, 3
        %v1985 = vrot.slane %v1936, 3
        %v1986 = vsel %vm1983, %v1984, %v1985
        %v1987 = vrot.slane %v1937, 3
        %v1988 = vsel %vm1983, %v1985, %v1987
        %v1989 = vrot.slane %v1938, 3
        %v1990 = vrot.slane %v1939, 3
        %v1991 = vsel %vm1983, %v1989, %v1990
        %v1992 = vrot.slane %v1940, 3
        %v1993 = vsel %vm1983, %v1990, %v1992
        %v1994 = vrot.slane %v1941, 3
        %v1995 = vrot.slane %v1942, 3
        %v1996 = vsel %vm1983, %v1994, %v1995
        %v1997 = vrot.slane %v1943, 3
        %v1998 = vsel %vm1983, %v1995, %v1997
        %v1999 = vrot.slane %v1944, 3
        %v2000 = vrot.slane %v1945, 3
        %v2001 = vsel %vm1983, %v1999, %v2000
        %v2002 = vrot.slane %v1946, 3
        %v2003 = vsel %vm1983, %v2000, %v2002
        %v2004 = vrot.slane %v1947, 3
        %v2005 = vrot.slane %v1948, 3
        %v2006 = vsel %vm1983, %v2004, %v2005
        %v2007 = vrot.slane %v1949, 3
        %v2008 = vsel %vm1983, %v2005, %v2007
        %v2009 = vrot.slane %v1950, 3
        %v2010 = vrot.slane %v1951, 3
        %v2011 = vsel %vm1983, %v2009, %v2010
        %v2012 = vrot.slane %v1952, 3
        %v2013 = vsel %vm1983, %v2010, %v2012
        %v2014 = vrot.slane %v1953, 3
        %v2015 = vrot.slane %v1954, 3
        %v2016 = vsel %vm1983, %v2014, %v2015
        %v2017 = vrot.slane %v1955, 3
        %v2018 = vsel %vm1983, %v2015, %v2017
        %v2019 = vrot.slane %v1956, 3
        %v2020 = vrot.slane %v1957, 3
        %v2021 = vsel %vm1983, %v2019, %v2020
        %v2022 = vrot.slane %v1958, 3
        %v2023 = vsel %vm1983, %v2020, %v2022
        %v2040 = vpack.c.bf16 %v1988, %v1986
        %v2041 = vpack.c.bf16 %v1993, %v1991
        %v2042 = vpack.c.bf16 %v1998, %v1996
        %v2043 = vpack.c.bf16 %v2003, %v2001
        %v2044 = vpack.c.bf16 %v2008, %v2006
        %v2045 = vpack.c.bf16 %v2013, %v2011
        %v2046 = vpack.c.bf16 %v2018, %v2016
        %v2047 = vpack.c.bf16 %v2023, %v2021
        %v2048 = vld [vmem:[#allocation8] sm:$0xf]
        %v2049 = vld [vmem:[#allocation8 + $0x4] sm:$0xf]
        %v2050 = vld [vmem:[#allocation8 + $0x8] sm:$0xf]
        %v2051 = vld [vmem:[#allocation8 + $0xc] sm:$0xf]
        %v2052 = vld [vmem:[#allocation8 + $0x10] sm:$0xf]
        %v2053 = vld [vmem:[#allocation8 + $0x14] sm:$0xf]
        %v2054 = vld [vmem:[#allocation8 + $0x18] sm:$0xf]
        %v2055 = vld [vmem:[#allocation8 + $0x1c] sm:$0xf]
        %v2056 = vld [vmem:[#allocation8 + $0x20] sm:$0xf]
        %v2057 = vld [vmem:[#allocation8 + $0x24] sm:$0xf]
        %v2058 = vld [vmem:[#allocation8 + $0x28] sm:$0xf]
        %v2059 = vld [vmem:[#allocation8 + $0x2c] sm:$0xf]
        %v2060 = vld [vmem:[#allocation8 + $0x30] sm:$0xf]
        %v2061 = vld [vmem:[#allocation8 + $0x34] sm:$0xf]
        %v2062 = vld [vmem:[#allocation8 + $0x38] sm:$0xf]
        %v2063 = vld [vmem:[#allocation8 + $0x3c] sm:$0xf]
        %v2064 = vlaneseq
        %v2065 = vshrl.u32 %v2064, 7
        %v2066 = vsub.s32 1, %v2065
        %v2067 = vrot.slane %v422, %v2066
        %v2084 = vunpack.c.l.b16 %v2048
        %v2085 = vunpack.c.l.b16 %v2049
        %v2086 = vunpack.c.l.b16 %v2050
        %v2087 = vunpack.c.l.b16 %v2051
        %v2088 = vunpack.c.l.b16 %v2052
        %v2089 = vunpack.c.l.b16 %v2053
        %v2090 = vunpack.c.l.b16 %v2054
        %v2091 = vunpack.c.l.b16 %v2055
        %v2092 = vunpack.c.l.b16 %v2056
        %v2093 = vunpack.c.l.b16 %v2057
        %v2094 = vunpack.c.l.b16 %v2058
        %v2095 = vunpack.c.l.b16 %v2059
        %v2096 = vunpack.c.l.b16 %v2060
        %v2097 = vunpack.c.l.b16 %v2061
        %v2098 = vunpack.c.l.b16 %v2062
        %v2099 = vunpack.c.l.b16 %v2063
        %v2100 = vpack.c.b16 %v2085, %v2084
        %v2101 = vpack.c.b16 %v2087, %v2086
        %v2102 = vpack.c.b16 %v2089, %v2088
        %v2103 = vpack.c.b16 %v2091, %v2090
        %v2104 = vpack.c.b16 %v2093, %v2092
        %v2105 = vpack.c.b16 %v2095, %v2094
        %v2106 = vpack.c.b16 %v2097, %v2096
        %v2107 = vpack.c.b16 %v2099, %v2098
        %2116 = vmatprep.subr.bf16.mxu0 0
        %2117 = vmatpush1.bf16.msra.mxu0 %v2100
        %2118 = vmatprep.subr.bf16.mxu0 0
        %2119 = vmatpush1.bf16.msra.mxu0 %v2101
        %2120 = vmatprep.subr.bf16.mxu0 0
        %2121 = vmatpush1.bf16.msra.mxu0 %v2102
        %2122 = vmatprep.subr.bf16.mxu0 0
        %2123 = vmatpush1.bf16.msra.mxu0 %v2103
        %2124 = vmatprep.subr.bf16.mxu0 0
        %2125 = vmatpush1.bf16.msra.mxu0 %v2104
        %2126 = vmatprep.subr.bf16.mxu0 0
        %2127 = vmatpush1.bf16.msra.mxu0 %v2105
        %2128 = vmatprep.subr.bf16.mxu0 0
        %2129 = vmatpush1.bf16.msra.mxu0 %v2106
        %2130 = vmatprep.subr.bf16.mxu0 0
        %2131 = vmatpush1.bf16.msra.mxu0 %v2107
        %2132 = vmatprep.subr.bf16.mxu0 0
        %2133 = vmatpush1.bf16.msra.mxu0 0
        %2134 = vmatprep.subr.bf16.mxu0 0
        %2135 = vmatpush1.bf16.msra.mxu0 0
        %2136 = vmatprep.subr.bf16.mxu0 0
        %2137 = vmatpush1.bf16.msra.mxu0 0
        %2138 = vmatprep.subr.bf16.mxu0 0
        %2139 = vmatpush1.bf16.msra.mxu0 0
        %2140 = vmatprep.subr.bf16.mxu0 0
        %2141 = vmatpush1.bf16.msra.mxu0 0
        %2142 = vmatprep.subr.bf16.mxu0 0
        %2143 = vmatpush1.bf16.msra.mxu0 0
        %2144 = vmatprep.subr.bf16.mxu0 0
        %2145 = vmatpush1.bf16.msra.mxu0 0
        %2146 = vmatprep.subr.bf16.mxu0 0
        %2147 = vmatpush1.bf16.msra.mxu0 0
        %2148 = vmatprep.mubr.bf16.mxu0 0
        %2149 = vmatmul.mubr.bf16.gmra.mrb[0].mxu0 %v2040
        %v2150 = vpop.f32.mrb[0].mxu0
        %v2151 = vadd.f32 %v2067, %v2150
        %v2152 = vpop.f32.mrb[0].mxu0
        %v2153 = vpop.f32.mrb[0].mxu0
        %v2154 = vadd.f32 %v2067, %v2153
        %v2155 = vpop.f32.mrb[0].mxu0
        %2156 = vmatprep.mubr.bf16.mxu0 0
        %2157 = vmatmul.mubr.bf16.gmra.mrb[0].mxu0 %v2041
        %v2158 = vpop.f32.mrb[0].mxu0
        %v2159 = vadd.f32 %v2067, %v2158
        %v2160 = vpop.f32.mrb[0].mxu0
        %v2161 = vpop.f32.mrb[0].mxu0
        %v2162 = vadd.f32 %v2067, %v2161
        %v2163 = vpop.f32.mrb[0].mxu0
        %2164 = vmatprep.mubr.bf16.mxu0 0
        %2165 = vmatmul.mubr.bf16.gmra.mrb[0].mxu0 %v2042
        %v2166 = vpop.f32.mrb[0].mxu0
        %v2167 = vadd.f32 %v2067, %v2166
        %v2168 = vpop.f32.mrb[0].mxu0
        %v2169 = vpop.f32.mrb[0].mxu0
        %v2170 = vadd.f32 %v2067, %v2169
        %v2171 = vpop.f32.mrb[0].mxu0
        %2172 = vmatprep.mubr.bf16.mxu0 0
        %2173 = vmatmul.mubr.bf16.gmra.mrb[0].mxu0 %v2043
        %v2174 = vpop.f32.mrb[0].mxu0
        %v2175 = vadd.f32 %v2067, %v2174
        %v2176 = vpop.f32.mrb[0].mxu0
        %v2177 = vpop.f32.mrb[0].mxu0
        %v2178 = vadd.f32 %v2067, %v2177
        %v2179 = vpop.f32.mrb[0].mxu0
        %2180 = vmatprep.mubr.bf16.mxu0 0
        %2181 = vmatmul.mubr.bf16.gmra.mrb[0].mxu0 %v2044
        %v2182 = vpop.f32.mrb[0].mxu0
        %v2183 = vadd.f32 %v2067, %v2182
        %v2184 = vpop.f32.mrb[0].mxu0
        %v2185 = vpop.f32.mrb[0].mxu0
        %v2186 = vadd.f32 %v2067, %v2185
        %v2187 = vpop.f32.mrb[0].mxu0
        %2188 = vmatprep.mubr.bf16.mxu0 0
        %2189 = vmatmul.mubr.bf16.gmra.mrb[0].mxu0 %v2045
        %v2190 = vpop.f32.mrb[0].mxu0
        %v2191 = vadd.f32 %v2067, %v2190
        %v2192 = vpop.f32.mrb[0].mxu0
        %v2193 = vpop.f32.mrb[0].mxu0
        %v2194 = vadd.f32 %v2067, %v2193
        %v2195 = vpop.f32.mrb[0].mxu0
        %2196 = vmatprep.mubr.bf16.mxu0 0
        %2197 = vmatmul.mubr.bf16.gmra.mrb[0].mxu0 %v2046
        %v2198 = vpop.f32.mrb[0].mxu0
        %v2199 = vadd.f32 %v2067, %v2198
        %v2200 = vpop.f32.mrb[0].mxu0
        %v2201 = vpop.f32.mrb[0].mxu0
        %v2202 = vadd.f32 %v2067, %v2201
        %v2203 = vpop.f32.mrb[0].mxu0
        %2204 = vmatprep.mubr.bf16.mxu0 0
        %2205 = vmatmul.mubr.bf16.gmra.mrb[0].mxu0 %v2047
        %v2206 = vpop.f32.mrb[0].mxu0
        %v2207 = vadd.f32 %v2067, %v2206
        %v2208 = vpop.f32.mrb[0].mxu0
        %v2209 = vpop.f32.mrb[0].mxu0
        %v2210 = vadd.f32 %v2067, %v2209
        %v2211 = vpop.f32.mrb[0].mxu0
        %2212 = vdwg.mxu0
        %v2213 = vmax.f32 %v2151, 0.0
        %v2214 = vmax.f32 %v2154, 0.0
        %v2215 = vmax.f32 %v2159, 0.0
        %v2216 = vmax.f32 %v2162, 0.0
        %v2217 = vmax.f32 %v2167, 0.0
        %v2218 = vmax.f32 %v2170, 0.0
        %v2219 = vmax.f32 %v2175, 0.0
        %v2220 = vmax.f32 %v2178, 0.0
        %v2221 = vmax.f32 %v2183, 0.0
        %v2222 = vmax.f32 %v2186, 0.0
        %v2223 = vmax.f32 %v2191, 0.0
        %v2224 = vmax.f32 %v2194, 0.0
        %v2225 = vmax.f32 %v2199, 0.0
        %v2226 = vmax.f32 %v2202, 0.0
        %v2227 = vmax.f32 %v2207, 0.0
        %v2228 = vmax.f32 %v2210, 0.0
        %v2229 = vld [vmem:[#allocation3] sm:$0xff]
        %v2230 = vld [vmem:[#allocation3 + $0x8] sm:$0xff]
        %v2231 = vld [vmem:[#allocation3 + $0x10] sm:$0xff]
        %v2232 = vld [vmem:[#allocation3 + $0x18] sm:$0xff]
        %v2233 = vld [vmem:[#allocation3 + $0x20] sm:$0xff]
        %v2234 = vld [vmem:[#allocation3 + $0x28] sm:$0xff]
        %v2235 = vld [vmem:[#allocation3 + $0x30] sm:$0xff]
        %v2236 = vld [vmem:[#allocation3 + $0x38] sm:$0xff]
        %v2237 = vld [vmem:[#allocation3 + $0x40] sm:$0xff]
        %v2238 = vld [vmem:[#allocation3 + $0x48] sm:$0xff]
        %v2239 = vld [vmem:[#allocation3 + $0x50] sm:$0xff]
        %v2240 = vld [vmem:[#allocation3 + $0x58] sm:$0xff]
        %v2241 = vld [vmem:[#allocation3 + $0x60] sm:$0xff]
        %v2242 = vld [vmem:[#allocation3 + $0x68] sm:$0xff]
        %v2243 = vld [vmem:[#allocation3 + $0x70] sm:$0xff]
        %v2244 = vld [vmem:[#allocation3 + $0x78] sm:$0xff]
        %v2245 = vpack.c.bf16 %v2214, %v2213
        %v2246 = vpack.c.bf16 %v2216, %v2215
        %v2247 = vpack.c.bf16 %v2218, %v2217
        %v2248 = vpack.c.bf16 %v2220, %v2219
        %v2249 = vpack.c.bf16 %v2222, %v2221
        %v2250 = vpack.c.bf16 %v2224, %v2223
        %v2251 = vpack.c.bf16 %v2226, %v2225
        %v2252 = vpack.c.bf16 %v2228, %v2227
        %s2253 = scalar_lea.vmem [#allocation10], 64
        %v2254 = vld [vmem:[%s2253] sm:$0xf]
        %v2255 = vld [vmem:[%s2253 + $0x4] sm:$0xf]
        %v2256 = vld [vmem:[%s2253 + $0x8] sm:$0xf]
        %v2257 = vld [vmem:[%s2253 + $0xc] sm:$0xf]
        %v2258 = vld [vmem:[%s2253 + $0x10] sm:$0xf]
        %v2259 = vld [vmem:[%s2253 + $0x14] sm:$0xf]
        %v2260 = vld [vmem:[%s2253 + $0x18] sm:$0xf]
        %v2261 = vld [vmem:[%s2253 + $0x1c] sm:$0xf]
        %v2262 = vld [vmem:[%s2253 + $0x20] sm:$0xf]
        %v2263 = vld [vmem:[%s2253 + $0x24] sm:$0xf]
        %v2264 = vld [vmem:[%s2253 + $0x28] sm:$0xf]
        %v2265 = vld [vmem:[%s2253 + $0x2c] sm:$0xf]
        %v2266 = vld [vmem:[%s2253 + $0x30] sm:$0xf]
        %v2267 = vld [vmem:[%s2253 + $0x34] sm:$0xf]
        %v2268 = vld [vmem:[%s2253 + $0x38] sm:$0xf]
        %v2269 = vld [vmem:[%s2253 + $0x3c] sm:$0xf]
        %v2286 = vunpack.c.l.b16 %v2254
        %v2287 = vunpack.c.l.b16 %v2255
        %v2288 = vunpack.c.l.b16 %v2256
        %v2289 = vunpack.c.l.b16 %v2257
        %v2290 = vunpack.c.l.b16 %v2258
        %v2291 = vunpack.c.l.b16 %v2259
        %v2292 = vunpack.c.l.b16 %v2260
        %v2293 = vunpack.c.l.b16 %v2261
        %v2294 = vunpack.c.l.b16 %v2262
        %v2295 = vunpack.c.l.b16 %v2263
        %v2296 = vunpack.c.l.b16 %v2264
        %v2297 = vunpack.c.l.b16 %v2265
        %v2298 = vunpack.c.l.b16 %v2266
        %v2299 = vunpack.c.l.b16 %v2267
        %v2300 = vunpack.c.l.b16 %v2268
        %v2301 = vunpack.c.l.b16 %v2269
        %v2302 = vpack.c.b16 %v2287, %v2286
        %v2303 = vpack.c.b16 %v2289, %v2288
        %v2304 = vpack.c.b16 %v2291, %v2290
        %v2305 = vpack.c.b16 %v2293, %v2292
        %v2306 = vpack.c.b16 %v2295, %v2294
        %v2307 = vpack.c.b16 %v2297, %v2296
        %v2308 = vpack.c.b16 %v2299, %v2298
        %v2309 = vpack.c.b16 %v2301, %v2300
        %2318 = vmatprep.subr.bf16.mxu0 0
        %2319 = vmatpush1.bf16.msra.mxu0 %v2302
        %2320 = vmatprep.subr.bf16.mxu0 0
        %2321 = vmatpush1.bf16.msra.mxu0 %v2303
        %2322 = vmatprep.subr.bf16.mxu0 0
        %2323 = vmatpush1.bf16.msra.mxu0 %v2304
        %2324 = vmatprep.subr.bf16.mxu0 0
        %2325 = vmatpush1.bf16.msra.mxu0 %v2305
        %2326 = vmatprep.subr.bf16.mxu0 0
        %2327 = vmatpush1.bf16.msra.mxu0 %v2306
        %2328 = vmatprep.subr.bf16.mxu0 0
        %2329 = vmatpush1.bf16.msra.mxu0 %v2307
        %2330 = vmatprep.subr.bf16.mxu0 0
        %2331 = vmatpush1.bf16.msra.mxu0 %v2308
        %2332 = vmatprep.subr.bf16.mxu0 0
        %2333 = vmatpush1.bf16.msra.mxu0 %v2309
        %2334 = vmatprep.subr.bf16.mxu0 0
        %2335 = vmatpush1.bf16.msra.mxu0 0
        %2336 = vmatprep.subr.bf16.mxu0 0
        %2337 = vmatpush1.bf16.msra.mxu0 0
        %2338 = vmatprep.subr.bf16.mxu0 0
        %2339 = vmatpush1.bf16.msra.mxu0 0
        %2340 = vmatprep.subr.bf16.mxu0 0
        %2341 = vmatpush1.bf16.msra.mxu0 0
        %2342 = vmatprep.subr.bf16.mxu0 0
        %2343 = vmatpush1.bf16.msra.mxu0 0
        %2344 = vmatprep.subr.bf16.mxu0 0
        %2345 = vmatpush1.bf16.msra.mxu0 0
        %2346 = vmatprep.subr.bf16.mxu0 0
        %2347 = vmatpush1.bf16.msra.mxu0 0
        %2348 = vmatprep.subr.bf16.mxu0 0
        %2349 = vmatpush1.bf16.msra.mxu0 0
        %2350 = vmatprep.mubr.bf16.mxu0 0
        %2351 = vmatmul.mubr.bf16.gmra.mrb[0].mxu0 %v2245
        %v2352 = vpop.f32.mrb[0].mxu0
        %v2353 = vadd.f32 0.0, %v2352
        %v2354 = vpop.f32.mrb[0].mxu0
        %v2355 = vpop.f32.mrb[0].mxu0
        %v2356 = vadd.f32 0.0, %v2355
        %v2357 = vpop.f32.mrb[0].mxu0
        %2358 = vmatprep.mubr.bf16.mxu0 0
        %2359 = vmatmul.mubr.bf16.gmra.mrb[0].mxu0 %v2246
        %v2360 = vpop.f32.mrb[0].mxu0
        %v2361 = vadd.f32 0.0, %v2360
        %v2362 = vpop.f32.mrb[0].mxu0
        %v2363 = vpop.f32.mrb[0].mxu0
        %v2364 = vadd.f32 0.0, %v2363
        %v2365 = vpop.f32.mrb[0].mxu0
        %2366 = vmatprep.mubr.bf16.mxu0 0
        %2367 = vmatmul.mubr.bf16.gmra.mrb[0].mxu0 %v2247
        %v2368 = vpop.f32.mrb[0].mxu0
        %v2369 = vadd.f32 0.0, %v2368
        %v2370 = vpop.f32.mrb[0].mxu0
        %v2371 = vpop.f32.mrb[0].mxu0
        %v2372 = vadd.f32 0.0, %v2371
        %v2373 = vpop.f32.mrb[0].mxu0
        %2374 = vmatprep.mubr.bf16.mxu0 0
        %2375 = vmatmul.mubr.bf16.gmra.mrb[0].mxu0 %v2248
        %v2376 = vpop.f32.mrb[0].mxu0
        %v2377 = vadd.f32 0.0, %v2376
        %v2378 = vpop.f32.mrb[0].mxu0
        %v2379 = vpop.f32.mrb[0].mxu0
        %v2380 = vadd.f32 0.0, %v2379
        %v2381 = vpop.f32.mrb[0].mxu0
        %2382 = vmatprep.mubr.bf16.mxu0 0
        %2383 = vmatmul.mubr.bf16.gmra.mrb[0].mxu0 %v2249
        %v2384 = vpop.f32.mrb[0].mxu0
        %v2385 = vadd.f32 0.0, %v2384
        %v2386 = vpop.f32.mrb[0].mxu0
        %v2387 = vpop.f32.mrb[0].mxu0
        %v2388 = vadd.f32 0.0, %v2387
        %v2389 = vpop.f32.mrb[0].mxu0
        %2390 = vmatprep.mubr.bf16.mxu0 0
        %2391 = vmatmul.mubr.bf16.gmra.mrb[0].mxu0 %v2250
        %v2392 = vpop.f32.mrb[0].mxu0
        %v2393 = vadd.f32 0.0, %v2392
        %v2394 = vpop.f32.mrb[0].mxu0
        %v2395 = vpop.f32.mrb[0].mxu0
        %v2396 = vadd.f32 0.0, %v2395
        %v2397 = vpop.f32.mrb[0].mxu0
        %2398 = vmatprep.mubr.bf16.mxu0 0
        %2399 = vmatmul.mubr.bf16.gmra.mrb[0].mxu0 %v2251
        %v2400 = vpop.f32.mrb[0].mxu0
        %v2401 = vadd.f32 0.0, %v2400
        %v2402 = vpop.f32.mrb[0].mxu0
        %v2403 = vpop.f32.mrb[0].mxu0
        %v2404 = vadd.f32 0.0, %v2403
        %v2405 = vpop.f32.mrb[0].mxu0
        %2406 = vmatprep.mubr.bf16.mxu0 0
        %2407 = vmatmul.mubr.bf16.gmra.mrb[0].mxu0 %v2252
        %v2408 = vpop.f32.mrb[0].mxu0
        %v2409 = vadd.f32 0.0, %v2408
        %v2410 = vpop.f32.mrb[0].mxu0
        %v2411 = vpop.f32.mrb[0].mxu0
        %v2412 = vadd.f32 0.0, %v2411
        %v2413 = vpop.f32.mrb[0].mxu0
        %2414 = vdwg.mxu0
        %v2415 = vadd.f32 %v2229, %v2353
        %v2416 = vadd.f32 %v2230, %v2356
        %v2417 = vadd.f32 %v2231, %v2361
        %v2418 = vadd.f32 %v2232, %v2364
        %v2419 = vadd.f32 %v2233, %v2369
        %v2420 = vadd.f32 %v2234, %v2372
        %v2421 = vadd.f32 %v2235, %v2377
        %v2422 = vadd.f32 %v2236, %v2380
        %v2423 = vadd.f32 %v2237, %v2385
        %v2424 = vadd.f32 %v2238, %v2388
        %v2425 = vadd.f32 %v2239, %v2393
        %v2426 = vadd.f32 %v2240, %v2396
        %v2427 = vadd.f32 %v2241, %v2401
        %v2428 = vadd.f32 %v2242, %v2404
        %v2429 = vadd.f32 %v2243, %v2409
        %v2430 = vadd.f32 %v2244, %v2412
        %2431 = vst [vmem:[#allocation3] sm:$0xff] %v2415
        %2432 = vst [vmem:[#allocation3 + $0x8] sm:$0xff] %v2416
        %2433 = vst [vmem:[#allocation3 + $0x10] sm:$0xff] %v2417
        %2434 = vst [vmem:[#allocation3 + $0x18] sm:$0xff] %v2418
        %2435 = vst [vmem:[#allocation3 + $0x20] sm:$0xff] %v2419
        %2436 = vst [vmem:[#allocation3 + $0x28] sm:$0xff] %v2420
        %2437 = vst [vmem:[#allocation3 + $0x30] sm:$0xff] %v2421
        %2438 = vst [vmem:[#allocation3 + $0x38] sm:$0xff] %v2422
        %2439 = vst [vmem:[#allocation3 + $0x40] sm:$0xff] %v2423
        %2440 = vst [vmem:[#allocation3 + $0x48] sm:$0xff] %v2424
        %2441 = vst [vmem:[#allocation3 + $0x50] sm:$0xff] %v2425
        %2442 = vst [vmem:[#allocation3 + $0x58] sm:$0xff] %v2426
        %2443 = vst [vmem:[#allocation3 + $0x60] sm:$0xff] %v2427
        %2444 = vst [vmem:[#allocation3 + $0x68] sm:$0xff] %v2428
        %2445 = vst [vmem:[#allocation3 + $0x70] sm:$0xff] %v2429
        %2446 = vst [vmem:[#allocation3 + $0x78] sm:$0xff] %v2430
        %v2447 = vlaneseq
        %v2448 = vshrl.u32 %v2447, 7
        %v2449 = vsub.s32 0, %v2448
        %v2450 = vrot.slane %v904, %v2449
        %v2451 = vmul.f32 %v949, %v2450
        %v2452 = vmul.f32 %v950, %v2450
        %v2453 = vmul.f32 %v951, %v2450
        %v2454 = vmul.f32 %v913, %v2450
        %v2455 = vmul.f32 %v914, %v2450
        %v2456 = vmul.f32 %v915, %v2450
        %v2457 = vmul.f32 %v916, %v2450
        %v2458 = vmul.f32 %v917, %v2450
        %v2459 = vmul.f32 %v918, %v2450
        %v2460 = vmul.f32 %v919, %v2450
        %v2461 = vmul.f32 %v920, %v2450
        %v2462 = vmul.f32 %v921, %v2450
        %v2463 = vmul.f32 %v922, %v2450
        %v2464 = vmul.f32 %v923, %v2450
        %v2465 = vmul.f32 %v924, %v2450
        %v2466 = vmul.f32 %v925, %v2450
        %v2467 = vmul.f32 %v926, %v2450
        %v2468 = vmul.f32 %v927, %v2450
        %v2469 = vmul.f32 %v928, %v2450
        %v2470 = vmul.f32 %v929, %v2450
        %v2471 = vmul.f32 %v930, %v2450
        %v2472 = vmul.f32 %v931, %v2450
        %v2473 = vmul.f32 %v932, %v2450
        %v2474 = vmul.f32 %v933, %v2450
        %v2475 = vadd.f32 %v2451, 0.0
        %v2476 = vadd.f32 %v2452, 0.0
        %v2477 = vadd.f32 %v2453, 0.0
        %v2478 = vadd.f32 %v2454, 0.0
        %v2479 = vadd.f32 %v2455, 0.0
        %v2480 = vadd.f32 %v2456, 0.0
        %v2481 = vadd.f32 %v2457, 0.0
        %v2482 = vadd.f32 %v2458, 0.0
        %v2483 = vadd.f32 %v2459, 0.0
        %v2484 = vadd.f32 %v2460, 0.0
        %v2485 = vadd.f32 %v2461, 0.0
        %v2486 = vadd.f32 %v2462, 0.0
        %v2487 = vadd.f32 %v2463, 0.0
        %v2488 = vadd.f32 %v2464, 0.0
        %v2489 = vadd.f32 %v2465, 0.0
        %v2490 = vadd.f32 %v2466, 0.0
        %v2491 = vadd.f32 %v2467, 0.0
        %v2492 = vadd.f32 %v2468, 0.0
        %v2493 = vadd.f32 %v2469, 0.0
        %v2494 = vadd.f32 %v2470, 0.0
        %v2495 = vadd.f32 %v2471, 0.0
        %v2496 = vadd.f32 %v2472, 0.0
        %v2497 = vadd.f32 %v2473, 0.0
        %v2498 = vadd.f32 %v2474, 0.0
        %v2499 = vlaneseq
        %v2500 = vshrl.u32 %v2499, 7
        %v2501 = vsub.s32 1, %v2500
        %v2502 = vrot.slane %v904, %v2501
        %v2503 = vmul.f32 %v949, %v2502
        %v2504 = vmul.f32 %v950, %v2502
        %v2505 = vmul.f32 %v951, %v2502
        %v2506 = vmul.f32 %v913, %v2502
        %v2507 = vmul.f32 %v914, %v2502
        %v2508 = vmul.f32 %v915, %v2502
        %v2509 = vmul.f32 %v916, %v2502
        %v2510 = vmul.f32 %v917, %v2502
        %v2511 = vmul.f32 %v918, %v2502
        %v2512 = vmul.f32 %v919, %v2502
        %v2513 = vmul.f32 %v920, %v2502
        %v2514 = vmul.f32 %v921, %v2502
        %v2515 = vmul.f32 %v922, %v2502
        %v2516 = vmul.f32 %v923, %v2502
        %v2517 = vmul.f32 %v924, %v2502
        %v2518 = vmul.f32 %v925, %v2502
        %v2519 = vmul.f32 %v926, %v2502
        %v2520 = vmul.f32 %v927, %v2502
        %v2521 = vmul.f32 %v928, %v2502
        %v2522 = vmul.f32 %v929, %v2502
        %v2523 = vmul.f32 %v930, %v2502
        %v2524 = vmul.f32 %v931, %v2502
        %v2525 = vmul.f32 %v932, %v2502
        %v2526 = vmul.f32 %v933, %v2502
        %v2551 = vrot.slane %v2503, 2
        %v2552 = vrot.slane %v2504, 2
        %v2553 = vsel %vm1206, %v2551, %v2552
        %v2554 = vrot.slane %v2505, 2
        %v2555 = vsel %vm1206, %v2552, %v2554
        %v2556 = vrot.slane %v2506, 2
        %v2557 = vrot.slane %v2507, 2
        %v2558 = vsel %vm1206, %v2556, %v2557
        %v2559 = vrot.slane %v2508, 2
        %v2560 = vsel %vm1206, %v2557, %v2559
        %v2561 = vrot.slane %v2509, 2
        %v2562 = vrot.slane %v2510, 2
        %v2563 = vsel %vm1206, %v2561, %v2562
        %v2564 = vrot.slane %v2511, 2
        %v2565 = vsel %vm1206, %v2562, %v2564
        %v2566 = vrot.slane %v2512, 2
        %v2567 = vrot.slane %v2513, 2
        %v2568 = vsel %vm1206, %v2566, %v2567
        %v2569 = vrot.slane %v2514, 2
        %v2570 = vsel %vm1206, %v2567, %v2569
        %v2571 = vrot.slane %v2515, 2
        %v2572 = vrot.slane %v2516, 2
        %v2573 = vsel %vm1206, %v2571, %v2572
        %v2574 = vrot.slane %v2517, 2
        %v2575 = vsel %vm1206, %v2572, %v2574
        %v2576 = vrot.slane %v2518, 2
        %v2577 = vrot.slane %v2519, 2
        %v2578 = vsel %vm1206, %v2576, %v2577
        %v2579 = vrot.slane %v2520, 2
        %v2580 = vsel %vm1206, %v2577, %v2579
        %v2581 = vrot.slane %v2521, 2
        %v2582 = vrot.slane %v2522, 2
        %v2583 = vsel %vm1206, %v2581, %v2582
        %v2584 = vrot.slane %v2523, 2
        %v2585 = vsel %vm1206, %v2582, %v2584
        %v2586 = vrot.slane %v2524, 2
        %v2587 = vrot.slane %v2525, 2
        %v2588 = vsel %vm1206, %v2586, %v2587
        %v2589 = vrot.slane %v2526, 2
        %v2590 = vsel %vm1206, %v2587, %v2589
        %v2615 = vadd.f32 %v2475, %v2553
        %v2616 = vadd.f32 %v2476, %v2555
        %v2617 = vadd.f32 %v2477, %v2554
        %v2618 = vadd.f32 %v2478, %v2558
        %v2619 = vadd.f32 %v2479, %v2560
        %v2620 = vadd.f32 %v2480, %v2559
        %v2621 = vadd.f32 %v2481, %v2563
        %v2622 = vadd.f32 %v2482, %v2565
        %v2623 = vadd.f32 %v2483, %v2564
        %v2624 = vadd.f32 %v2484, %v2568
        %v2625 = vadd.f32 %v2485, %v2570
        %v2626 = vadd.f32 %v2486, %v2569
        %v2627 = vadd.f32 %v2487, %v2573
        %v2628 = vadd.f32 %v2488, %v2575
        %v2629 = vadd.f32 %v2489, %v2574
        %v2630 = vadd.f32 %v2490, %v2578
        %v2631 = vadd.f32 %v2491, %v2580
        %v2632 = vadd.f32 %v2492, %v2579
        %v2633 = vadd.f32 %v2493, %v2583
        %v2634 = vadd.f32 %v2494, %v2585
        %v2635 = vadd.f32 %v2495, %v2584
        %v2636 = vadd.f32 %v2496, %v2588
        %v2637 = vadd.f32 %v2497, %v2590
        %v2638 = vadd.f32 %v2498, %v2589
        %v2639 = vlaneseq
        %v2640 = vshrl.u32 %v2639, 7
        %v2641 = vsub.s32 2, %v2640
        %v2642 = vrot.slane %v904, %v2641
        %v2643 = vmul.f32 %v949, %v2642
        %v2644 = vmul.f32 %v950, %v2642
        %v2645 = vmul.f32 %v951, %v2642
        %v2646 = vmul.f32 %v913, %v2642
        %v2647 = vmul.f32 %v914, %v2642
        %v2648 = vmul.f32 %v915, %v2642
        %v2649 = vmul.f32 %v916, %v2642
        %v2650 = vmul.f32 %v917, %v2642
        %v2651 = vmul.f32 %v918, %v2642
        %v2652 = vmul.f32 %v919, %v2642
        %v2653 = vmul.f32 %v920, %v2642
        %v2654 = vmul.f32 %v921, %v2642
        %v2655 = vmul.f32 %v922, %v2642
        %v2656 = vmul.f32 %v923, %v2642
        %v2657 = vmul.f32 %v924, %v2642
        %v2658 = vmul.f32 %v925, %v2642
        %v2659 = vmul.f32 %v926, %v2642
        %v2660 = vmul.f32 %v927, %v2642
        %v2661 = vmul.f32 %v928, %v2642
        %v2662 = vmul.f32 %v929, %v2642
        %v2663 = vmul.f32 %v930, %v2642
        %v2664 = vmul.f32 %v931, %v2642
        %v2665 = vmul.f32 %v932, %v2642
        %v2666 = vmul.f32 %v933, %v2642
        %vm2691 = vcmask 1043456
        %v2692 = vrot.slane %v2643, 4
        %v2693 = vrot.slane %v2644, 4
        %v2694 = vsel %vm2691, %v2692, %v2693
        %v2695 = vrot.slane %v2645, 4
        %v2696 = vsel %vm2691, %v2693, %v2695
        %v2697 = vrot.slane %v2646, 4
        %v2698 = vrot.slane %v2647, 4
        %v2699 = vsel %vm2691, %v2697, %v2698
        %v2700 = vrot.slane %v2648, 4
        %v2701 = vsel %vm2691, %v2698, %v2700
        %v2702 = vrot.slane %v2649, 4
        %v2703 = vrot.slane %v2650, 4
        %v2704 = vsel %vm2691, %v2702, %v2703
        %v2705 = vrot.slane %v2651, 4
        %v2706 = vsel %vm2691, %v2703, %v2705
        %v2707 = vrot.slane %v2652, 4
        %v2708 = vrot.slane %v2653, 4
        %v2709 = vsel %vm2691, %v2707, %v2708
        %v2710 = vrot.slane %v2654, 4
        %v2711 = vsel %vm2691, %v2708, %v2710
        %v2712 = vrot.slane %v2655, 4
        %v2713 = vrot.slane %v2656, 4
        %v2714 = vsel %vm2691, %v2712, %v2713
        %v2715 = vrot.slane %v2657, 4
        %v2716 = vsel %vm2691, %v2713, %v2715
        %v2717 = vrot.slane %v2658, 4
        %v2718 = vrot.slane %v2659, 4
        %v2719 = vsel %vm2691, %v2717, %v2718
        %v2720 = vrot.slane %v2660, 4
        %v2721 = vsel %vm2691, %v2718, %v2720
        %v2722 = vrot.slane %v2661, 4
        %v2723 = vrot.slane %v2662, 4
        %v2724 = vsel %vm2691, %v2722, %v2723
        %v2725 = vrot.slane %v2663, 4
        %v2726 = vsel %vm2691, %v2723, %v2725
        %v2727 = vrot.slane %v2664, 4
        %v2728 = vrot.slane %v2665, 4
        %v2729 = vsel %vm2691, %v2727, %v2728
        %v2730 = vrot.slane %v2666, 4
        %v2731 = vsel %vm2691, %v2728, %v2730
        %v2756 = vadd.f32 %v2615, %v2694
        %v2757 = vadd.f32 %v2616, %v2696
        %v2758 = vadd.f32 %v2617, %v2695
        %v2759 = vadd.f32 %v2618, %v2699
        %v2760 = vadd.f32 %v2619, %v2701
        %v2761 = vadd.f32 %v2620, %v2700
        %v2762 = vadd.f32 %v2621, %v2704
        %v2763 = vadd.f32 %v2622, %v2706
        %v2764 = vadd.f32 %v2623, %v2705
        %v2765 = vadd.f32 %v2624, %v2709
        %v2766 = vadd.f32 %v2625, %v2711
        %v2767 = vadd.f32 %v2626, %v2710
        %v2768 = vadd.f32 %v2627, %v2714
        %v2769 = vadd.f32 %v2628, %v2716
        %v2770 = vadd.f32 %v2629, %v2715
        %v2771 = vadd.f32 %v2630, %v2719
        %v2772 = vadd.f32 %v2631, %v2721
        %v2773 = vadd.f32 %v2632, %v2720
        %v2774 = vadd.f32 %v2633, %v2724
        %v2775 = vadd.f32 %v2634, %v2726
        %v2776 = vadd.f32 %v2635, %v2725
        %v2777 = vadd.f32 %v2636, %v2729
        %v2778 = vadd.f32 %v2637, %v2731
        %v2779 = vadd.f32 %v2638, %v2730
        %v2780 = vlaneseq
        %v2781 = vshrl.u32 %v2780, 7
        %v2782 = vsub.s32 0, %v2781
        %v2783 = vrot.slane %v905, %v2782
        %v2784 = vmul.f32 %v916, %v2783
        %v2785 = vmul.f32 %v917, %v2783
        %v2786 = vmul.f32 %v918, %v2783
        %v2787 = vmul.f32 %v919, %v2783
        %v2788 = vmul.f32 %v920, %v2783
        %v2789 = vmul.f32 %v921, %v2783
        %v2790 = vmul.f32 %v922, %v2783
        %v2791 = vmul.f32 %v923, %v2783
        %v2792 = vmul.f32 %v924, %v2783
        %v2793 = vmul.f32 %v925, %v2783
        %v2794 = vmul.f32 %v926, %v2783
        %v2795 = vmul.f32 %v927, %v2783
        %v2796 = vmul.f32 %v928, %v2783
        %v2797 = vmul.f32 %v929, %v2783
        %v2798 = vmul.f32 %v930, %v2783
        %v2799 = vmul.f32 %v931, %v2783
        %v2800 = vmul.f32 %v932, %v2783
        %v2801 = vmul.f32 %v933, %v2783
        %v2802 = vmul.f32 %v934, %v2783
        %v2803 = vmul.f32 %v935, %v2783
        %v2804 = vmul.f32 %v936, %v2783
        %v2805 = vmul.f32 %v937, %v2783
        %v2806 = vmul.f32 %v938, %v2783
        %v2807 = vmul.f32 %v939, %v2783
        %v2808 = vadd.f32 %v2756, %v2784
        %v2809 = vadd.f32 %v2757, %v2785
        %v2810 = vadd.f32 %v2758, %v2786
        %v2811 = vadd.f32 %v2759, %v2787
        %v2812 = vadd.f32 %v2760, %v2788
        %v2813 = vadd.f32 %v2761, %v2789
        %v2814 = vadd.f32 %v2762, %v2790
        %v2815 = vadd.f32 %v2763, %v2791
        %v2816 = vadd.f32 %v2764, %v2792
        %v2817 = vadd.f32 %v2765, %v2793
        %v2818 = vadd.f32 %v2766, %v2794
        %v2819 = vadd.f32 %v2767, %v2795
        %v2820 = vadd.f32 %v2768, %v2796
        %v2821 = vadd.f32 %v2769, %v2797
        %v2822 = vadd.f32 %v2770, %v2798
        %v2823 = vadd.f32 %v2771, %v2799
        %v2824 = vadd.f32 %v2772, %v2800
        %v2825 = vadd.f32 %v2773, %v2801
        %v2826 = vadd.f32 %v2774, %v2802
        %v2827 = vadd.f32 %v2775, %v2803
        %v2828 = vadd.f32 %v2776, %v2804
        %v2829 = vadd.f32 %v2777, %v2805
        %v2830 = vadd.f32 %v2778, %v2806
        %v2831 = vadd.f32 %v2779, %v2807
        %v2832 = vlaneseq
        %v2833 = vshrl.u32 %v2832, 7
        %v2834 = vsub.s32 1, %v2833
        %v2835 = vrot.slane %v905, %v2834
        %v2836 = vmul.f32 %v916, %v2835
        %v2837 = vmul.f32 %v917, %v2835
        %v2838 = vmul.f32 %v918, %v2835
        %v2839 = vmul.f32 %v919, %v2835
        %v2840 = vmul.f32 %v920, %v2835
        %v2841 = vmul.f32 %v921, %v2835
        %v2842 = vmul.f32 %v922, %v2835
        %v2843 = vmul.f32 %v923, %v2835
        %v2844 = vmul.f32 %v924, %v2835
        %v2845 = vmul.f32 %v925, %v2835
        %v2846 = vmul.f32 %v926, %v2835
        %v2847 = vmul.f32 %v927, %v2835
        %v2848 = vmul.f32 %v928, %v2835
        %v2849 = vmul.f32 %v929, %v2835
        %v2850 = vmul.f32 %v930, %v2835
        %v2851 = vmul.f32 %v931, %v2835
        %v2852 = vmul.f32 %v932, %v2835
        %v2853 = vmul.f32 %v933, %v2835
        %v2854 = vmul.f32 %v934, %v2835
        %v2855 = vmul.f32 %v935, %v2835
        %v2856 = vmul.f32 %v936, %v2835
        %v2857 = vmul.f32 %v937, %v2835
        %v2858 = vmul.f32 %v938, %v2835
        %v2859 = vmul.f32 %v939, %v2835
        %v2884 = vrot.slane %v2836, 2
        %v2885 = vrot.slane %v2837, 2
        %v2886 = vsel %vm1206, %v2884, %v2885
        %v2887 = vrot.slane %v2838, 2
        %v2888 = vsel %vm1206, %v2885, %v2887
        %v2889 = vrot.slane %v2839, 2
        %v2890 = vrot.slane %v2840, 2
        %v2891 = vsel %vm1206, %v2889, %v2890
        %v2892 = vrot.slane %v2841, 2
        %v2893 = vsel %vm1206, %v2890, %v2892
        %v2894 = vrot.slane %v2842, 2
        %v2895 = vrot.slane %v2843, 2
        %v2896 = vsel %vm1206, %v2894, %v2895
        %v2897 = vrot.slane %v2844, 2
        %v2898 = vsel %vm1206, %v2895, %v2897
        %v2899 = vrot.slane %v2845, 2
        %v2900 = vrot.slane %v2846, 2
        %v2901 = vsel %vm1206, %v2899, %v2900
        %v2902 = vrot.slane %v2847, 2
        %v2903 = vsel %vm1206, %v2900, %v2902
        %v2904 = vrot.slane %v2848, 2
        %v2905 = vrot.slane %v2849, 2
        %v2906 = vsel %vm1206, %v2904, %v2905
        %v2907 = vrot.slane %v2850, 2
        %v2908 = vsel %vm1206, %v2905, %v2907
        %v2909 = vrot.slane %v2851, 2
        %v2910 = vrot.slane %v2852, 2
        %v2911 = vsel %vm1206, %v2909, %v2910
        %v2912 = vrot.slane %v2853, 2
        %v2913 = vsel %vm1206, %v2910, %v2912
        %v2914 = vrot.slane %v2854, 2
        %v2915 = vrot.slane %v2855, 2
        %v2916 = vsel %vm1206, %v2914, %v2915
        %v2917 = vrot.slane %v2856, 2
        %v2918 = vsel %vm1206, %v2915, %v2917
        %v2919 = vrot.slane %v2857, 2
        %v2920 = vrot.slane %v2858, 2
        %v2921 = vsel %vm1206, %v2919, %v2920
        %v2922 = vrot.slane %v2859, 2
        %v2923 = vsel %vm1206, %v2920, %v2922
        %v2948 = vadd.f32 %v2808, %v2886
        %v2949 = vadd.f32 %v2809, %v2888
        %v2950 = vadd.f32 %v2810, %v2887
        %v2951 = vadd.f32 %v2811, %v2891
        %v2952 = vadd.f32 %v2812, %v2893
        %v2953 = vadd.f32 %v2813, %v2892
        %v2954 = vadd.f32 %v2814, %v2896
        %v2955 = vadd.f32 %v2815, %v2898
        %v2956 = vadd.f32 %v2816, %v2897
        %v2957 = vadd.f32 %v2817, %v2901
        %v2958 = vadd.f32 %v2818, %v2903
        %v2959 = vadd.f32 %v2819, %v2902
        %v2960 = vadd.f32 %v2820, %v2906
        %v2961 = vadd.f32 %v2821, %v2908
        %v2962 = vadd.f32 %v2822, %v2907
        %v2963 = vadd.f32 %v2823, %v2911
        %v2964 = vadd.f32 %v2824, %v2913
        %v2965 = vadd.f32 %v2825, %v2912
        %v2966 = vadd.f32 %v2826, %v2916
        %v2967 = vadd.f32 %v2827, %v2918
        %v2968 = vadd.f32 %v2828, %v2917
        %v2969 = vadd.f32 %v2829, %v2921
        %v2970 = vadd.f32 %v2830, %v2923
        %v2971 = vadd.f32 %v2831, %v2922
        %v2972 = vlaneseq
        %v2973 = vshrl.u32 %v2972, 7
        %v2974 = vsub.s32 2, %v2973
        %v2975 = vrot.slane %v905, %v2974
        %v2976 = vmul.f32 %v916, %v2975
        %v2977 = vmul.f32 %v917, %v2975
        %v2978 = vmul.f32 %v918, %v2975
        %v2979 = vmul.f32 %v919, %v2975
        %v2980 = vmul.f32 %v920, %v2975
        %v2981 = vmul.f32 %v921, %v2975
        %v2982 = vmul.f32 %v922, %v2975
        %v2983 = vmul.f32 %v923, %v2975
        %v2984 = vmul.f32 %v924, %v2975
        %v2985 = vmul.f32 %v925, %v2975
        %v2986 = vmul.f32 %v926, %v2975
        %v2987 = vmul.f32 %v927, %v2975
        %v2988 = vmul.f32 %v928, %v2975
        %v2989 = vmul.f32 %v929, %v2975
        %v2990 = vmul.f32 %v930, %v2975
        %v2991 = vmul.f32 %v931, %v2975
        %v2992 = vmul.f32 %v932, %v2975
        %v2993 = vmul.f32 %v933, %v2975
        %v2994 = vmul.f32 %v934, %v2975
        %v2995 = vmul.f32 %v935, %v2975
        %v2996 = vmul.f32 %v936, %v2975
        %v2997 = vmul.f32 %v937, %v2975
        %v2998 = vmul.f32 %v938, %v2975
        %v2999 = vmul.f32 %v939, %v2975
        %v3024 = vrot.slane %v2976, 4
        %v3025 = vrot.slane %v2977, 4
        %v3026 = vsel %vm2691, %v3024, %v3025
        %v3027 = vrot.slane %v2978, 4
        %v3028 = vsel %vm2691, %v3025, %v3027
        %v3029 = vrot.slane %v2979, 4
        %v3030 = vrot.slane %v2980, 4
        %v3031 = vsel %vm2691, %v3029, %v3030
        %v3032 = vrot.slane %v2981, 4
        %v3033 = vsel %vm2691, %v3030, %v3032
        %v3034 = vrot.slane %v2982, 4
        %v3035 = vrot.slane %v2983, 4
        %v3036 = vsel %vm2691, %v3034, %v3035
        %v3037 = vrot.slane %v2984, 4
        %v3038 = vsel %vm2691, %v3035, %v3037
        %v3039 = vrot.slane %v2985, 4
        %v3040 = vrot.slane %v2986, 4
        %v3041 = vsel %vm2691, %v3039, %v3040
        %v3042 = vrot.slane %v2987, 4
        %v3043 = vsel %vm2691, %v3040, %v3042
        %v3044 = vrot.slane %v2988, 4
        %v3045 = vrot.slane %v2989, 4
        %v3046 = vsel %vm2691, %v3044, %v3045
        %v3047 = vrot.slane %v2990, 4
        %v3048 = vsel %vm2691, %v3045, %v3047
        %v3049 = vrot.slane %v2991, 4
        %v3050 = vrot.slane %v2992, 4
        %v3051 = vsel %vm2691, %v3049, %v3050
        %v3052 = vrot.slane %v2993, 4
        %v3053 = vsel %vm2691, %v3050, %v3052
        %v3054 = vrot.slane %v2994, 4
        %v3055 = vrot.slane %v2995, 4
        %v3056 = vsel %vm2691, %v3054, %v3055
        %v3057 = vrot.slane %v2996, 4
        %v3058 = vsel %vm2691, %v3055, %v3057
        %v3059 = vrot.slane %v2997, 4
        %v3060 = vrot.slane %v2998, 4
        %v3061 = vsel %vm2691, %v3059, %v3060
        %v3062 = vrot.slane %v2999, 4
        %v3063 = vsel %vm2691, %v3060, %v3062
        %v3088 = vadd.f32 %v2948, %v3026
        %v3089 = vadd.f32 %v2949, %v3028
        %v3090 = vadd.f32 %v2950, %v3027
        %v3091 = vadd.f32 %v2951, %v3031
        %v3092 = vadd.f32 %v2952, %v3033
        %v3093 = vadd.f32 %v2953, %v3032
        %v3094 = vadd.f32 %v2954, %v3036
        %v3095 = vadd.f32 %v2955, %v3038
        %v3096 = vadd.f32 %v2956, %v3037
        %v3097 = vadd.f32 %v2957, %v3041
        %v3098 = vadd.f32 %v2958, %v3043
        %v3099 = vadd.f32 %v2959, %v3042
        %v3100 = vadd.f32 %v2960, %v3046
        %v3101 = vadd.f32 %v2961, %v3048
        %v3102 = vadd.f32 %v2962, %v3047
        %v3103 = vadd.f32 %v2963, %v3051
        %v3104 = vadd.f32 %v2964, %v3053
        %v3105 = vadd.f32 %v2965, %v3052
        %v3106 = vadd.f32 %v2966, %v3056
        %v3107 = vadd.f32 %v2967, %v3058
        %v3108 = vadd.f32 %v2968, %v3057
        %v3109 = vadd.f32 %v2969, %v3061
        %v3110 = vadd.f32 %v2970, %v3063
        %v3111 = vadd.f32 %v2971, %v3062
        %v3112 = vlaneseq
        %v3113 = vshrl.u32 %v3112, 7
        %v3114 = vsub.s32 0, %v3113
        %v3115 = vrot.slane %v906, %v3114
        %v3116 = vmul.f32 %v922, %v3115
        %v3117 = vmul.f32 %v923, %v3115
        %v3118 = vmul.f32 %v924, %v3115
        %v3119 = vmul.f32 %v925, %v3115
        %v3120 = vmul.f32 %v926, %v3115
        %v3121 = vmul.f32 %v927, %v3115
        %v3122 = vmul.f32 %v928, %v3115
        %v3123 = vmul.f32 %v929, %v3115
        %v3124 = vmul.f32 %v930, %v3115
        %v3125 = vmul.f32 %v931, %v3115
        %v3126 = vmul.f32 %v932, %v3115
        %v3127 = vmul.f32 %v933, %v3115
        %v3128 = vmul.f32 %v934, %v3115
        %v3129 = vmul.f32 %v935, %v3115
        %v3130 = vmul.f32 %v936, %v3115
        %v3131 = vmul.f32 %v937, %v3115
        %v3132 = vmul.f32 %v938, %v3115
        %v3133 = vmul.f32 %v939, %v3115
        %v3134 = vmul.f32 %v940, %v3115
        %v3135 = vmul.f32 %v941, %v3115
        %v3136 = vmul.f32 %v942, %v3115
        %v3137 = vmul.f32 %v952, %v3115
        %v3138 = vmul.f32 %v953, %v3115
        %v3139 = vmul.f32 %v954, %v3115
        %v3140 = vadd.f32 %v3088, %v3116
        %v3141 = vadd.f32 %v3089, %v3117
        %v3142 = vadd.f32 %v3090, %v3118
        %v3143 = vadd.f32 %v3091, %v3119
        %v3144 = vadd.f32 %v3092, %v3120
        %v3145 = vadd.f32 %v3093, %v3121
        %v3146 = vadd.f32 %v3094, %v3122
        %v3147 = vadd.f32 %v3095, %v3123
        %v3148 = vadd.f32 %v3096, %v3124
        %v3149 = vadd.f32 %v3097, %v3125
        %v3150 = vadd.f32 %v3098, %v3126
        %v3151 = vadd.f32 %v3099, %v3127
        %v3152 = vadd.f32 %v3100, %v3128
        %v3153 = vadd.f32 %v3101, %v3129
        %v3154 = vadd.f32 %v3102, %v3130
        %v3155 = vadd.f32 %v3103, %v3131
        %v3156 = vadd.f32 %v3104, %v3132
        %v3157 = vadd.f32 %v3105, %v3133
        %v3158 = vadd.f32 %v3106, %v3134
        %v3159 = vadd.f32 %v3107, %v3135
        %v3160 = vadd.f32 %v3108, %v3136
        %v3161 = vadd.f32 %v3109, %v3137
        %v3162 = vadd.f32 %v3110, %v3138
        %v3163 = vadd.f32 %v3111, %v3139
        %v3164 = vlaneseq
        %v3165 = vshrl.u32 %v3164, 7
        %v3166 = vsub.s32 1, %v3165
        %v3167 = vrot.slane %v906, %v3166
        %v3168 = vmul.f32 %v922, %v3167
        %v3169 = vmul.f32 %v923, %v3167
        %v3170 = vmul.f32 %v924, %v3167
        %v3171 = vmul.f32 %v925, %v3167
        %v3172 = vmul.f32 %v926, %v3167
        %v3173 = vmul.f32 %v927, %v3167
        %v3174 = vmul.f32 %v928, %v3167
        %v3175 = vmul.f32 %v929, %v3167
        %v3176 = vmul.f32 %v930, %v3167
        %v3177 = vmul.f32 %v931, %v3167
        %v3178 = vmul.f32 %v932, %v3167
        %v3179 = vmul.f32 %v933, %v3167
        %v3180 = vmul.f32 %v934, %v3167
        %v3181 = vmul.f32 %v935, %v3167
        %v3182 = vmul.f32 %v936, %v3167
        %v3183 = vmul.f32 %v937, %v3167
        %v3184 = vmul.f32 %v938, %v3167
        %v3185 = vmul.f32 %v939, %v3167
        %v3186 = vmul.f32 %v940, %v3167
        %v3187 = vmul.f32 %v941, %v3167
        %v3188 = vmul.f32 %v942, %v3167
        %v3189 = vmul.f32 %v952, %v3167
        %v3190 = vmul.f32 %v953, %v3167
        %v3191 = vmul.f32 %v954, %v3167
        %v3216 = vrot.slane %v3168, 2
        %v3217 = vrot.slane %v3169, 2
        %v3218 = vsel %vm1206, %v3216, %v3217
        %v3219 = vrot.slane %v3170, 2
        %v3220 = vsel %vm1206, %v3217, %v3219
        %v3221 = vrot.slane %v3171, 2
        %v3222 = vrot.slane %v3172, 2
        %v3223 = vsel %vm1206, %v3221, %v3222
        %v3224 = vrot.slane %v3173, 2
        %v3225 = vsel %vm1206, %v3222, %v3224
        %v3226 = vrot.slane %v3174, 2
        %v3227 = vrot.slane %v3175, 2
        %v3228 = vsel %vm1206, %v3226, %v3227
        %v3229 = vrot.slane %v3176, 2
        %v3230 = vsel %vm1206, %v3227, %v3229
        %v3231 = vrot.slane %v3177, 2
        %v3232 = vrot.slane %v3178, 2
        %v3233 = vsel %vm1206, %v3231, %v3232
        %v3234 = vrot.slane %v3179, 2
        %v3235 = vsel %vm1206, %v3232, %v3234
        %v3236 = vrot.slane %v3180, 2
        %v3237 = vrot.slane %v3181, 2
        %v3238 = vsel %vm1206, %v3236, %v3237
        %v3239 = vrot.slane %v3182, 2
        %v3240 = vsel %vm1206, %v3237, %v3239
        %v3241 = vrot.slane %v3183, 2
        %v3242 = vrot.slane %v3184, 2
        %v3243 = vsel %vm1206, %v3241, %v3242
        %v3244 = vrot.slane %v3185, 2
        %v3245 = vsel %vm1206, %v3242, %v3244
        %v3246 = vrot.slane %v3186, 2
        %v3247 = vrot.slane %v3187, 2
        %v3248 = vsel %vm1206, %v3246, %v3247
        %v3249 = vrot.slane %v3188, 2
        %v3250 = vsel %vm1206, %v3247, %v3249
        %v3251 = vrot.slane %v3189, 2
        %v3252 = vrot.slane %v3190, 2
        %v3253 = vsel %vm1206, %v3251, %v3252
        %v3254 = vrot.slane %v3191, 2
        %v3255 = vsel %vm1206, %v3252, %v3254
        %v3280 = vadd.f32 %v3140, %v3218
        %v3281 = vadd.f32 %v3141, %v3220
        %v3282 = vadd.f32 %v3142, %v3219
        %v3283 = vadd.f32 %v3143, %v3223
        %v3284 = vadd.f32 %v3144, %v3225
        %v3285 = vadd.f32 %v3145, %v3224
        %v3286 = vadd.f32 %v3146, %v3228
        %v3287 = vadd.f32 %v3147, %v3230
        %v3288 = vadd.f32 %v3148, %v3229
        %v3289 = vadd.f32 %v3149, %v3233
        %v3290 = vadd.f32 %v3150, %v3235
        %v3291 = vadd.f32 %v3151, %v3234
        %v3292 = vadd.f32 %v3152, %v3238
        %v3293 = vadd.f32 %v3153, %v3240
        %v3294 = vadd.f32 %v3154, %v3239
        %v3295 = vadd.f32 %v3155, %v3243
        %v3296 = vadd.f32 %v3156, %v3245
        %v3297 = vadd.f32 %v3157, %v3244
        %v3298 = vadd.f32 %v3158, %v3248
        %v3299 = vadd.f32 %v3159, %v3250
        %v3300 = vadd.f32 %v3160, %v3249
        %v3301 = vadd.f32 %v3161, %v3253
        %v3302 = vadd.f32 %v3162, %v3255
        %v3303 = vadd.f32 %v3163, %v3254
        %v3304 = vlaneseq
        %v3305 = vshrl.u32 %v3304, 7
        %v3306 = vsub.s32 2, %v3305
        %v3307 = vrot.slane %v906, %v3306
        %v3308 = vmul.f32 %v922, %v3307
        %v3309 = vmul.f32 %v923, %v3307
        %v3310 = vmul.f32 %v924, %v3307
        %v3311 = vmul.f32 %v925, %v3307
        %v3312 = vmul.f32 %v926, %v3307
        %v3313 = vmul.f32 %v927, %v3307
        %v3314 = vmul.f32 %v928, %v3307
        %v3315 = vmul.f32 %v929, %v3307
        %v3316 = vmul.f32 %v930, %v3307
        %v3317 = vmul.f32 %v931, %v3307
        %v3318 = vmul.f32 %v932, %v3307
        %v3319 = vmul.f32 %v933, %v3307
        %v3320 = vmul.f32 %v934, %v3307
        %v3321 = vmul.f32 %v935, %v3307
        %v3322 = vmul.f32 %v936, %v3307
        %v3323 = vmul.f32 %v937, %v3307
        %v3324 = vmul.f32 %v938, %v3307
        %v3325 = vmul.f32 %v939, %v3307
        %v3326 = vmul.f32 %v940, %v3307
        %v3327 = vmul.f32 %v941, %v3307
        %v3328 = vmul.f32 %v942, %v3307
        %v3329 = vmul.f32 %v952, %v3307
        %v3330 = vmul.f32 %v953, %v3307
        %v3331 = vmul.f32 %v954, %v3307
        %v3356 = vrot.slane %v3308, 4
        %v3357 = vrot.slane %v3309, 4
        %v3358 = vsel %vm2691, %v3356, %v3357
        %v3359 = vrot.slane %v3310, 4
        %v3360 = vsel %vm2691, %v3357, %v3359
        %v3361 = vrot.slane %v3311, 4
        %v3362 = vrot.slane %v3312, 4
        %v3363 = vsel %vm2691, %v3361, %v3362
        %v3364 = vrot.slane %v3313, 4
        %v3365 = vsel %vm2691, %v3362, %v3364
        %v3366 = vrot.slane %v3314, 4
        %v3367 = vrot.slane %v3315, 4
        %v3368 = vsel %vm2691, %v3366, %v3367
        %v3369 = vrot.slane %v3316, 4
        %v3370 = vsel %vm2691, %v3367, %v3369
        %v3371 = vrot.slane %v3317, 4
        %v3372 = vrot.slane %v3318, 4
        %v3373 = vsel %vm2691, %v3371, %v3372
        %v3374 = vrot.slane %v3319, 4
        %v3375 = vsel %vm2691, %v3372, %v3374
        %v3376 = vrot.slane %v3320, 4
        %v3377 = vrot.slane %v3321, 4
        %v3378 = vsel %vm2691, %v3376, %v3377
        %v3379 = vrot.slane %v3322, 4
        %v3380 = vsel %vm2691, %v3377, %v3379
        %v3381 = vrot.slane %v3323, 4
        %v3382 = vrot.slane %v3324, 4
        %v3383 = vsel %vm2691, %v3381, %v3382
        %v3384 = vrot.slane %v3325, 4
        %v3385 = vsel %vm2691, %v3382, %v3384
        %v3386 = vrot.slane %v3326, 4
        %v3387 = vrot.slane %v3327, 4
        %v3388 = vsel %vm2691, %v3386, %v3387
        %v3389 = vrot.slane %v3328, 4
        %v3390 = vsel %vm2691, %v3387, %v3389
        %v3391 = vrot.slane %v3329, 4
        %v3392 = vrot.slane %v3330, 4
        %v3393 = vsel %vm2691, %v3391, %v3392
        %v3394 = vrot.slane %v3331, 4
        %v3395 = vsel %vm2691, %v3392, %v3394
        %v3420 = vadd.f32 %v3280, %v3358
        %v3421 = vadd.f32 %v3281, %v3360
        %v3422 = vadd.f32 %v3282, %v3359
        %v3423 = vadd.f32 %v3283, %v3363
        %v3424 = vadd.f32 %v3284, %v3365
        %v3425 = vadd.f32 %v3285, %v3364
        %v3426 = vadd.f32 %v3286, %v3368
        %v3427 = vadd.f32 %v3287, %v3370
        %v3428 = vadd.f32 %v3288, %v3369
        %v3429 = vadd.f32 %v3289, %v3373
        %v3430 = vadd.f32 %v3290, %v3375
        %v3431 = vadd.f32 %v3291, %v3374
        %v3432 = vadd.f32 %v3292, %v3378
        %v3433 = vadd.f32 %v3293, %v3380
        %v3434 = vadd.f32 %v3294, %v3379
        %v3435 = vadd.f32 %v3295, %v3383
        %v3436 = vadd.f32 %v3296, %v3385
        %v3437 = vadd.f32 %v3297, %v3384
        %v3438 = vadd.f32 %v3298, %v3388
        %v3439 = vadd.f32 %v3299, %v3390
        %v3440 = vadd.f32 %v3300, %v3389
        %v3441 = vadd.f32 %v3301, %v3393
        %v3442 = vadd.f32 %v3302, %v3395
        %v3443 = vadd.f32 %v3303, %v3394
        %v3468 = vrot.slane %v3420, 2
        %v3469 = vrot.slane %v3421, 2
        %v3470 = vsel %vm1206, %v3468, %v3469
        %v3471 = vrot.slane %v3422, 2
        %v3472 = vsel %vm1206, %v3469, %v3471
        %v3473 = vrot.slane %v3423, 2
        %v3474 = vrot.slane %v3424, 2
        %v3475 = vsel %vm1206, %v3473, %v3474
        %v3476 = vrot.slane %v3425, 2
        %v3477 = vsel %vm1206, %v3474, %v3476
        %v3478 = vrot.slane %v3426, 2
        %v3479 = vrot.slane %v3427, 2
        %v3480 = vsel %vm1206, %v3478, %v3479
        %v3481 = vrot.slane %v3428, 2
        %v3482 = vsel %vm1206, %v3479, %v3481
        %v3483 = vrot.slane %v3429, 2
        %v3484 = vrot.slane %v3430, 2
        %v3485 = vsel %vm1206, %v3483, %v3484
        %v3486 = vrot.slane %v3431, 2
        %v3487 = vsel %vm1206, %v3484, %v3486
        %v3488 = vrot.slane %v3432, 2
        %v3489 = vrot.slane %v3433, 2
        %v3490 = vsel %vm1206, %v3488, %v3489
        %v3491 = vrot.slane %v3434, 2
        %v3492 = vsel %vm1206, %v3489, %v3491
        %v3493 = vrot.slane %v3435, 2
        %v3494 = vrot.slane %v3436, 2
        %v3495 = vsel %vm1206, %v3493, %v3494
        %v3496 = vrot.slane %v3437, 2
        %v3497 = vsel %vm1206, %v3494, %v3496
        %v3498 = vrot.slane %v3438, 2
        %v3499 = vrot.slane %v3439, 2
        %v3500 = vsel %vm1206, %v3498, %v3499
        %v3501 = vrot.slane %v3440, 2
        %v3502 = vsel %vm1206, %v3499, %v3501
        %v3503 = vrot.slane %v3441, 2
        %v3504 = vrot.slane %v3442, 2
        %v3505 = vsel %vm1206, %v3503, %v3504
        %v3506 = vrot.slane %v3443, 2
        %v3507 = vsel %vm1206, %v3504, %v3506
        %v3524 = vpack.c.bf16 %v3472, %v3470
        %v3525 = vpack.c.bf16 %v3477, %v3475
        %v3526 = vpack.c.bf16 %v3482, %v3480
        %v3527 = vpack.c.bf16 %v3487, %v3485
        %v3528 = vpack.c.bf16 %v3492, %v3490
        %v3529 = vpack.c.bf16 %v3497, %v3495
        %v3530 = vpack.c.bf16 %v3502, %v3500
        %v3531 = vpack.c.bf16 %v3507, %v3505
        %s3532 = scalar_lea.vmem [#allocation8], 64
        %v3533 = vld [vmem:[%s3532] sm:$0xf]
        %v3534 = vld [vmem:[%s3532 + $0x4] sm:$0xf]
        %v3535 = vld [vmem:[%s3532 + $0x8] sm:$0xf]
        %v3536 = vld [vmem:[%s3532 + $0xc] sm:$0xf]
        %v3537 = vld [vmem:[%s3532 + $0x10] sm:$0xf]
        %v3538 = vld [vmem:[%s3532 + $0x14] sm:$0xf]
        %v3539 = vld [vmem:[%s3532 + $0x18] sm:$0xf]
        %v3540 = vld [vmem:[%s3532 + $0x1c] sm:$0xf]
        %v3541 = vld [vmem:[%s3532 + $0x20] sm:$0xf]
        %v3542 = vld [vmem:[%s3532 + $0x24] sm:$0xf]
        %v3543 = vld [vmem:[%s3532 + $0x28] sm:$0xf]
        %v3544 = vld [vmem:[%s3532 + $0x2c] sm:$0xf]
        %v3545 = vld [vmem:[%s3532 + $0x30] sm:$0xf]
        %v3546 = vld [vmem:[%s3532 + $0x34] sm:$0xf]
        %v3547 = vld [vmem:[%s3532 + $0x38] sm:$0xf]
        %v3548 = vld [vmem:[%s3532 + $0x3c] sm:$0xf]
        %v3549 = vlaneseq
        %v3550 = vshrl.u32 %v3549, 7
        %v3551 = vsub.s32 2, %v3550
        %v3552 = vrot.slane %v422, %v3551
        %v3569 = vunpack.c.l.b16 %v3533
        %v3570 = vunpack.c.l.b16 %v3534
        %v3571 = vunpack.c.l.b16 %v3535
        %v3572 = vunpack.c.l.b16 %v3536
        %v3573 = vunpack.c.l.b16 %v3537
        %v3574 = vunpack.c.l.b16 %v3538
        %v3575 = vunpack.c.l.b16 %v3539
        %v3576 = vunpack.c.l.b16 %v3540
        %v3577 = vunpack.c.l.b16 %v3541
        %v3578 = vunpack.c.l.b16 %v3542
        %v3579 = vunpack.c.l.b16 %v3543
        %v3580 = vunpack.c.l.b16 %v3544
        %v3581 = vunpack.c.l.b16 %v3545
        %v3582 = vunpack.c.l.b16 %v3546
        %v3583 = vunpack.c.l.b16 %v3547
        %v3584 = vunpack.c.l.b16 %v3548
        %v3585 = vpack.c.b16 %v3570, %v3569
        %v3586 = vpack.c.b16 %v3572, %v3571
        %v3587 = vpack.c.b16 %v3574, %v3573
        %v3588 = vpack.c.b16 %v3576, %v3575
        %v3589 = vpack.c.b16 %v3578, %v3577
        %v3590 = vpack.c.b16 %v3580, %v3579
        %v3591 = vpack.c.b16 %v3582, %v3581
        %v3592 = vpack.c.b16 %v3584, %v3583
        %3601 = vmatprep.subr.bf16.mxu0 0
        %3602 = vmatpush1.bf16.msra.mxu0 %v3585
        %3603 = vmatprep.subr.bf16.mxu0 0
        %3604 = vmatpush1.bf16.msra.mxu0 %v3586
        %3605 = vmatprep.subr.bf16.mxu0 0
        %3606 = vmatpush1.bf16.msra.mxu0 %v3587
        %3607 = vmatprep.subr.bf16.mxu0 0
        %3608 = vmatpush1.bf16.msra.mxu0 %v3588
        %3609 = vmatprep.subr.bf16.mxu0 0
        %3610 = vmatpush1.bf16.msra.mxu0 %v3589
        %3611 = vmatprep.subr.bf16.mxu0 0
        %3612 = vmatpush1.bf16.msra.mxu0 %v3590
        %3613 = vmatprep.subr.bf16.mxu0 0
        %3614 = vmatpush1.bf16.msra.mxu0 %v3591
        %3615 = vmatprep.subr.bf16.mxu0 0
        %3616 = vmatpush1.bf16.msra.mxu0 %v3592
        %3617 = vmatprep.subr.bf16.mxu0 0
        %3618 = vmatpush1.bf16.msra.mxu0 0
        %3619 = vmatprep.subr.bf16.mxu0 0
        %3620 = vmatpush1.bf16.msra.mxu0 0
        %3621 = vmatprep.subr.bf16.mxu0 0
        %3622 = vmatpush1.bf16.msra.mxu0 0
        %3623 = vmatprep.subr.bf16.mxu0 0
        %3624 = vmatpush1.bf16.msra.mxu0 0
        %3625 = vmatprep.subr.bf16.mxu0 0
        %3626 = vmatpush1.bf16.msra.mxu0 0
        %3627 = vmatprep.subr.bf16.mxu0 0
        %3628 = vmatpush1.bf16.msra.mxu0 0
        %3629 = vmatprep.subr.bf16.mxu0 0
        %3630 = vmatpush1.bf16.msra.mxu0 0
        %3631 = vmatprep.subr.bf16.mxu0 0
        %3632 = vmatpush1.bf16.msra.mxu0 0
        %3633 = vmatprep.mubr.bf16.mxu0 0
        %3634 = vmatmul.mubr.bf16.gmra.mrb[0].mxu0 %v3524
        %v3635 = vpop.f32.mrb[0].mxu0
        %v3636 = vadd.f32 %v3552, %v3635
        %v3637 = vpop.f32.mrb[0].mxu0
        %v3638 = vpop.f32.mrb[0].mxu0
        %v3639 = vadd.f32 %v3552, %v3638
        %v3640 = vpop.f32.mrb[0].mxu0
        %3641 = vmatprep.mubr.bf16.mxu0 0
        %3642 = vmatmul.mubr.bf16.gmra.mrb[0].mxu0 %v3525
        %v3643 = vpop.f32.mrb[0].mxu0
        %v3644 = vadd.f32 %v3552, %v3643
        %v3645 = vpop.f32.mrb[0].mxu0
        %v3646 = vpop.f32.mrb[0].mxu0
        %v3647 = vadd.f32 %v3552, %v3646
        %v3648 = vpop.f32.mrb[0].mxu0
        %3649 = vmatprep.mubr.bf16.mxu0 0
        %3650 = vmatmul.mubr.bf16.gmra.mrb[0].mxu0 %v3526
        %v3651 = vpop.f32.mrb[0].mxu0
        %v3652 = vadd.f32 %v3552, %v3651
        %v3653 = vpop.f32.mrb[0].mxu0
        %v3654 = vpop.f32.mrb[0].mxu0
        %v3655 = vadd.f32 %v3552, %v3654
        %v3656 = vpop.f32.mrb[0].mxu0
        %3657 = vmatprep.mubr.bf16.mxu0 0
        %3658 = vmatmul.mubr.bf16.gmra.mrb[0].mxu0 %v3527
        %v3659 = vpop.f32.mrb[0].mxu0
        %v3660 = vadd.f32 %v3552, %v3659
        %v3661 = vpop.f32.mrb[0].mxu0
        %v3662 = vpop.f32.mrb[0].mxu0
        %v3663 = vadd.f32 %v3552, %v3662
        %v3664 = vpop.f32.mrb[0].mxu0
        %3665 = vmatprep.mubr.bf16.mxu0 0
        %3666 = vmatmul.mubr.bf16.gmra.mrb[0].mxu0 %v3528
        %v3667 = vpop.f32.mrb[0].mxu0
        %v3668 = vadd.f32 %v3552, %v3667
        %v3669 = vpop.f32.mrb[0].mxu0
        %v3670 = vpop.f32.mrb[0].mxu0
        %v3671 = vadd.f32 %v3552, %v3670
        %v3672 = vpop.f32.mrb[0].mxu0
        %3673 = vmatprep.mubr.bf16.mxu0 0
        %3674 = vmatmul.mubr.bf16.gmra.mrb[0].mxu0 %v3529
        %v3675 = vpop.f32.mrb[0].mxu0
        %v3676 = vadd.f32 %v3552, %v3675
        %v3677 = vpop.f32.mrb[0].mxu0
        %v3678 = vpop.f32.mrb[0].mxu0
        %v3679 = vadd.f32 %v3552, %v3678
        %v3680 = vpop.f32.mrb[0].mxu0
        %3681 = vmatprep.mubr.bf16.mxu0 0
        %3682 = vmatmul.mubr.bf16.gmra.mrb[0].mxu0 %v3530
        %v3683 = vpop.f32.mrb[0].mxu0
        %v3684 = vadd.f32 %v3552, %v3683
        %v3685 = vpop.f32.mrb[0].mxu0
        %v3686 = vpop.f32.mrb[0].mxu0
        %v3687 = vadd.f32 %v3552, %v3686
        %v3688 = vpop.f32.mrb[0].mxu0
        %3689 = vmatprep.mubr.bf16.mxu0 0
        %3690 = vmatmul.mubr.bf16.gmra.mrb[0].mxu0 %v3531
        %v3691 = vpop.f32.mrb[0].mxu0
        %v3692 = vadd.f32 %v3552, %v3691
        %v3693 = vpop.f32.mrb[0].mxu0
        %v3694 = vpop.f32.mrb[0].mxu0
        %v3695 = vadd.f32 %v3552, %v3694
        %v3696 = vpop.f32.mrb[0].mxu0
        %3697 = vdwg.mxu0
        %v3698 = vmax.f32 %v3636, 0.0
        %v3699 = vmax.f32 %v3639, 0.0
        %v3700 = vmax.f32 %v3644, 0.0
        %v3701 = vmax.f32 %v3647, 0.0
        %v3702 = vmax.f32 %v3652, 0.0
        %v3703 = vmax.f32 %v3655, 0.0
        %v3704 = vmax.f32 %v3660, 0.0
        %v3705 = vmax.f32 %v3663, 0.0
        %v3706 = vmax.f32 %v3668, 0.0
        %v3707 = vmax.f32 %v3671, 0.0
        %v3708 = vmax.f32 %v3676, 0.0
        %v3709 = vmax.f32 %v3679, 0.0
        %v3710 = vmax.f32 %v3684, 0.0
        %v3711 = vmax.f32 %v3687, 0.0
        %v3712 = vmax.f32 %v3692, 0.0
        %v3713 = vmax.f32 %v3695, 0.0
        %v3714 = vld [vmem:[#allocation3] sm:$0xff]
        %v3715 = vld [vmem:[#allocation3 + $0x8] sm:$0xff]
        %v3716 = vld [vmem:[#allocation3 + $0x10] sm:$0xff]
        %v3717 = vld [vmem:[#allocation3 + $0x18] sm:$0xff]
        %v3718 = vld [vmem:[#allocation3 + $0x20] sm:$0xff]
        %v3719 = vld [vmem:[#allocation3 + $0x28] sm:$0xff]
        %v3720 = vld [vmem:[#allocation3 + $0x30] sm:$0xff]
        %v3721 = vld [vmem:[#allocation3 + $0x38] sm:$0xff]
        %v3722 = vld [vmem:[#allocation3 + $0x40] sm:$0xff]
        %v3723 = vld [vmem:[#allocation3 + $0x48] sm:$0xff]
        %v3724 = vld [vmem:[#allocation3 + $0x50] sm:$0xff]
        %v3725 = vld [vmem:[#allocation3 + $0x58] sm:$0xff]
        %v3726 = vld [vmem:[#allocation3 + $0x60] sm:$0xff]
        %v3727 = vld [vmem:[#allocation3 + $0x68] sm:$0xff]
        %v3728 = vld [vmem:[#allocation3 + $0x70] sm:$0xff]
        %v3729 = vld [vmem:[#allocation3 + $0x78] sm:$0xff]
        %v3730 = vpack.c.bf16 %v3699, %v3698
        %v3731 = vpack.c.bf16 %v3701, %v3700
        %v3732 = vpack.c.bf16 %v3703, %v3702
        %v3733 = vpack.c.bf16 %v3705, %v3704
        %v3734 = vpack.c.bf16 %v3707, %v3706
        %v3735 = vpack.c.bf16 %v3709, %v3708
        %v3736 = vpack.c.bf16 %v3711, %v3710
        %v3737 = vpack.c.bf16 %v3713, %v3712
        %s3738 = scalar_lea.vmem [#allocation10], 128
        %v3739 = vld [vmem:[%s3738] sm:$0xf]
        %v3740 = vld [vmem:[%s3738 + $0x4] sm:$0xf]
        %v3741 = vld [vmem:[%s3738 + $0x8] sm:$0xf]
        %v3742 = vld [vmem:[%s3738 + $0xc] sm:$0xf]
        %v3743 = vld [vmem:[%s3738 + $0x10] sm:$0xf]
        %v3744 = vld [vmem:[%s3738 + $0x14] sm:$0xf]
        %v3745 = vld [vmem:[%s3738 + $0x18] sm:$0xf]
        %v3746 = vld [vmem:[%s3738 + $0x1c] sm:$0xf]
        %v3747 = vld [vmem:[%s3738 + $0x20] sm:$0xf]
        %v3748 = vld [vmem:[%s3738 + $0x24] sm:$0xf]
        %v3749 = vld [vmem:[%s3738 + $0x28] sm:$0xf]
        %v3750 = vld [vmem:[%s3738 + $0x2c] sm:$0xf]
        %v3751 = vld [vmem:[%s3738 + $0x30] sm:$0xf]
        %v3752 = vld [vmem:[%s3738 + $0x34] sm:$0xf]
        %v3753 = vld [vmem:[%s3738 + $0x38] sm:$0xf]
        %v3754 = vld [vmem:[%s3738 + $0x3c] sm:$0xf]
        %v3771 = vunpack.c.l.b16 %v3739
        %v3772 = vunpack.c.l.b16 %v3740
        %v3773 = vunpack.c.l.b16 %v3741
        %v3774 = vunpack.c.l.b16 %v3742
        %v3775 = vunpack.c.l.b16 %v3743
        %v3776 = vunpack.c.l.b16 %v3744
        %v3777 = vunpack.c.l.b16 %v3745
        %v3778 = vunpack.c.l.b16 %v3746
        %v3779 = vunpack.c.l.b16 %v3747
        %v3780 = vunpack.c.l.b16 %v3748
        %v3781 = vunpack.c.l.b16 %v3749
        %v3782 = vunpack.c.l.b16 %v3750
        %v3783 = vunpack.c.l.b16 %v3751
        %v3784 = vunpack.c.l.b16 %v3752
        %v3785 = vunpack.c.l.b16 %v3753
        %v3786 = vunpack.c.l.b16 %v3754
        %v3787 = vpack.c.b16 %v3772, %v3771
        %v3788 = vpack.c.b16 %v3774, %v3773
        %v3789 = vpack.c.b16 %v3776, %v3775
        %v3790 = vpack.c.b16 %v3778, %v3777
        %v3791 = vpack.c.b16 %v3780, %v3779
        %v3792 = vpack.c.b16 %v3782, %v3781
        %v3793 = vpack.c.b16 %v3784, %v3783
        %v3794 = vpack.c.b16 %v3786, %v3785
        %3803 = vmatprep.subr.bf16.mxu0 0
        %3804 = vmatpush1.bf16.msra.mxu0 %v3787
        %3805 = vmatprep.subr.bf16.mxu0 0
        %3806 = vmatpush1.bf16.msra.mxu0 %v3788
        %3807 = vmatprep.subr.bf16.mxu0 0
        %3808 = vmatpush1.bf16.msra.mxu0 %v3789
        %3809 = vmatprep.subr.bf16.mxu0 0
        %3810 = vmatpush1.bf16.msra.mxu0 %v3790
        %3811 = vmatprep.subr.bf16.mxu0 0
        %3812 = vmatpush1.bf16.msra.mxu0 %v3791
        %3813 = vmatprep.subr.bf16.mxu0 0
        %3814 = vmatpush1.bf16.msra.mxu0 %v3792
        %3815 = vmatprep.subr.bf16.mxu0 0
        %3816 = vmatpush1.bf16.msra.mxu0 %v3793
        %3817 = vmatprep.subr.bf16.mxu0 0
        %3818 = vmatpush1.bf16.msra.mxu0 %v3794
        %3819 = vmatprep.subr.bf16.mxu0 0
        %3820 = vmatpush1.bf16.msra.mxu0 0
        %3821 = vmatprep.subr.bf16.mxu0 0
        %3822 = vmatpush1.bf16.msra.mxu0 0
        %3823 = vmatprep.subr.bf16.mxu0 0
        %3824 = vmatpush1.bf16.msra.mxu0 0
        %3825 = vmatprep.subr.bf16.mxu0 0
        %3826 = vmatpush1.bf16.msra.mxu0 0
        %3827 = vmatprep.subr.bf16.mxu0 0
        %3828 = vmatpush1.bf16.msra.mxu0 0
        %3829 = vmatprep.subr.bf16.mxu0 0
        %3830 = vmatpush1.bf16.msra.mxu0 0
        %3831 = vmatprep.subr.bf16.mxu0 0
        %3832 = vmatpush1.bf16.msra.mxu0 0
        %3833 = vmatprep.subr.bf16.mxu0 0
        %3834 = vmatpush1.bf16.msra.mxu0 0
        %3835 = vmatprep.mubr.bf16.mxu0 0
        %3836 = vmatmul.mubr.bf16.gmra.mrb[0].mxu0 %v3730
        %v3837 = vpop.f32.mrb[0].mxu0
        %v3838 = vadd.f32 0.0, %v3837
        %v3839 = vpop.f32.mrb[0].mxu0
        %v3840 = vpop.f32.mrb[0].mxu0
        %v3841 = vadd.f32 0.0, %v3840
        %v3842 = vpop.f32.mrb[0].mxu0
        %3843 = vmatprep.mubr.bf16.mxu0 0
        %3844 = vmatmul.mubr.bf16.gmra.mrb[0].mxu0 %v3731
        %v3845 = vpop.f32.mrb[0].mxu0
        %v3846 = vadd.f32 0.0, %v3845
        %v3847 = vpop.f32.mrb[0].mxu0
        %v3848 = vpop.f32.mrb[0].mxu0
        %v3849 = vadd.f32 0.0, %v3848
        %v3850 = vpop.f32.mrb[0].mxu0
        %3851 = vmatprep.mubr.bf16.mxu0 0
        %3852 = vmatmul.mubr.bf16.gmra.mrb[0].mxu0 %v3732
        %v3853 = vpop.f32.mrb[0].mxu0
        %v3854 = vadd.f32 0.0, %v3853
        %v3855 = vpop.f32.mrb[0].mxu0
        %v3856 = vpop.f32.mrb[0].mxu0
        %v3857 = vadd.f32 0.0, %v3856
        %v3858 = vpop.f32.mrb[0].mxu0
        %3859 = vmatprep.mubr.bf16.mxu0 0
        %3860 = vmatmul.mubr.bf16.gmra.mrb[0].mxu0 %v3733
        %v3861 = vpop.f32.mrb[0].mxu0
        %v3862 = vadd.f32 0.0, %v3861
        %v3863 = vpop.f32.mrb[0].mxu0
        %v3864 = vpop.f32.mrb[0].mxu0
        %v3865 = vadd.f32 0.0, %v3864
        %v3866 = vpop.f32.mrb[0].mxu0
        %3867 = vmatprep.mubr.bf16.mxu0 0
        %3868 = vmatmul.mubr.bf16.gmra.mrb[0].mxu0 %v3734
        %v3869 = vpop.f32.mrb[0].mxu0
        %v3870 = vadd.f32 0.0, %v3869
        %v3871 = vpop.f32.mrb[0].mxu0
        %v3872 = vpop.f32.mrb[0].mxu0
        %v3873 = vadd.f32 0.0, %v3872
        %v3874 = vpop.f32.mrb[0].mxu0
        %3875 = vmatprep.mubr.bf16.mxu0 0
        %3876 = vmatmul.mubr.bf16.gmra.mrb[0].mxu0 %v3735
        %v3877 = vpop.f32.mrb[0].mxu0
        %v3878 = vadd.f32 0.0, %v3877
        %v3879 = vpop.f32.mrb[0].mxu0
        %v3880 = vpop.f32.mrb[0].mxu0
        %v3881 = vadd.f32 0.0, %v3880
        %v3882 = vpop.f32.mrb[0].mxu0
        %3883 = vmatprep.mubr.bf16.mxu0 0
        %3884 = vmatmul.mubr.bf16.gmra.mrb[0].mxu0 %v3736
        %v3885 = vpop.f32.mrb[0].mxu0
        %v3886 = vadd.f32 0.0, %v3885
        %v3887 = vpop.f32.mrb[0].mxu0
        %v3888 = vpop.f32.mrb[0].mxu0
        %v3889 = vadd.f32 0.0, %v3888
        %v3890 = vpop.f32.mrb[0].mxu0
        %3891 = vmatprep.mubr.bf16.mxu0 0
        %3892 = vmatmul.mubr.bf16.gmra.mrb[0].mxu0 %v3737
        %v3893 = vpop.f32.mrb[0].mxu0
        %v3894 = vadd.f32 0.0, %v3893
        %v3895 = vpop.f32.mrb[0].mxu0
        %v3896 = vpop.f32.mrb[0].mxu0
        %v3897 = vadd.f32 0.0, %v3896
        %v3898 = vpop.f32.mrb[0].mxu0
        %3899 = vdwg.mxu0
        %v3900 = vadd.f32 %v3714, %v3838
        %v3901 = vadd.f32 %v3715, %v3841
        %v3902 = vadd.f32 %v3716, %v3846
        %v3903 = vadd.f32 %v3717, %v3849
        %v3904 = vadd.f32 %v3718, %v3854
        %v3905 = vadd.f32 %v3719, %v3857
        %v3906 = vadd.f32 %v3720, %v3862
        %v3907 = vadd.f32 %v3721, %v3865
        %v3908 = vadd.f32 %v3722, %v3870
        %v3909 = vadd.f32 %v3723, %v3873
        %v3910 = vadd.f32 %v3724, %v3878
        %v3911 = vadd.f32 %v3725, %v3881
        %v3912 = vadd.f32 %v3726, %v3886
        %v3913 = vadd.f32 %v3727, %v3889
        %v3914 = vadd.f32 %v3728, %v3894
        %v3915 = vadd.f32 %v3729, %v3897
        %3916 = vst [vmem:[#allocation3] sm:$0xff] %v3900
        %3917 = vst [vmem:[#allocation3 + $0x8] sm:$0xff] %v3901
        %3918 = vst [vmem:[#allocation3 + $0x10] sm:$0xff] %v3902
        %3919 = vst [vmem:[#allocation3 + $0x18] sm:$0xff] %v3903
        %3920 = vst [vmem:[#allocation3 + $0x20] sm:$0xff] %v3904
        %3921 = vst [vmem:[#allocation3 + $0x28] sm:$0xff] %v3905
        %3922 = vst [vmem:[#allocation3 + $0x30] sm:$0xff] %v3906
        %3923 = vst [vmem:[#allocation3 + $0x38] sm:$0xff] %v3907
        %3924 = vst [vmem:[#allocation3 + $0x40] sm:$0xff] %v3908
        %3925 = vst [vmem:[#allocation3 + $0x48] sm:$0xff] %v3909
        %3926 = vst [vmem:[#allocation3 + $0x50] sm:$0xff] %v3910
        %3927 = vst [vmem:[#allocation3 + $0x58] sm:$0xff] %v3911
        %3928 = vst [vmem:[#allocation3 + $0x60] sm:$0xff] %v3912
        %3929 = vst [vmem:[#allocation3 + $0x68] sm:$0xff] %v3913
        %3930 = vst [vmem:[#allocation3 + $0x70] sm:$0xff] %v3914
        %3931 = vst [vmem:[#allocation3 + $0x78] sm:$0xff] %v3915
        %v3932 = vlaneseq
        %v3933 = vshrl.u32 %v3932, 7
        %v3934 = vsub.s32 0, %v3933
        %v3935 = vrot.slane %v907, %v3934
        %v3936 = vmul.f32 %v946, %v3935
        %v3937 = vmul.f32 %v947, %v3935
        %v3938 = vmul.f32 %v948, %v3935
        %v3939 = vmul.f32 %v949, %v3935
        %v3940 = vmul.f32 %v950, %v3935
        %v3941 = vmul.f32 %v951, %v3935
        %v3942 = vmul.f32 %v913, %v3935
        %v3943 = vmul.f32 %v914, %v3935
        %v3944 = vmul.f32 %v915, %v3935
        %v3945 = vmul.f32 %v916, %v3935
        %v3946 = vmul.f32 %v917, %v3935
        %v3947 = vmul.f32 %v918, %v3935
        %v3948 = vmul.f32 %v919, %v3935
        %v3949 = vmul.f32 %v920, %v3935
        %v3950 = vmul.f32 %v921, %v3935
        %v3951 = vmul.f32 %v922, %v3935
        %v3952 = vmul.f32 %v923, %v3935
        %v3953 = vmul.f32 %v924, %v3935
        %v3954 = vmul.f32 %v925, %v3935
        %v3955 = vmul.f32 %v926, %v3935
        %v3956 = vmul.f32 %v927, %v3935
        %v3957 = vmul.f32 %v928, %v3935
        %v3958 = vmul.f32 %v929, %v3935
        %v3959 = vmul.f32 %v930, %v3935
        %v3960 = vadd.f32 %v3936, 0.0
        %v3961 = vadd.f32 %v3937, 0.0
        %v3962 = vadd.f32 %v3938, 0.0
        %v3963 = vadd.f32 %v3939, 0.0
        %v3964 = vadd.f32 %v3940, 0.0
        %v3965 = vadd.f32 %v3941, 0.0
        %v3966 = vadd.f32 %v3942, 0.0
        %v3967 = vadd.f32 %v3943, 0.0
        %v3968 = vadd.f32 %v3944, 0.0
        %v3969 = vadd.f32 %v3945, 0.0
        %v3970 = vadd.f32 %v3946, 0.0
        %v3971 = vadd.f32 %v3947, 0.0
        %v3972 = vadd.f32 %v3948, 0.0
        %v3973 = vadd.f32 %v3949, 0.0
        %v3974 = vadd.f32 %v3950, 0.0
        %v3975 = vadd.f32 %v3951, 0.0
        %v3976 = vadd.f32 %v3952, 0.0
        %v3977 = vadd.f32 %v3953, 0.0
        %v3978 = vadd.f32 %v3954, 0.0
        %v3979 = vadd.f32 %v3955, 0.0
        %v3980 = vadd.f32 %v3956, 0.0
        %v3981 = vadd.f32 %v3957, 0.0
        %v3982 = vadd.f32 %v3958, 0.0
        %v3983 = vadd.f32 %v3959, 0.0
        %v3984 = vlaneseq
        %v3985 = vshrl.u32 %v3984, 7
        %v3986 = vsub.s32 1, %v3985
        %v3987 = vrot.slane %v907, %v3986
        %v3988 = vmul.f32 %v946, %v3987
        %v3989 = vmul.f32 %v947, %v3987
        %v3990 = vmul.f32 %v948, %v3987
        %v3991 = vmul.f32 %v949, %v3987
        %v3992 = vmul.f32 %v950, %v3987
        %v3993 = vmul.f32 %v951, %v3987
        %v3994 = vmul.f32 %v913, %v3987
        %v3995 = vmul.f32 %v914, %v3987
        %v3996 = vmul.f32 %v915, %v3987
        %v3997 = vmul.f32 %v916, %v3987
        %v3998 = vmul.f32 %v917, %v3987
        %v3999 = vmul.f32 %v918, %v3987
        %v4000 = vmul.f32 %v919, %v3987
        %v4001 = vmul.f32 %v920, %v3987
        %v4002 = vmul.f32 %v921, %v3987
        %v4003 = vmul.f32 %v922, %v3987
        %v4004 = vmul.f32 %v923, %v3987
        %v4005 = vmul.f32 %v924, %v3987
        %v4006 = vmul.f32 %v925, %v3987
        %v4007 = vmul.f32 %v926, %v3987
        %v4008 = vmul.f32 %v927, %v3987
        %v4009 = vmul.f32 %v928, %v3987
        %v4010 = vmul.f32 %v929, %v3987
        %v4011 = vmul.f32 %v930, %v3987
        %v4036 = vrot.slane %v3988, 3
        %v4037 = vrot.slane %v3989, 3
        %v4038 = vsel %vm1983, %v4036, %v4037
        %v4039 = vrot.slane %v3990, 3
        %v4040 = vsel %vm1983, %v4037, %v4039
        %v4041 = vrot.slane %v3991, 3
        %v4042 = vrot.slane %v3992, 3
        %v4043 = vsel %vm1983, %v4041, %v4042
        %v4044 = vrot.slane %v3993, 3
        %v4045 = vsel %vm1983, %v4042, %v4044
        %v4046 = vrot.slane %v3994, 3
        %v4047 = vrot.slane %v3995, 3
        %v4048 = vsel %vm1983, %v4046, %v4047
        %v4049 = vrot.slane %v3996, 3
        %v4050 = vsel %vm1983, %v4047, %v4049
        %v4051 = vrot.slane %v3997, 3
        %v4052 = vrot.slane %v3998, 3
        %v4053 = vsel %vm1983, %v4051, %v4052
        %v4054 = vrot.slane %v3999, 3
        %v4055 = vsel %vm1983, %v4052, %v4054
        %v4056 = vrot.slane %v4000, 3
        %v4057 = vrot.slane %v4001, 3
        %v4058 = vsel %vm1983, %v4056, %v4057
        %v4059 = vrot.slane %v4002, 3
        %v4060 = vsel %vm1983, %v4057, %v4059
        %v4061 = vrot.slane %v4003, 3
        %v4062 = vrot.slane %v4004, 3
        %v4063 = vsel %vm1983, %v4061, %v4062
        %v4064 = vrot.slane %v4005, 3
        %v4065 = vsel %vm1983, %v4062, %v4064
        %v4066 = vrot.slane %v4006, 3
        %v4067 = vrot.slane %v4007, 3
        %v4068 = vsel %vm1983, %v4066, %v4067
        %v4069 = vrot.slane %v4008, 3
        %v4070 = vsel %vm1983, %v4067, %v4069
        %v4071 = vrot.slane %v4009, 3
        %v4072 = vrot.slane %v4010, 3
        %v4073 = vsel %vm1983, %v4071, %v4072
        %v4074 = vrot.slane %v4011, 3
        %v4075 = vsel %vm1983, %v4072, %v4074
        %v4100 = vadd.f32 %v3960, %v4038
        %v4101 = vadd.f32 %v3961, %v4040
        %v4102 = vadd.f32 %v3962, %v4039
        %v4103 = vadd.f32 %v3963, %v4043
        %v4104 = vadd.f32 %v3964, %v4045
        %v4105 = vadd.f32 %v3965, %v4044
        %v4106 = vadd.f32 %v3966, %v4048
        %v4107 = vadd.f32 %v3967, %v4050
        %v4108 = vadd.f32 %v3968, %v4049
        %v4109 = vadd.f32 %v3969, %v4053
        %v4110 = vadd.f32 %v3970, %v4055
        %v4111 = vadd.f32 %v3971, %v4054
        %v4112 = vadd.f32 %v3972, %v4058
        %v4113 = vadd.f32 %v3973, %v4060
        %v4114 = vadd.f32 %v3974, %v4059
        %v4115 = vadd.f32 %v3975, %v4063
        %v4116 = vadd.f32 %v3976, %v4065
        %v4117 = vadd.f32 %v3977, %v4064
        %v4118 = vadd.f32 %v3978, %v4068
        %v4119 = vadd.f32 %v3979, %v4070
        %v4120 = vadd.f32 %v3980, %v4069
        %v4121 = vadd.f32 %v3981, %v4073
        %v4122 = vadd.f32 %v3982, %v4075
        %v4123 = vadd.f32 %v3983, %v4074
        %v4124 = vlaneseq
        %v4125 = vshrl.u32 %v4124, 7
        %v4126 = vsub.s32 2, %v4125
        %v4127 = vrot.slane %v907, %v4126
        %v4128 = vmul.f32 %v946, %v4127
        %v4129 = vmul.f32 %v947, %v4127
        %v4130 = vmul.f32 %v948, %v4127
        %v4131 = vmul.f32 %v949, %v4127
        %v4132 = vmul.f32 %v950, %v4127
        %v4133 = vmul.f32 %v951, %v4127
        %v4134 = vmul.f32 %v913, %v4127
        %v4135 = vmul.f32 %v914, %v4127
        %v4136 = vmul.f32 %v915, %v4127
        %v4137 = vmul.f32 %v916, %v4127
        %v4138 = vmul.f32 %v917, %v4127
        %v4139 = vmul.f32 %v918, %v4127
        %v4140 = vmul.f32 %v919, %v4127
        %v4141 = vmul.f32 %v920, %v4127
        %v4142 = vmul.f32 %v921, %v4127
        %v4143 = vmul.f32 %v922, %v4127
        %v4144 = vmul.f32 %v923, %v4127
        %v4145 = vmul.f32 %v924, %v4127
        %v4146 = vmul.f32 %v925, %v4127
        %v4147 = vmul.f32 %v926, %v4127
        %v4148 = vmul.f32 %v927, %v4127
        %v4149 = vmul.f32 %v928, %v4127
        %v4150 = vmul.f32 %v929, %v4127
        %v4151 = vmul.f32 %v930, %v4127
        %vm4176 = vcmask 1041408
        %v4177 = vrot.slane %v4128, 6
        %v4178 = vrot.slane %v4129, 6
        %v4179 = vsel %vm4176, %v4177, %v4178
        %v4180 = vrot.slane %v4130, 6
        %v4181 = vsel %vm4176, %v4178, %v4180
        %v4182 = vrot.slane %v4131, 6
        %v4183 = vrot.slane %v4132, 6
        %v4184 = vsel %vm4176, %v4182, %v4183
        %v4185 = vrot.slane %v4133, 6
        %v4186 = vsel %vm4176, %v4183, %v4185
        %v4187 = vrot.slane %v4134, 6
        %v4188 = vrot.slane %v4135, 6
        %v4189 = vsel %vm4176, %v4187, %v4188
        %v4190 = vrot.slane %v4136, 6
        %v4191 = vsel %vm4176, %v4188, %v4190
        %v4192 = vrot.slane %v4137, 6
        %v4193 = vrot.slane %v4138, 6
        %v4194 = vsel %vm4176, %v4192, %v4193
        %v4195 = vrot.slane %v4139, 6
        %v4196 = vsel %vm4176, %v4193, %v4195
        %v4197 = vrot.slane %v4140, 6
        %v4198 = vrot.slane %v4141, 6
        %v4199 = vsel %vm4176, %v4197, %v4198
        %v4200 = vrot.slane %v4142, 6
        %v4201 = vsel %vm4176, %v4198, %v4200
        %v4202 = vrot.slane %v4143, 6
        %v4203 = vrot.slane %v4144, 6
        %v4204 = vsel %vm4176, %v4202, %v4203
        %v4205 = vrot.slane %v4145, 6
        %v4206 = vsel %vm4176, %v4203, %v4205
        %v4207 = vrot.slane %v4146, 6
        %v4208 = vrot.slane %v4147, 6
        %v4209 = vsel %vm4176, %v4207, %v4208
        %v4210 = vrot.slane %v4148, 6
        %v4211 = vsel %vm4176, %v4208, %v4210
        %v4212 = vrot.slane %v4149, 6
        %v4213 = vrot.slane %v4150, 6
        %v4214 = vsel %vm4176, %v4212, %v4213
        %v4215 = vrot.slane %v4151, 6
        %v4216 = vsel %vm4176, %v4213, %v4215
        %v4241 = vadd.f32 %v4100, %v4179
        %v4242 = vadd.f32 %v4101, %v4181
        %v4243 = vadd.f32 %v4102, %v4180
        %v4244 = vadd.f32 %v4103, %v4184
        %v4245 = vadd.f32 %v4104, %v4186
        %v4246 = vadd.f32 %v4105, %v4185
        %v4247 = vadd.f32 %v4106, %v4189
        %v4248 = vadd.f32 %v4107, %v4191
        %v4249 = vadd.f32 %v4108, %v4190
        %v4250 = vadd.f32 %v4109, %v4194
        %v4251 = vadd.f32 %v4110, %v4196
        %v4252 = vadd.f32 %v4111, %v4195
        %v4253 = vadd.f32 %v4112, %v4199
        %v4254 = vadd.f32 %v4113, %v4201
        %v4255 = vadd.f32 %v4114, %v4200
        %v4256 = vadd.f32 %v4115, %v4204
        %v4257 = vadd.f32 %v4116, %v4206
        %v4258 = vadd.f32 %v4117, %v4205
        %v4259 = vadd.f32 %v4118, %v4209
        %v4260 = vadd.f32 %v4119, %v4211
        %v4261 = vadd.f32 %v4120, %v4210
        %v4262 = vadd.f32 %v4121, %v4214
        %v4263 = vadd.f32 %v4122, %v4216
        %v4264 = vadd.f32 %v4123, %v4215
        %v4265 = vlaneseq
        %v4266 = vshrl.u32 %v4265, 7
        %v4267 = vsub.s32 0, %v4266
        %v4268 = vrot.slane %v908, %v4267
        %v4269 = vmul.f32 %v916, %v4268
        %v4270 = vmul.f32 %v917, %v4268
        %v4271 = vmul.f32 %v918, %v4268
        %v4272 = vmul.f32 %v919, %v4268
        %v4273 = vmul.f32 %v920, %v4268
        %v4274 = vmul.f32 %v921, %v4268
        %v4275 = vmul.f32 %v922, %v4268
        %v4276 = vmul.f32 %v923, %v4268
        %v4277 = vmul.f32 %v924, %v4268
        %v4278 = vmul.f32 %v925, %v4268
        %v4279 = vmul.f32 %v926, %v4268
        %v4280 = vmul.f32 %v927, %v4268
        %v4281 = vmul.f32 %v928, %v4268
        %v4282 = vmul.f32 %v929, %v4268
        %v4283 = vmul.f32 %v930, %v4268
        %v4284 = vmul.f32 %v931, %v4268
        %v4285 = vmul.f32 %v932, %v4268
        %v4286 = vmul.f32 %v933, %v4268
        %v4287 = vmul.f32 %v934, %v4268
        %v4288 = vmul.f32 %v935, %v4268
        %v4289 = vmul.f32 %v936, %v4268
        %v4290 = vmul.f32 %v937, %v4268
        %v4291 = vmul.f32 %v938, %v4268
        %v4292 = vmul.f32 %v939, %v4268
        %v4293 = vadd.f32 %v4241, %v4269
        %v4294 = vadd.f32 %v4242, %v4270
        %v4295 = vadd.f32 %v4243, %v4271
        %v4296 = vadd.f32 %v4244, %v4272
        %v4297 = vadd.f32 %v4245, %v4273
        %v4298 = vadd.f32 %v4246, %v4274
        %v4299 = vadd.f32 %v4247, %v4275
        %v4300 = vadd.f32 %v4248, %v4276
        %v4301 = vadd.f32 %v4249, %v4277
        %v4302 = vadd.f32 %v4250, %v4278
        %v4303 = vadd.f32 %v4251, %v4279
        %v4304 = vadd.f32 %v4252, %v4280
        %v4305 = vadd.f32 %v4253, %v4281
        %v4306 = vadd.f32 %v4254, %v4282
        %v4307 = vadd.f32 %v4255, %v4283
        %v4308 = vadd.f32 %v4256, %v4284
        %v4309 = vadd.f32 %v4257, %v4285
        %v4310 = vadd.f32 %v4258, %v4286
        %v4311 = vadd.f32 %v4259, %v4287
        %v4312 = vadd.f32 %v4260, %v4288
        %v4313 = vadd.f32 %v4261, %v4289
        %v4314 = vadd.f32 %v4262, %v4290
        %v4315 = vadd.f32 %v4263, %v4291
        %v4316 = vadd.f32 %v4264, %v4292
        %v4317 = vlaneseq
        %v4318 = vshrl.u32 %v4317, 7
        %v4319 = vsub.s32 1, %v4318
        %v4320 = vrot.slane %v908, %v4319
        %v4321 = vmul.f32 %v916, %v4320
        %v4322 = vmul.f32 %v917, %v4320
        %v4323 = vmul.f32 %v918, %v4320
        %v4324 = vmul.f32 %v919, %v4320
        %v4325 = vmul.f32 %v920, %v4320
        %v4326 = vmul.f32 %v921, %v4320
        %v4327 = vmul.f32 %v922, %v4320
        %v4328 = vmul.f32 %v923, %v4320
        %v4329 = vmul.f32 %v924, %v4320
        %v4330 = vmul.f32 %v925, %v4320
        %v4331 = vmul.f32 %v926, %v4320
        %v4332 = vmul.f32 %v927, %v4320
        %v4333 = vmul.f32 %v928, %v4320
        %v4334 = vmul.f32 %v929, %v4320
        %v4335 = vmul.f32 %v930, %v4320
        %v4336 = vmul.f32 %v931, %v4320
        %v4337 = vmul.f32 %v932, %v4320
        %v4338 = vmul.f32 %v933, %v4320
        %v4339 = vmul.f32 %v934, %v4320
        %v4340 = vmul.f32 %v935, %v4320
        %v4341 = vmul.f32 %v936, %v4320
        %v4342 = vmul.f32 %v937, %v4320
        %v4343 = vmul.f32 %v938, %v4320
        %v4344 = vmul.f32 %v939, %v4320
        %v4369 = vrot.slane %v4321, 3
        %v4370 = vrot.slane %v4322, 3
        %v4371 = vsel %vm1983, %v4369, %v4370
        %v4372 = vrot.slane %v4323, 3
        %v4373 = vsel %vm1983, %v4370, %v4372
        %v4374 = vrot.slane %v4324, 3
        %v4375 = vrot.slane %v4325, 3
        %v4376 = vsel %vm1983, %v4374, %v4375
        %v4377 = vrot.slane %v4326, 3
        %v4378 = vsel %vm1983, %v4375, %v4377
        %v4379 = vrot.slane %v4327, 3
        %v4380 = vrot.slane %v4328, 3
        %v4381 = vsel %vm1983, %v4379, %v4380
        %v4382 = vrot.slane %v4329, 3
        %v4383 = vsel %vm1983, %v4380, %v4382
        %v4384 = vrot.slane %v4330, 3
        %v4385 = vrot.slane %v4331, 3
        %v4386 = vsel %vm1983, %v4384, %v4385
        %v4387 = vrot.slane %v4332, 3
        %v4388 = vsel %vm1983, %v4385, %v4387
        %v4389 = vrot.slane %v4333, 3
        %v4390 = vrot.slane %v4334, 3
        %v4391 = vsel %vm1983, %v4389, %v4390
        %v4392 = vrot.slane %v4335, 3
        %v4393 = vsel %vm1983, %v4390, %v4392
        %v4394 = vrot.slane %v4336, 3
        %v4395 = vrot.slane %v4337, 3
        %v4396 = vsel %vm1983, %v4394, %v4395
        %v4397 = vrot.slane %v4338, 3
        %v4398 = vsel %vm1983, %v4395, %v4397
        %v4399 = vrot.slane %v4339, 3
        %v4400 = vrot.slane %v4340, 3
        %v4401 = vsel %vm1983, %v4399, %v4400
        %v4402 = vrot.slane %v4341, 3
        %v4403 = vsel %vm1983, %v4400, %v4402
        %v4404 = vrot.slane %v4342, 3
        %v4405 = vrot.slane %v4343, 3
        %v4406 = vsel %vm1983, %v4404, %v4405
        %v4407 = vrot.slane %v4344, 3
        %v4408 = vsel %vm1983, %v4405, %v4407
        %v4433 = vadd.f32 %v4293, %v4371
        %v4434 = vadd.f32 %v4294, %v4373
        %v4435 = vadd.f32 %v4295, %v4372
        %v4436 = vadd.f32 %v4296, %v4376
        %v4437 = vadd.f32 %v4297, %v4378
        %v4438 = vadd.f32 %v4298, %v4377
        %v4439 = vadd.f32 %v4299, %v4381
        %v4440 = vadd.f32 %v4300, %v4383
        %v4441 = vadd.f32 %v4301, %v4382
        %v4442 = vadd.f32 %v4302, %v4386
        %v4443 = vadd.f32 %v4303, %v4388
        %v4444 = vadd.f32 %v4304, %v4387
        %v4445 = vadd.f32 %v4305, %v4391
        %v4446 = vadd.f32 %v4306, %v4393
        %v4447 = vadd.f32 %v4307, %v4392
        %v4448 = vadd.f32 %v4308, %v4396
        %v4449 = vadd.f32 %v4309, %v4398
        %v4450 = vadd.f32 %v4310, %v4397
        %v4451 = vadd.f32 %v4311, %v4401
        %v4452 = vadd.f32 %v4312, %v4403
        %v4453 = vadd.f32 %v4313, %v4402
        %v4454 = vadd.f32 %v4314, %v4406
        %v4455 = vadd.f32 %v4315, %v4408
        %v4456 = vadd.f32 %v4316, %v4407
        %v4457 = vlaneseq
        %v4458 = vshrl.u32 %v4457, 7
        %v4459 = vsub.s32 2, %v4458
        %v4460 = vrot.slane %v908, %v4459
        %v4461 = vmul.f32 %v916, %v4460
        %v4462 = vmul.f32 %v917, %v4460
        %v4463 = vmul.f32 %v918, %v4460
        %v4464 = vmul.f32 %v919, %v4460
        %v4465 = vmul.f32 %v920, %v4460
        %v4466 = vmul.f32 %v921, %v4460
        %v4467 = vmul.f32 %v922, %v4460
        %v4468 = vmul.f32 %v923, %v4460
        %v4469 = vmul.f32 %v924, %v4460
        %v4470 = vmul.f32 %v925, %v4460
        %v4471 = vmul.f32 %v926, %v4460
        %v4472 = vmul.f32 %v927, %v4460
        %v4473 = vmul.f32 %v928, %v4460
        %v4474 = vmul.f32 %v929, %v4460
        %v4475 = vmul.f32 %v930, %v4460
        %v4476 = vmul.f32 %v931, %v4460
        %v4477 = vmul.f32 %v932, %v4460
        %v4478 = vmul.f32 %v933, %v4460
        %v4479 = vmul.f32 %v934, %v4460
        %v4480 = vmul.f32 %v935, %v4460
        %v4481 = vmul.f32 %v936, %v4460
        %v4482 = vmul.f32 %v937, %v4460
        %v4483 = vmul.f32 %v938, %v4460
        %v4484 = vmul.f32 %v939, %v4460
        %v4509 = vrot.slane %v4461, 6
        %v4510 = vrot.slane %v4462, 6
        %v4511 = vsel %vm4176, %v4509, %v4510
        %v4512 = vrot.slane %v4463, 6
        %v4513 = vsel %vm4176, %v4510, %v4512
        %v4514 = vrot.slane %v4464, 6
        %v4515 = vrot.slane %v4465, 6
        %v4516 = vsel %vm4176, %v4514, %v4515
        %v4517 = vrot.slane %v4466, 6
        %v4518 = vsel %vm4176, %v4515, %v4517
        %v4519 = vrot.slane %v4467, 6
        %v4520 = vrot.slane %v4468, 6
        %v4521 = vsel %vm4176, %v4519, %v4520
        %v4522 = vrot.slane %v4469, 6
        %v4523 = vsel %vm4176, %v4520, %v4522
        %v4524 = vrot.slane %v4470, 6
        %v4525 = vrot.slane %v4471, 6
        %v4526 = vsel %vm4176, %v4524, %v4525
        %v4527 = vrot.slane %v4472, 6
        %v4528 = vsel %vm4176, %v4525, %v4527
        %v4529 = vrot.slane %v4473, 6
        %v4530 = vrot.slane %v4474, 6
        %v4531 = vsel %vm4176, %v4529, %v4530
        %v4532 = vrot.slane %v4475, 6
        %v4533 = vsel %vm4176, %v4530, %v4532
        %v4534 = vrot.slane %v4476, 6
        %v4535 = vrot.slane %v4477, 6
        %v4536 = vsel %vm4176, %v4534, %v4535
        %v4537 = vrot.slane %v4478, 6
        %v4538 = vsel %vm4176, %v4535, %v4537
        %v4539 = vrot.slane %v4479, 6
        %v4540 = vrot.slane %v4480, 6
        %v4541 = vsel %vm4176, %v4539, %v4540
        %v4542 = vrot.slane %v4481, 6
        %v4543 = vsel %vm4176, %v4540, %v4542
        %v4544 = vrot.slane %v4482, 6
        %v4545 = vrot.slane %v4483, 6
        %v4546 = vsel %vm4176, %v4544, %v4545
        %v4547 = vrot.slane %v4484, 6
        %v4548 = vsel %vm4176, %v4545, %v4547
        %v4573 = vadd.f32 %v4433, %v4511
        %v4574 = vadd.f32 %v4434, %v4513
        %v4575 = vadd.f32 %v4435, %v4512
        %v4576 = vadd.f32 %v4436, %v4516
        %v4577 = vadd.f32 %v4437, %v4518
        %v4578 = vadd.f32 %v4438, %v4517
        %v4579 = vadd.f32 %v4439, %v4521
        %v4580 = vadd.f32 %v4440, %v4523
        %v4581 = vadd.f32 %v4441, %v4522
        %v4582 = vadd.f32 %v4442, %v4526
        %v4583 = vadd.f32 %v4443, %v4528
        %v4584 = vadd.f32 %v4444, %v4527
        %v4585 = vadd.f32 %v4445, %v4531
        %v4586 = vadd.f32 %v4446, %v4533
        %v4587 = vadd.f32 %v4447, %v4532
        %v4588 = vadd.f32 %v4448, %v4536
        %v4589 = vadd.f32 %v4449, %v4538
        %v4590 = vadd.f32 %v4450, %v4537
        %v4591 = vadd.f32 %v4451, %v4541
        %v4592 = vadd.f32 %v4452, %v4543
        %v4593 = vadd.f32 %v4453, %v4542
        %v4594 = vadd.f32 %v4454, %v4546
        %v4595 = vadd.f32 %v4455, %v4548
        %v4596 = vadd.f32 %v4456, %v4547
        %v4597 = vlaneseq
        %v4598 = vshrl.u32 %v4597, 7
        %v4599 = vsub.s32 0, %v4598
        %v4600 = vrot.slane %v909, %v4599
        %v4601 = vmul.f32 %v925, %v4600
        %v4602 = vmul.f32 %v926, %v4600
        %v4603 = vmul.f32 %v927, %v4600
        %v4604 = vmul.f32 %v928, %v4600
        %v4605 = vmul.f32 %v929, %v4600
        %v4606 = vmul.f32 %v930, %v4600
        %v4607 = vmul.f32 %v931, %v4600
        %v4608 = vmul.f32 %v932, %v4600
        %v4609 = vmul.f32 %v933, %v4600
        %v4610 = vmul.f32 %v934, %v4600
        %v4611 = vmul.f32 %v935, %v4600
        %v4612 = vmul.f32 %v936, %v4600
        %v4613 = vmul.f32 %v937, %v4600
        %v4614 = vmul.f32 %v938, %v4600
        %v4615 = vmul.f32 %v939, %v4600
        %v4616 = vmul.f32 %v940, %v4600
        %v4617 = vmul.f32 %v941, %v4600
        %v4618 = vmul.f32 %v942, %v4600
        %v4619 = vmul.f32 %v952, %v4600
        %v4620 = vmul.f32 %v953, %v4600
        %v4621 = vmul.f32 %v954, %v4600
        %v4622 = vmul.f32 %v955, %v4600
        %v4623 = vmul.f32 %v956, %v4600
        %v4624 = vmul.f32 %v957, %v4600
        %v4625 = vadd.f32 %v4573, %v4601
        %v4626 = vadd.f32 %v4574, %v4602
        %v4627 = vadd.f32 %v4575, %v4603
        %v4628 = vadd.f32 %v4576, %v4604
        %v4629 = vadd.f32 %v4577, %v4605
        %v4630 = vadd.f32 %v4578, %v4606
        %v4631 = vadd.f32 %v4579, %v4607
        %v4632 = vadd.f32 %v4580, %v4608
        %v4633 = vadd.f32 %v4581, %v4609
        %v4634 = vadd.f32 %v4582, %v4610
        %v4635 = vadd.f32 %v4583, %v4611
        %v4636 = vadd.f32 %v4584, %v4612
        %v4637 = vadd.f32 %v4585, %v4613
        %v4638 = vadd.f32 %v4586, %v4614
        %v4639 = vadd.f32 %v4587, %v4615
        %v4640 = vadd.f32 %v4588, %v4616
        %v4641 = vadd.f32 %v4589, %v4617
        %v4642 = vadd.f32 %v4590, %v4618
        %v4643 = vadd.f32 %v4591, %v4619
        %v4644 = vadd.f32 %v4592, %v4620
        %v4645 = vadd.f32 %v4593, %v4621
        %v4646 = vadd.f32 %v4594, %v4622
        %v4647 = vadd.f32 %v4595, %v4623
        %v4648 = vadd.f32 %v4596, %v4624
        %v4649 = vlaneseq
        %v4650 = vshrl.u32 %v4649, 7
        %v4651 = vsub.s32 1, %v4650
        %v4652 = vrot.slane %v909, %v4651
        %v4653 = vmul.f32 %v925, %v4652
        %v4654 = vmul.f32 %v926, %v4652
        %v4655 = vmul.f32 %v927, %v4652
        %v4656 = vmul.f32 %v928, %v4652
        %v4657 = vmul.f32 %v929, %v4652
        %v4658 = vmul.f32 %v930, %v4652
        %v4659 = vmul.f32 %v931, %v4652
        %v4660 = vmul.f32 %v932, %v4652
        %v4661 = vmul.f32 %v933, %v4652
        %v4662 = vmul.f32 %v934, %v4652
        %v4663 = vmul.f32 %v935, %v4652
        %v4664 = vmul.f32 %v936, %v4652
        %v4665 = vmul.f32 %v937, %v4652
        %v4666 = vmul.f32 %v938, %v4652
        %v4667 = vmul.f32 %v939, %v4652
        %v4668 = vmul.f32 %v940, %v4652
        %v4669 = vmul.f32 %v941, %v4652
        %v4670 = vmul.f32 %v942, %v4652
        %v4671 = vmul.f32 %v952, %v4652
        %v4672 = vmul.f32 %v953, %v4652
        %v4673 = vmul.f32 %v954, %v4652
        %v4674 = vmul.f32 %v955, %v4652
        %v4675 = vmul.f32 %v956, %v4652
        %v4676 = vmul.f32 %v957, %v4652
        %v4701 = vrot.slane %v4653, 3
        %v4702 = vrot.slane %v4654, 3
        %v4703 = vsel %vm1983, %v4701, %v4702
        %v4704 = vrot.slane %v4655, 3
        %v4705 = vsel %vm1983, %v4702, %v4704
        %v4706 = vrot.slane %v4656, 3
        %v4707 = vrot.slane %v4657, 3
        %v4708 = vsel %vm1983, %v4706, %v4707
        %v4709 = vrot.slane %v4658, 3
        %v4710 = vsel %vm1983, %v4707, %v4709
        %v4711 = vrot.slane %v4659, 3
        %v4712 = vrot.slane %v4660, 3
        %v4713 = vsel %vm1983, %v4711, %v4712
        %v4714 = vrot.slane %v4661, 3
        %v4715 = vsel %vm1983, %v4712, %v4714
        %v4716 = vrot.slane %v4662, 3
        %v4717 = vrot.slane %v4663, 3
        %v4718 = vsel %vm1983, %v4716, %v4717
        %v4719 = vrot.slane %v4664, 3
        %v4720 = vsel %vm1983, %v4717, %v4719
        %v4721 = vrot.slane %v4665, 3
        %v4722 = vrot.slane %v4666, 3
        %v4723 = vsel %vm1983, %v4721, %v4722
        %v4724 = vrot.slane %v4667, 3
        %v4725 = vsel %vm1983, %v4722, %v4724
        %v4726 = vrot.slane %v4668, 3
        %v4727 = vrot.slane %v4669, 3
        %v4728 = vsel %vm1983, %v4726, %v4727
        %v4729 = vrot.slane %v4670, 3
        %v4730 = vsel %vm1983, %v4727, %v4729
        %v4731 = vrot.slane %v4671, 3
        %v4732 = vrot.slane %v4672, 3
        %v4733 = vsel %vm1983, %v4731, %v4732
        %v4734 = vrot.slane %v4673, 3
        %v4735 = vsel %vm1983, %v4732, %v4734
        %v4736 = vrot.slane %v4674, 3
        %v4737 = vrot.slane %v4675, 3
        %v4738 = vsel %vm1983, %v4736, %v4737
        %v4739 = vrot.slane %v4676, 3
        %v4740 = vsel %vm1983, %v4737, %v4739
        %v4765 = vadd.f32 %v4625, %v4703
        %v4766 = vadd.f32 %v4626, %v4705
        %v4767 = vadd.f32 %v4627, %v4704
        %v4768 = vadd.f32 %v4628, %v4708
        %v4769 = vadd.f32 %v4629, %v4710
        %v4770 = vadd.f32 %v4630, %v4709
        %v4771 = vadd.f32 %v4631, %v4713
        %v4772 = vadd.f32 %v4632, %v4715
        %v4773 = vadd.f32 %v4633, %v4714
        %v4774 = vadd.f32 %v4634, %v4718
        %v4775 = vadd.f32 %v4635, %v4720
        %v4776 = vadd.f32 %v4636, %v4719
        %v4777 = vadd.f32 %v4637, %v4723
        %v4778 = vadd.f32 %v4638, %v4725
        %v4779 = vadd.f32 %v4639, %v4724
        %v4780 = vadd.f32 %v4640, %v4728
        %v4781 = vadd.f32 %v4641, %v4730
        %v4782 = vadd.f32 %v4642, %v4729
        %v4783 = vadd.f32 %v4643, %v4733
        %v4784 = vadd.f32 %v4644, %v4735
        %v4785 = vadd.f32 %v4645, %v4734
        %v4786 = vadd.f32 %v4646, %v4738
        %v4787 = vadd.f32 %v4647, %v4740
        %v4788 = vadd.f32 %v4648, %v4739
        %v4789 = vlaneseq
        %v4790 = vshrl.u32 %v4789, 7
        %v4791 = vsub.s32 2, %v4790
        %v4792 = vrot.slane %v909, %v4791
        %v4793 = vmul.f32 %v925, %v4792
        %v4794 = vmul.f32 %v926, %v4792
        %v4795 = vmul.f32 %v927, %v4792
        %v4796 = vmul.f32 %v928, %v4792
        %v4797 = vmul.f32 %v929, %v4792
        %v4798 = vmul.f32 %v930, %v4792
        %v4799 = vmul.f32 %v931, %v4792
        %v4800 = vmul.f32 %v932, %v4792
        %v4801 = vmul.f32 %v933, %v4792
        %v4802 = vmul.f32 %v934, %v4792
        %v4803 = vmul.f32 %v935, %v4792
        %v4804 = vmul.f32 %v936, %v4792
        %v4805 = vmul.f32 %v937, %v4792
        %v4806 = vmul.f32 %v938, %v4792
        %v4807 = vmul.f32 %v939, %v4792
        %v4808 = vmul.f32 %v940, %v4792
        %v4809 = vmul.f32 %v941, %v4792
        %v4810 = vmul.f32 %v942, %v4792
        %v4811 = vmul.f32 %v952, %v4792
        %v4812 = vmul.f32 %v953, %v4792
        %v4813 = vmul.f32 %v954, %v4792
        %v4814 = vmul.f32 %v955, %v4792
        %v4815 = vmul.f32 %v956, %v4792
        %v4816 = vmul.f32 %v957, %v4792
        %v4841 = vrot.slane %v4793, 6
        %v4842 = vrot.slane %v4794, 6
        %v4843 = vsel %vm4176, %v4841, %v4842
        %v4844 = vrot.slane %v4795, 6
        %v4845 = vsel %vm4176, %v4842, %v4844
        %v4846 = vrot.slane %v4796, 6
        %v4847 = vrot.slane %v4797, 6
        %v4848 = vsel %vm4176, %v4846, %v4847
        %v4849 = vrot.slane %v4798, 6
        %v4850 = vsel %vm4176, %v4847, %v4849
        %v4851 = vrot.slane %v4799, 6
        %v4852 = vrot.slane %v4800, 6
        %v4853 = vsel %vm4176, %v4851, %v4852
        %v4854 = vrot.slane %v4801, 6
        %v4855 = vsel %vm4176, %v4852, %v4854
        %v4856 = vrot.slane %v4802, 6
        %v4857 = vrot.slane %v4803, 6
        %v4858 = vsel %vm4176, %v4856, %v4857
        %v4859 = vrot.slane %v4804, 6
        %v4860 = vsel %vm4176, %v4857, %v4859
        %v4861 = vrot.slane %v4805, 6
        %v4862 = vrot.slane %v4806, 6
        %v4863 = vsel %vm4176, %v4861, %v4862
        %v4864 = vrot.slane %v4807, 6
        %v4865 = vsel %vm4176, %v4862, %v4864
        %v4866 = vrot.slane %v4808, 6
        %v4867 = vrot.slane %v4809, 6
        %v4868 = vsel %vm4176, %v4866, %v4867
        %v4869 = vrot.slane %v4810, 6
        %v4870 = vsel %vm4176, %v4867, %v4869
        %v4871 = vrot.slane %v4811, 6
        %v4872 = vrot.slane %v4812, 6
        %v4873 = vsel %vm4176, %v4871, %v4872
        %v4874 = vrot.slane %v4813, 6
        %v4875 = vsel %vm4176, %v4872, %v4874
        %v4876 = vrot.slane %v4814, 6
        %v4877 = vrot.slane %v4815, 6
        %v4878 = vsel %vm4176, %v4876, %v4877
        %v4879 = vrot.slane %v4816, 6
        %v4880 = vsel %vm4176, %v4877, %v4879
        %v4905 = vadd.f32 %v4765, %v4843
        %v4906 = vadd.f32 %v4766, %v4845
        %v4907 = vadd.f32 %v4767, %v4844
        %v4908 = vadd.f32 %v4768, %v4848
        %v4909 = vadd.f32 %v4769, %v4850
        %v4910 = vadd.f32 %v4770, %v4849
        %v4911 = vadd.f32 %v4771, %v4853
        %v4912 = vadd.f32 %v4772, %v4855
        %v4913 = vadd.f32 %v4773, %v4854
        %v4914 = vadd.f32 %v4774, %v4858
        %v4915 = vadd.f32 %v4775, %v4860
        %v4916 = vadd.f32 %v4776, %v4859
        %v4917 = vadd.f32 %v4777, %v4863
        %v4918 = vadd.f32 %v4778, %v4865
        %v4919 = vadd.f32 %v4779, %v4864
        %v4920 = vadd.f32 %v4780, %v4868
        %v4921 = vadd.f32 %v4781, %v4870
        %v4922 = vadd.f32 %v4782, %v4869
        %v4923 = vadd.f32 %v4783, %v4873
        %v4924 = vadd.f32 %v4784, %v4875
        %v4925 = vadd.f32 %v4785, %v4874
        %v4926 = vadd.f32 %v4786, %v4878
        %v4927 = vadd.f32 %v4787, %v4880
        %v4928 = vadd.f32 %v4788, %v4879
        %v4953 = vrot.slane %v4905, 1
        %v4954 = vrot.slane %v4906, 1
        %v4955 = vsel %vm1065, %v4953, %v4954
        %v4956 = vrot.slane %v4907, 1
        %v4957 = vsel %vm1065, %v4954, %v4956
        %v4958 = vrot.slane %v4908, 1
        %v4959 = vrot.slane %v4909, 1
        %v4960 = vsel %vm1065, %v4958, %v4959
        %v4961 = vrot.slane %v4910, 1
        %v4962 = vsel %vm1065, %v4959, %v4961
        %v4963 = vrot.slane %v4911, 1
        %v4964 = vrot.slane %v4912, 1
        %v4965 = vsel %vm1065, %v4963, %v4964
        %v4966 = vrot.slane %v4913, 1
        %v4967 = vsel %vm1065, %v4964, %v4966
        %v4968 = vrot.slane %v4914, 1
        %v4969 = vrot.slane %v4915, 1
        %v4970 = vsel %vm1065, %v4968, %v4969
        %v4971 = vrot.slane %v4916, 1
        %v4972 = vsel %vm1065, %v4969, %v4971
        %v4973 = vrot.slane %v4917, 1
        %v4974 = vrot.slane %v4918, 1
        %v4975 = vsel %vm1065, %v4973, %v4974
        %v4976 = vrot.slane %v4919, 1
        %v4977 = vsel %vm1065, %v4974, %v4976
        %v4978 = vrot.slane %v4920, 1
        %v4979 = vrot.slane %v4921, 1
        %v4980 = vsel %vm1065, %v4978, %v4979
        %v4981 = vrot.slane %v4922, 1
        %v4982 = vsel %vm1065, %v4979, %v4981
        %v4983 = vrot.slane %v4923, 1
        %v4984 = vrot.slane %v4924, 1
        %v4985 = vsel %vm1065, %v4983, %v4984
        %v4986 = vrot.slane %v4925, 1
        %v4987 = vsel %vm1065, %v4984, %v4986
        %v4988 = vrot.slane %v4926, 1
        %v4989 = vrot.slane %v4927, 1
        %v4990 = vsel %vm1065, %v4988, %v4989
        %v4991 = vrot.slane %v4928, 1
        %v4992 = vsel %vm1065, %v4989, %v4991
        %v5009 = vpack.c.bf16 %v4957, %v4955
        %v5010 = vpack.c.bf16 %v4962, %v4960
        %v5011 = vpack.c.bf16 %v4967, %v4965
        %v5012 = vpack.c.bf16 %v4972, %v4970
        %v5013 = vpack.c.bf16 %v4977, %v4975
        %v5014 = vpack.c.bf16 %v4982, %v4980
        %v5015 = vpack.c.bf16 %v4987, %v4985
        %v5016 = vpack.c.bf16 %v4992, %v4990
        %s5017 = scalar_lea.vmem [#allocation8], 128
        %v5018 = vld [vmem:[%s5017] sm:$0xf]
        %v5019 = vld [vmem:[%s5017 + $0x4] sm:$0xf]
        %v5020 = vld [vmem:[%s5017 + $0x8] sm:$0xf]
        %v5021 = vld [vmem:[%s5017 + $0xc] sm:$0xf]
        %v5022 = vld [vmem:[%s5017 + $0x10] sm:$0xf]
        %v5023 = vld [vmem:[%s5017 + $0x14] sm:$0xf]
        %v5024 = vld [vmem:[%s5017 + $0x18] sm:$0xf]
        %v5025 = vld [vmem:[%s5017 + $0x1c] sm:$0xf]
        %v5026 = vld [vmem:[%s5017 + $0x20] sm:$0xf]
        %v5027 = vld [vmem:[%s5017 + $0x24] sm:$0xf]
        %v5028 = vld [vmem:[%s5017 + $0x28] sm:$0xf]
        %v5029 = vld [vmem:[%s5017 + $0x2c] sm:$0xf]
        %v5030 = vld [vmem:[%s5017 + $0x30] sm:$0xf]
        %v5031 = vld [vmem:[%s5017 + $0x34] sm:$0xf]
        %v5032 = vld [vmem:[%s5017 + $0x38] sm:$0xf]
        %v5033 = vld [vmem:[%s5017 + $0x3c] sm:$0xf]
        %v5034 = vlaneseq
        %v5035 = vshrl.u32 %v5034, 7
        %v5036 = vsub.s32 3, %v5035
        %v5037 = vrot.slane %v422, %v5036
        %v5054 = vunpack.c.l.b16 %v5018
        %v5055 = vunpack.c.l.b16 %v5019
        %v5056 = vunpack.c.l.b16 %v5020
        %v5057 = vunpack.c.l.b16 %v5021
        %v5058 = vunpack.c.l.b16 %v5022
        %v5059 = vunpack.c.l.b16 %v5023
        %v5060 = vunpack.c.l.b16 %v5024
        %v5061 = vunpack.c.l.b16 %v5025
        %v5062 = vunpack.c.l.b16 %v5026
        %v5063 = vunpack.c.l.b16 %v5027
        %v5064 = vunpack.c.l.b16 %v5028
        %v5065 = vunpack.c.l.b16 %v5029
        %v5066 = vunpack.c.l.b16 %v5030
        %v5067 = vunpack.c.l.b16 %v5031
        %v5068 = vunpack.c.l.b16 %v5032
        %v5069 = vunpack.c.l.b16 %v5033
        %v5070 = vpack.c.b16 %v5055, %v5054
        %v5071 = vpack.c.b16 %v5057, %v5056
        %v5072 = vpack.c.b16 %v5059, %v5058
        %v5073 = vpack.c.b16 %v5061, %v5060
        %v5074 = vpack.c.b16 %v5063, %v5062
        %v5075 = vpack.c.b16 %v5065, %v5064
        %v5076 = vpack.c.b16 %v5067, %v5066
        %v5077 = vpack.c.b16 %v5069, %v5068
        %5086 = vmatprep.subr.bf16.mxu0 0
        %5087 = vmatpush1.bf16.msra.mxu0 %v5070
        %5088 = vmatprep.subr.bf16.mxu0 0
        %5089 = vmatpush1.bf16.msra.mxu0 %v5071
        %5090 = vmatprep.subr.bf16.mxu0 0
        %5091 = vmatpush1.bf16.msra.mxu0 %v5072
        %5092 = vmatprep.subr.bf16.mxu0 0
        %5093 = vmatpush1.bf16.msra.mxu0 %v5073
        %5094 = vmatprep.subr.bf16.mxu0 0
        %5095 = vmatpush1.bf16.msra.mxu0 %v5074
        %5096 = vmatprep.subr.bf16.mxu0 0
        %5097 = vmatpush1.bf16.msra.mxu0 %v5075
        %5098 = vmatprep.subr.bf16.mxu0 0
        %5099 = vmatpush1.bf16.msra.mxu0 %v5076
        %5100 = vmatprep.subr.bf16.mxu0 0
        %5101 = vmatpush1.bf16.msra.mxu0 %v5077
        %5102 = vmatprep.subr.bf16.mxu0 0
        %5103 = vmatpush1.bf16.msra.mxu0 0
        %5104 = vmatprep.subr.bf16.mxu0 0
        %5105 = vmatpush1.bf16.msra.mxu0 0
        %5106 = vmatprep.subr.bf16.mxu0 0
        %5107 = vmatpush1.bf16.msra.mxu0 0
        %5108 = vmatprep.subr.bf16.mxu0 0
        %5109 = vmatpush1.bf16.msra.mxu0 0
        %5110 = vmatprep.subr.bf16.mxu0 0
        %5111 = vmatpush1.bf16.msra.mxu0 0
        %5112 = vmatprep.subr.bf16.mxu0 0
        %5113 = vmatpush1.bf16.msra.mxu0 0
        %5114 = vmatprep.subr.bf16.mxu0 0
        %5115 = vmatpush1.bf16.msra.mxu0 0
        %5116 = vmatprep.subr.bf16.mxu0 0
        %5117 = vmatpush1.bf16.msra.mxu0 0
        %5118 = vmatprep.mubr.bf16.mxu0 0
        %5119 = vmatmul.mubr.bf16.gmra.mrb[0].mxu0 %v5009
        %v5120 = vpop.f32.mrb[0].mxu0
        %v5121 = vadd.f32 %v5037, %v5120
        %v5122 = vpop.f32.mrb[0].mxu0
        %v5123 = vpop.f32.mrb[0].mxu0
        %v5124 = vadd.f32 %v5037, %v5123
        %v5125 = vpop.f32.mrb[0].mxu0
        %5126 = vmatprep.mubr.bf16.mxu0 0
        %5127 = vmatmul.mubr.bf16.gmra.mrb[0].mxu0 %v5010
        %v5128 = vpop.f32.mrb[0].mxu0
        %v5129 = vadd.f32 %v5037, %v5128
        %v5130 = vpop.f32.mrb[0].mxu0
        %v5131 = vpop.f32.mrb[0].mxu0
        %v5132 = vadd.f32 %v5037, %v5131
        %v5133 = vpop.f32.mrb[0].mxu0
        %5134 = vmatprep.mubr.bf16.mxu0 0
        %5135 = vmatmul.mubr.bf16.gmra.mrb[0].mxu0 %v5011
        %v5136 = vpop.f32.mrb[0].mxu0
        %v5137 = vadd.f32 %v5037, %v5136
        %v5138 = vpop.f32.mrb[0].mxu0
        %v5139 = vpop.f32.mrb[0].mxu0
        %v5140 = vadd.f32 %v5037, %v5139
        %v5141 = vpop.f32.mrb[0].mxu0
        %5142 = vmatprep.mubr.bf16.mxu0 0
        %5143 = vmatmul.mubr.bf16.gmra.mrb[0].mxu0 %v5012
        %v5144 = vpop.f32.mrb[0].mxu0
        %v5145 = vadd.f32 %v5037, %v5144
        %v5146 = vpop.f32.mrb[0].mxu0
        %v5147 = vpop.f32.mrb[0].mxu0
        %v5148 = vadd.f32 %v5037, %v5147
        %v5149 = vpop.f32.mrb[0].mxu0
        %5150 = vmatprep.mubr.bf16.mxu0 0
        %5151 = vmatmul.mubr.bf16.gmra.mrb[0].mxu0 %v5013
        %v5152 = vpop.f32.mrb[0].mxu0
        %v5153 = vadd.f32 %v5037, %v5152
        %v5154 = vpop.f32.mrb[0].mxu0
        %v5155 = vpop.f32.mrb[0].mxu0
        %v5156 = vadd.f32 %v5037, %v5155
        %v5157 = vpop.f32.mrb[0].mxu0
        %5158 = vmatprep.mubr.bf16.mxu0 0
        %5159 = vmatmul.mubr.bf16.gmra.mrb[0].mxu0 %v5014
        %v5160 = vpop.f32.mrb[0].mxu0
        %v5161 = vadd.f32 %v5037, %v5160
        %v5162 = vpop.f32.mrb[0].mxu0
        %v5163 = vpop.f32.mrb[0].mxu0
        %v5164 = vadd.f32 %v5037, %v5163
        %v5165 = vpop.f32.mrb[0].mxu0
        %5166 = vmatprep.mubr.bf16.mxu0 0
        %5167 = vmatmul.mubr.bf16.gmra.mrb[0].mxu0 %v5015
        %v5168 = vpop.f32.mrb[0].mxu0
        %v5169 = vadd.f32 %v5037, %v5168
        %v5170 = vpop.f32.mrb[0].mxu0
        %v5171 = vpop.f32.mrb[0].mxu0
        %v5172 = vadd.f32 %v5037, %v5171
        %v5173 = vpop.f32.mrb[0].mxu0
        %5174 = vmatprep.mubr.bf16.mxu0 0
        %5175 = vmatmul.mubr.bf16.gmra.mrb[0].mxu0 %v5016
        %v5176 = vpop.f32.mrb[0].mxu0
        %v5177 = vadd.f32 %v5037, %v5176
        %v5178 = vpop.f32.mrb[0].mxu0
        %v5179 = vpop.f32.mrb[0].mxu0
        %v5180 = vadd.f32 %v5037, %v5179
        %v5181 = vpop.f32.mrb[0].mxu0
        %5182 = vdwg.mxu0
        %v5183 = vmax.f32 %v5121, 0.0
        %v5184 = vmax.f32 %v5124, 0.0
        %v5185 = vmax.f32 %v5129, 0.0
        %v5186 = vmax.f32 %v5132, 0.0
        %v5187 = vmax.f32 %v5137, 0.0
        %v5188 = vmax.f32 %v5140, 0.0
        %v5189 = vmax.f32 %v5145, 0.0
        %v5190 = vmax.f32 %v5148, 0.0
        %v5191 = vmax.f32 %v5153, 0.0
        %v5192 = vmax.f32 %v5156, 0.0
        %v5193 = vmax.f32 %v5161, 0.0
        %v5194 = vmax.f32 %v5164, 0.0
        %v5195 = vmax.f32 %v5169, 0.0
        %v5196 = vmax.f32 %v5172, 0.0
        %v5197 = vmax.f32 %v5177, 0.0
        %v5198 = vmax.f32 %v5180, 0.0
        %v5199 = vld [vmem:[#allocation3] sm:$0xff]
        %v5200 = vld [vmem:[#allocation3 + $0x8] sm:$0xff]
        %v5201 = vld [vmem:[#allocation3 + $0x10] sm:$0xff]
        %v5202 = vld [vmem:[#allocation3 + $0x18] sm:$0xff]
        %v5203 = vld [vmem:[#allocation3 + $0x20] sm:$0xff]
        %v5204 = vld [vmem:[#allocation3 + $0x28] sm:$0xff]
        %v5205 = vld [vmem:[#allocation3 + $0x30] sm:$0xff]
        %v5206 = vld [vmem:[#allocation3 + $0x38] sm:$0xff]
        %v5207 = vld [vmem:[#allocation3 + $0x40] sm:$0xff]
        %v5208 = vld [vmem:[#allocation3 + $0x48] sm:$0xff]
        %v5209 = vld [vmem:[#allocation3 + $0x50] sm:$0xff]
        %v5210 = vld [vmem:[#allocation3 + $0x58] sm:$0xff]
        %v5211 = vld [vmem:[#allocation3 + $0x60] sm:$0xff]
        %v5212 = vld [vmem:[#allocation3 + $0x68] sm:$0xff]
        %v5213 = vld [vmem:[#allocation3 + $0x70] sm:$0xff]
        %v5214 = vld [vmem:[#allocation3 + $0x78] sm:$0xff]
        %v5215 = vpack.c.bf16 %v5184, %v5183
        %v5216 = vpack.c.bf16 %v5186, %v5185
        %v5217 = vpack.c.bf16 %v5188, %v5187
        %v5218 = vpack.c.bf16 %v5190, %v5189
        %v5219 = vpack.c.bf16 %v5192, %v5191
        %v5220 = vpack.c.bf16 %v5194, %v5193
        %v5221 = vpack.c.bf16 %v5196, %v5195
        %v5222 = vpack.c.bf16 %v5198, %v5197
        %s5223 = scalar_lea.vmem [#allocation10], 192
        %v5224 = vld [vmem:[%s5223] sm:$0xf]
        %v5225 = vld [vmem:[%s5223 + $0x4] sm:$0xf]
        %v5226 = vld [vmem:[%s5223 + $0x8] sm:$0xf]
        %v5227 = vld [vmem:[%s5223 + $0xc] sm:$0xf]
        %v5228 = vld [vmem:[%s5223 + $0x10] sm:$0xf]
        %v5229 = vld [vmem:[%s5223 + $0x14] sm:$0xf]
        %v5230 = vld [vmem:[%s5223 + $0x18] sm:$0xf]
        %v5231 = vld [vmem:[%s5223 + $0x1c] sm:$0xf]
        %v5232 = vld [vmem:[%s5223 + $0x20] sm:$0xf]
        %v5233 = vld [vmem:[%s5223 + $0x24] sm:$0xf]
        %v5234 = vld [vmem:[%s5223 + $0x28] sm:$0xf]
        %v5235 = vld [vmem:[%s5223 + $0x2c] sm:$0xf]
        %v5236 = vld [vmem:[%s5223 + $0x30] sm:$0xf]
        %v5237 = vld [vmem:[%s5223 + $0x34] sm:$0xf]
        %v5238 = vld [vmem:[%s5223 + $0x38] sm:$0xf]
        %v5239 = vld [vmem:[%s5223 + $0x3c] sm:$0xf]
        %v5256 = vunpack.c.l.b16 %v5224
        %v5257 = vunpack.c.l.b16 %v5225
        %v5258 = vunpack.c.l.b16 %v5226
        %v5259 = vunpack.c.l.b16 %v5227
        %v5260 = vunpack.c.l.b16 %v5228
        %v5261 = vunpack.c.l.b16 %v5229
        %v5262 = vunpack.c.l.b16 %v5230
        %v5263 = vunpack.c.l.b16 %v5231
        %v5264 = vunpack.c.l.b16 %v5232
        %v5265 = vunpack.c.l.b16 %v5233
        %v5266 = vunpack.c.l.b16 %v5234
        %v5267 = vunpack.c.l.b16 %v5235
        %v5268 = vunpack.c.l.b16 %v5236
        %v5269 = vunpack.c.l.b16 %v5237
        %v5270 = vunpack.c.l.b16 %v5238
        %v5271 = vunpack.c.l.b16 %v5239
        %v5272 = vpack.c.b16 %v5257, %v5256
        %v5273 = vpack.c.b16 %v5259, %v5258
        %v5274 = vpack.c.b16 %v5261, %v5260
        %v5275 = vpack.c.b16 %v5263, %v5262
        %v5276 = vpack.c.b16 %v5265, %v5264
        %v5277 = vpack.c.b16 %v5267, %v5266
        %v5278 = vpack.c.b16 %v5269, %v5268
        %v5279 = vpack.c.b16 %v5271, %v5270
        %5288 = vmatprep.subr.bf16.mxu0 0
        %5289 = vmatpush1.bf16.msra.mxu0 %v5272
        %5290 = vmatprep.subr.bf16.mxu0 0
        %5291 = vmatpush1.bf16.msra.mxu0 %v5273
        %5292 = vmatprep.subr.bf16.mxu0 0
        %5293 = vmatpush1.bf16.msra.mxu0 %v5274
        %5294 = vmatprep.subr.bf16.mxu0 0
        %5295 = vmatpush1.bf16.msra.mxu0 %v5275
        %5296 = vmatprep.subr.bf16.mxu0 0
        %5297 = vmatpush1.bf16.msra.mxu0 %v5276
        %5298 = vmatprep.subr.bf16.mxu0 0
        %5299 = vmatpush1.bf16.msra.mxu0 %v5277
        %5300 = vmatprep.subr.bf16.mxu0 0
        %5301 = vmatpush1.bf16.msra.mxu0 %v5278
        %5302 = vmatprep.subr.bf16.mxu0 0
        %5303 = vmatpush1.bf16.msra.mxu0 %v5279
        %5304 = vmatprep.subr.bf16.mxu0 0
        %5305 = vmatpush1.bf16.msra.mxu0 0
        %5306 = vmatprep.subr.bf16.mxu0 0
        %5307 = vmatpush1.bf16.msra.mxu0 0
        %5308 = vmatprep.subr.bf16.mxu0 0
        %5309 = vmatpush1.bf16.msra.mxu0 0
        %5310 = vmatprep.subr.bf16.mxu0 0
        %5311 = vmatpush1.bf16.msra.mxu0 0
        %5312 = vmatprep.subr.bf16.mxu0 0
        %5313 = vmatpush1.bf16.msra.mxu0 0
        %5314 = vmatprep.subr.bf16.mxu0 0
        %5315 = vmatpush1.bf16.msra.mxu0 0
        %5316 = vmatprep.subr.bf16.mxu0 0
        %5317 = vmatpush1.bf16.msra.mxu0 0
        %5318 = vmatprep.subr.bf16.mxu0 0
        %5319 = vmatpush1.bf16.msra.mxu0 0
        %5320 = vmatprep.mubr.bf16.mxu0 0
        %5321 = vmatmul.mubr.bf16.gmra.mrb[0].mxu0 %v5215
        %v5322 = vpop.f32.mrb[0].mxu0
        %v5323 = vadd.f32 0.0, %v5322
        %v5324 = vpop.f32.mrb[0].mxu0
        %v5325 = vpop.f32.mrb[0].mxu0
        %v5326 = vadd.f32 0.0, %v5325
        %v5327 = vpop.f32.mrb[0].mxu0
        %5328 = vmatprep.mubr.bf16.mxu0 0
        %5329 = vmatmul.mubr.bf16.gmra.mrb[0].mxu0 %v5216
        %v5330 = vpop.f32.mrb[0].mxu0
        %v5331 = vadd.f32 0.0, %v5330
        %v5332 = vpop.f32.mrb[0].mxu0
        %v5333 = vpop.f32.mrb[0].mxu0
        %v5334 = vadd.f32 0.0, %v5333
        %v5335 = vpop.f32.mrb[0].mxu0
        %5336 = vmatprep.mubr.bf16.mxu0 0
        %5337 = vmatmul.mubr.bf16.gmra.mrb[0].mxu0 %v5217
        %v5338 = vpop.f32.mrb[0].mxu0
        %v5339 = vadd.f32 0.0, %v5338
        %v5340 = vpop.f32.mrb[0].mxu0
        %v5341 = vpop.f32.mrb[0].mxu0
        %v5342 = vadd.f32 0.0, %v5341
        %v5343 = vpop.f32.mrb[0].mxu0
        %5344 = vmatprep.mubr.bf16.mxu0 0
        %5345 = vmatmul.mubr.bf16.gmra.mrb[0].mxu0 %v5218
        %v5346 = vpop.f32.mrb[0].mxu0
        %v5347 = vadd.f32 0.0, %v5346
        %v5348 = vpop.f32.mrb[0].mxu0
        %v5349 = vpop.f32.mrb[0].mxu0
        %v5350 = vadd.f32 0.0, %v5349
        %v5351 = vpop.f32.mrb[0].mxu0
        %5352 = vmatprep.mubr.bf16.mxu0 0
        %5353 = vmatmul.mubr.bf16.gmra.mrb[0].mxu0 %v5219
        %v5354 = vpop.f32.mrb[0].mxu0
        %v5355 = vadd.f32 0.0, %v5354
        %v5356 = vpop.f32.mrb[0].mxu0
        %v5357 = vpop.f32.mrb[0].mxu0
        %v5358 = vadd.f32 0.0, %v5357
        %v5359 = vpop.f32.mrb[0].mxu0
        %5360 = vmatprep.mubr.bf16.mxu0 0
        %5361 = vmatmul.mubr.bf16.gmra.mrb[0].mxu0 %v5220
        %v5362 = vpop.f32.mrb[0].mxu0
        %v5363 = vadd.f32 0.0, %v5362
        %v5364 = vpop.f32.mrb[0].mxu0
        %v5365 = vpop.f32.mrb[0].mxu0
        %v5366 = vadd.f32 0.0, %v5365
        %v5367 = vpop.f32.mrb[0].mxu0
        %5368 = vmatprep.mubr.bf16.mxu0 0
        %5369 = vmatmul.mubr.bf16.gmra.mrb[0].mxu0 %v5221
        %v5370 = vpop.f32.mrb[0].mxu0
        %v5371 = vadd.f32 0.0, %v5370
        %v5372 = vpop.f32.mrb[0].mxu0
        %v5373 = vpop.f32.mrb[0].mxu0
        %v5374 = vadd.f32 0.0, %v5373
        %v5375 = vpop.f32.mrb[0].mxu0
        %5376 = vmatprep.mubr.bf16.mxu0 0
        %5377 = vmatmul.mubr.bf16.gmra.mrb[0].mxu0 %v5222
        %v5378 = vpop.f32.mrb[0].mxu0
        %v5379 = vadd.f32 0.0, %v5378
        %v5380 = vpop.f32.mrb[0].mxu0
        %v5381 = vpop.f32.mrb[0].mxu0
        %v5382 = vadd.f32 0.0, %v5381
        %v5383 = vpop.f32.mrb[0].mxu0
        %5384 = vdwg.mxu0
        %v5385 = vadd.f32 %v5199, %v5323
        %v5386 = vadd.f32 %v5200, %v5326
        %v5387 = vadd.f32 %v5201, %v5331
        %v5388 = vadd.f32 %v5202, %v5334
        %v5389 = vadd.f32 %v5203, %v5339
        %v5390 = vadd.f32 %v5204, %v5342
        %v5391 = vadd.f32 %v5205, %v5347
        %v5392 = vadd.f32 %v5206, %v5350
        %v5393 = vadd.f32 %v5207, %v5355
        %v5394 = vadd.f32 %v5208, %v5358
        %v5395 = vadd.f32 %v5209, %v5363
        %v5396 = vadd.f32 %v5210, %v5366
        %v5397 = vadd.f32 %v5211, %v5371
        %v5398 = vadd.f32 %v5212, %v5374
        %v5399 = vadd.f32 %v5213, %v5379
        %v5400 = vadd.f32 %v5214, %v5382
        %5401 = vst [vmem:[#allocation3] sm:$0xff] %v5385
        %5402 = vst [vmem:[#allocation3 + $0x8] sm:$0xff] %v5386
        %5403 = vst [vmem:[#allocation3 + $0x10] sm:$0xff] %v5387
        %5404 = vst [vmem:[#allocation3 + $0x18] sm:$0xff] %v5388
        %5405 = vst [vmem:[#allocation3 + $0x20] sm:$0xff] %v5389
        %5406 = vst [vmem:[#allocation3 + $0x28] sm:$0xff] %v5390
        %5407 = vst [vmem:[#allocation3 + $0x30] sm:$0xff] %v5391
        %5408 = vst [vmem:[#allocation3 + $0x38] sm:$0xff] %v5392
        %5409 = vst [vmem:[#allocation3 + $0x40] sm:$0xff] %v5393
        %5410 = vst [vmem:[#allocation3 + $0x48] sm:$0xff] %v5394
        %5411 = vst [vmem:[#allocation3 + $0x50] sm:$0xff] %v5395
        %5412 = vst [vmem:[#allocation3 + $0x58] sm:$0xff] %v5396
        %5413 = vst [vmem:[#allocation3 + $0x60] sm:$0xff] %v5397
        %5414 = vst [vmem:[#allocation3 + $0x68] sm:$0xff] %v5398
        %5415 = vst [vmem:[#allocation3 + $0x70] sm:$0xff] %v5399
        %5416 = vst [vmem:[#allocation3 + $0x78] sm:$0xff] %v5400
        %v5417 = vlaneseq
        %v5418 = vshrl.u32 %v5417, 7
        %v5419 = vsub.s32 0, %v5418
        %v5420 = vrot.slane %v910, %v5419
        %v5421 = vmul.f32 %v943, %v5420
        %v5422 = vmul.f32 %v944, %v5420
        %v5423 = vmul.f32 %v946, %v5420
        %v5424 = vmul.f32 %v947, %v5420
        %v5425 = vmul.f32 %v949, %v5420
        %v5426 = vmul.f32 %v950, %v5420
        %v5427 = vmul.f32 %v913, %v5420
        %v5428 = vmul.f32 %v914, %v5420
        %v5429 = vmul.f32 %v916, %v5420
        %v5430 = vmul.f32 %v917, %v5420
        %v5431 = vmul.f32 %v919, %v5420
        %v5432 = vmul.f32 %v920, %v5420
        %v5433 = vmul.f32 %v922, %v5420
        %v5434 = vmul.f32 %v923, %v5420
        %v5435 = vmul.f32 %v925, %v5420
        %v5436 = vmul.f32 %v926, %v5420
        %v5437 = vadd.f32 %v5421, 0.0
        %v5438 = vadd.f32 %v5422, 0.0
        %v5439 = vadd.f32 %v5423, 0.0
        %v5440 = vadd.f32 %v5424, 0.0
        %v5441 = vadd.f32 %v5425, 0.0
        %v5442 = vadd.f32 %v5426, 0.0
        %v5443 = vadd.f32 %v5427, 0.0
        %v5444 = vadd.f32 %v5428, 0.0
        %v5445 = vadd.f32 %v5429, 0.0
        %v5446 = vadd.f32 %v5430, 0.0
        %v5447 = vadd.f32 %v5431, 0.0
        %v5448 = vadd.f32 %v5432, 0.0
        %v5449 = vadd.f32 %v5433, 0.0
        %v5450 = vadd.f32 %v5434, 0.0
        %v5451 = vadd.f32 %v5435, 0.0
        %v5452 = vadd.f32 %v5436, 0.0
        %v5453 = vlaneseq
        %v5454 = vshrl.u32 %v5453, 7
        %v5455 = vsub.s32 1, %v5454
        %v5456 = vrot.slane %v910, %v5455
        %v5457 = vmul.f32 %v943, %v5456
        %v5458 = vmul.f32 %v944, %v5456
        %v5459 = vmul.f32 %v945, %v5456
        %v5460 = vmul.f32 %v946, %v5456
        %v5461 = vmul.f32 %v947, %v5456
        %v5462 = vmul.f32 %v948, %v5456
        %v5463 = vmul.f32 %v949, %v5456
        %v5464 = vmul.f32 %v950, %v5456
        %v5465 = vmul.f32 %v951, %v5456
        %v5466 = vmul.f32 %v913, %v5456
        %v5467 = vmul.f32 %v914, %v5456
        %v5468 = vmul.f32 %v915, %v5456
        %v5469 = vmul.f32 %v916, %v5456
        %v5470 = vmul.f32 %v917, %v5456
        %v5471 = vmul.f32 %v918, %v5456
        %v5472 = vmul.f32 %v919, %v5456
        %v5473 = vmul.f32 %v920, %v5456
        %v5474 = vmul.f32 %v921, %v5456
        %v5475 = vmul.f32 %v922, %v5456
        %v5476 = vmul.f32 %v923, %v5456
        %v5477 = vmul.f32 %v924, %v5456
        %v5478 = vmul.f32 %v925, %v5456
        %v5479 = vmul.f32 %v926, %v5456
        %v5480 = vmul.f32 %v927, %v5456
        %v5505 = vrot.slane %v5457, 4
        %v5506 = vrot.slane %v5458, 4
        %v5507 = vsel %vm2691, %v5505, %v5506
        %v5508 = vrot.slane %v5459, 4
        %v5509 = vsel %vm2691, %v5506, %v5508
        %v5510 = vrot.slane %v5460, 4
        %v5511 = vrot.slane %v5461, 4
        %v5512 = vsel %vm2691, %v5510, %v5511
        %v5513 = vrot.slane %v5462, 4
        %v5514 = vsel %vm2691, %v5511, %v5513
        %v5515 = vrot.slane %v5463, 4
        %v5516 = vrot.slane %v5464, 4
        %v5517 = vsel %vm2691, %v5515, %v5516
        %v5518 = vrot.slane %v5465, 4
        %v5519 = vsel %vm2691, %v5516, %v5518
        %v5520 = vrot.slane %v5466, 4
        %v5521 = vrot.slane %v5467, 4
        %v5522 = vsel %vm2691, %v5520, %v5521
        %v5523 = vrot.slane %v5468, 4
        %v5524 = vsel %vm2691, %v5521, %v5523
        %v5525 = vrot.slane %v5469, 4
        %v5526 = vrot.slane %v5470, 4
        %v5527 = vsel %vm2691, %v5525, %v5526
        %v5528 = vrot.slane %v5471, 4
        %v5529 = vsel %vm2691, %v5526, %v5528
        %v5530 = vrot.slane %v5472, 4
        %v5531 = vrot.slane %v5473, 4
        %v5532 = vsel %vm2691, %v5530, %v5531
        %v5533 = vrot.slane %v5474, 4
        %v5534 = vsel %vm2691, %v5531, %v5533
        %v5535 = vrot.slane %v5475, 4
        %v5536 = vrot.slane %v5476, 4
        %v5537 = vsel %vm2691, %v5535, %v5536
        %v5538 = vrot.slane %v5477, 4
        %v5539 = vsel %vm2691, %v5536, %v5538
        %v5540 = vrot.slane %v5478, 4
        %v5541 = vrot.slane %v5479, 4
        %v5542 = vsel %vm2691, %v5540, %v5541
        %v5543 = vrot.slane %v5480, 4
        %v5544 = vsel %vm2691, %v5541, %v5543
        %v5561 = vadd.f32 %v5437, %v5507
        %v5562 = vadd.f32 %v5438, %v5509
        %v5563 = vadd.f32 %v5439, %v5512
        %v5564 = vadd.f32 %v5440, %v5514
        %v5565 = vadd.f32 %v5441, %v5517
        %v5566 = vadd.f32 %v5442, %v5519
        %v5567 = vadd.f32 %v5443, %v5522
        %v5568 = vadd.f32 %v5444, %v5524
        %v5569 = vadd.f32 %v5445, %v5527
        %v5570 = vadd.f32 %v5446, %v5529
        %v5571 = vadd.f32 %v5447, %v5532
        %v5572 = vadd.f32 %v5448, %v5534
        %v5573 = vadd.f32 %v5449, %v5537
        %v5574 = vadd.f32 %v5450, %v5539
        %v5575 = vadd.f32 %v5451, %v5542
        %v5576 = vadd.f32 %v5452, %v5544
        %v5577 = vlaneseq
        %v5578 = vshrl.u32 %v5577, 7
        %v5579 = vsub.s32 2, %v5578
        %v5580 = vrot.slane %v910, %v5579
        %v5581 = vmul.f32 %v944, %v5580
        %v5582 = vmul.f32 %v945, %v5580
        %v5583 = vmul.f32 %v947, %v5580
        %v5584 = vmul.f32 %v948, %v5580
        %v5585 = vmul.f32 %v950, %v5580
        %v5586 = vmul.f32 %v951, %v5580
        %v5587 = vmul.f32 %v914, %v5580
        %v5588 = vmul.f32 %v915, %v5580
        %v5589 = vmul.f32 %v917, %v5580
        %v5590 = vmul.f32 %v918, %v5580
        %v5591 = vmul.f32 %v920, %v5580
        %v5592 = vmul.f32 %v921, %v5580
        %v5593 = vmul.f32 %v923, %v5580
        %v5594 = vmul.f32 %v924, %v5580
        %v5595 = vmul.f32 %v926, %v5580
        %v5596 = vmul.f32 %v927, %v5580
        %v5597 = vadd.f32 %v5561, %v5581
        %v5598 = vadd.f32 %v5562, %v5582
        %v5599 = vadd.f32 %v5563, %v5583
        %v5600 = vadd.f32 %v5564, %v5584
        %v5601 = vadd.f32 %v5565, %v5585
        %v5602 = vadd.f32 %v5566, %v5586
        %v5603 = vadd.f32 %v5567, %v5587
        %v5604 = vadd.f32 %v5568, %v5588
        %v5605 = vadd.f32 %v5569, %v5589
        %v5606 = vadd.f32 %v5570, %v5590
        %v5607 = vadd.f32 %v5571, %v5591
        %v5608 = vadd.f32 %v5572, %v5592
        %v5609 = vadd.f32 %v5573, %v5593
        %v5610 = vadd.f32 %v5574, %v5594
        %v5611 = vadd.f32 %v5575, %v5595
        %v5612 = vadd.f32 %v5576, %v5596
        %v5613 = vlaneseq
        %v5614 = vshrl.u32 %v5613, 7
        %v5615 = vsub.s32 0, %v5614
        %v5616 = vrot.slane %v911, %v5615
        %v5617 = vmul.f32 %v916, %v5616
        %v5618 = vmul.f32 %v917, %v5616
        %v5619 = vmul.f32 %v919, %v5616
        %v5620 = vmul.f32 %v920, %v5616
        %v5621 = vmul.f32 %v922, %v5616
        %v5622 = vmul.f32 %v923, %v5616
        %v5623 = vmul.f32 %v925, %v5616
        %v5624 = vmul.f32 %v926, %v5616
        %v5625 = vmul.f32 %v928, %v5616
        %v5626 = vmul.f32 %v929, %v5616
        %v5627 = vmul.f32 %v931, %v5616
        %v5628 = vmul.f32 %v932, %v5616
        %v5629 = vmul.f32 %v934, %v5616
        %v5630 = vmul.f32 %v935, %v5616
        %v5631 = vmul.f32 %v937, %v5616
        %v5632 = vmul.f32 %v938, %v5616
        %v5633 = vadd.f32 %v5597, %v5617
        %v5634 = vadd.f32 %v5598, %v5618
        %v5635 = vadd.f32 %v5599, %v5619
        %v5636 = vadd.f32 %v5600, %v5620
        %v5637 = vadd.f32 %v5601, %v5621
        %v5638 = vadd.f32 %v5602, %v5622
        %v5639 = vadd.f32 %v5603, %v5623
        %v5640 = vadd.f32 %v5604, %v5624
        %v5641 = vadd.f32 %v5605, %v5625
        %v5642 = vadd.f32 %v5606, %v5626
        %v5643 = vadd.f32 %v5607, %v5627
        %v5644 = vadd.f32 %v5608, %v5628
        %v5645 = vadd.f32 %v5609, %v5629
        %v5646 = vadd.f32 %v5610, %v5630
        %v5647 = vadd.f32 %v5611, %v5631
        %v5648 = vadd.f32 %v5612, %v5632
        %v5649 = vlaneseq
        %v5650 = vshrl.u32 %v5649, 7
        %v5651 = vsub.s32 1, %v5650
        %v5652 = vrot.slane %v911, %v5651
        %v5653 = vmul.f32 %v916, %v5652
        %v5654 = vmul.f32 %v917, %v5652
        %v5655 = vmul.f32 %v918, %v5652
        %v5656 = vmul.f32 %v919, %v5652
        %v5657 = vmul.f32 %v920, %v5652
        %v5658 = vmul.f32 %v921, %v5652
        %v5659 = vmul.f32 %v922, %v5652
        %v5660 = vmul.f32 %v923, %v5652
        %v5661 = vmul.f32 %v924, %v5652
        %v5662 = vmul.f32 %v925, %v5652
        %v5663 = vmul.f32 %v926, %v5652
        %v5664 = vmul.f32 %v927, %v5652
        %v5665 = vmul.f32 %v928, %v5652
        %v5666 = vmul.f32 %v929, %v5652
        %v5667 = vmul.f32 %v930, %v5652
        %v5668 = vmul.f32 %v931, %v5652
        %v5669 = vmul.f32 %v932, %v5652
        %v5670 = vmul.f32 %v933, %v5652
        %v5671 = vmul.f32 %v934, %v5652
        %v5672 = vmul.f32 %v935, %v5652
        %v5673 = vmul.f32 %v936, %v5652
        %v5674 = vmul.f32 %v937, %v5652
        %v5675 = vmul.f32 %v938, %v5652
        %v5676 = vmul.f32 %v939, %v5652
        %v5701 = vrot.slane %v5653, 4
        %v5702 = vrot.slane %v5654, 4
        %v5703 = vsel %vm2691, %v5701, %v5702
        %v5704 = vrot.slane %v5655, 4
        %v5705 = vsel %vm2691, %v5702, %v5704
        %v5706 = vrot.slane %v5656, 4
        %v5707 = vrot.slane %v5657, 4
        %v5708 = vsel %vm2691, %v5706, %v5707
        %v5709 = vrot.slane %v5658, 4
        %v5710 = vsel %vm2691, %v5707, %v5709
        %v5711 = vrot.slane %v5659, 4
        %v5712 = vrot.slane %v5660, 4
        %v5713 = vsel %vm2691, %v5711, %v5712
        %v5714 = vrot.slane %v5661, 4
        %v5715 = vsel %vm2691, %v5712, %v5714
        %v5716 = vrot.slane %v5662, 4
        %v5717 = vrot.slane %v5663, 4
        %v5718 = vsel %vm2691, %v5716, %v5717
        %v5719 = vrot.slane %v5664, 4
        %v5720 = vsel %vm2691, %v5717, %v5719
        %v5721 = vrot.slane %v5665, 4
        %v5722 = vrot.slane %v5666, 4
        %v5723 = vsel %vm2691, %v5721, %v5722
        %v5724 = vrot.slane %v5667, 4
        %v5725 = vsel %vm2691, %v5722, %v5724
        %v5726 = vrot.slane %v5668, 4
        %v5727 = vrot.slane %v5669, 4
        %v5728 = vsel %vm2691, %v5726, %v5727
        %v5729 = vrot.slane %v5670, 4
        %v5730 = vsel %vm2691, %v5727, %v5729
        %v5731 = vrot.slane %v5671, 4
        %v5732 = vrot.slane %v5672, 4
        %v5733 = vsel %vm2691, %v5731, %v5732
        %v5734 = vrot.slane %v5673, 4
        %v5735 = vsel %vm2691, %v5732, %v5734
        %v5736 = vrot.slane %v5674, 4
        %v5737 = vrot.slane %v5675, 4
        %v5738 = vsel %vm2691, %v5736, %v5737
        %v5739 = vrot.slane %v5676, 4
        %v5740 = vsel %vm2691, %v5737, %v5739
        %v5757 = vadd.f32 %v5633, %v5703
        %v5758 = vadd.f32 %v5634, %v5705
        %v5759 = vadd.f32 %v5635, %v5708
        %v5760 = vadd.f32 %v5636, %v5710
        %v5761 = vadd.f32 %v5637, %v5713
        %v5762 = vadd.f32 %v5638, %v5715
        %v5763 = vadd.f32 %v5639, %v5718
        %v5764 = vadd.f32 %v5640, %v5720
        %v5765 = vadd.f32 %v5641, %v5723
        %v5766 = vadd.f32 %v5642, %v5725
        %v5767 = vadd.f32 %v5643, %v5728
        %v5768 = vadd.f32 %v5644, %v5730
        %v5769 = vadd.f32 %v5645, %v5733
        %v5770 = vadd.f32 %v5646, %v5735
        %v5771 = vadd.f32 %v5647, %v5738
        %v5772 = vadd.f32 %v5648, %v5740
        %v5773 = vlaneseq
        %v5774 = vshrl.u32 %v5773, 7
        %v5775 = vsub.s32 2, %v5774
        %v5776 = vrot.slane %v911, %v5775
        %v5777 = vmul.f32 %v917, %v5776
        %v5778 = vmul.f32 %v918, %v5776
        %v5779 = vmul.f32 %v920, %v5776
        %v5780 = vmul.f32 %v921, %v5776
        %v5781 = vmul.f32 %v923, %v5776
        %v5782 = vmul.f32 %v924, %v5776
        %v5783 = vmul.f32 %v926, %v5776
        %v5784 = vmul.f32 %v927, %v5776
        %v5785 = vmul.f32 %v929, %v5776
        %v5786 = vmul.f32 %v930, %v5776
        %v5787 = vmul.f32 %v932, %v5776
        %v5788 = vmul.f32 %v933, %v5776
        %v5789 = vmul.f32 %v935, %v5776
        %v5790 = vmul.f32 %v936, %v5776
        %v5791 = vmul.f32 %v938, %v5776
        %v5792 = vmul.f32 %v939, %v5776
        %v5793 = vadd.f32 %v5757, %v5777
        %v5794 = vadd.f32 %v5758, %v5778
        %v5795 = vadd.f32 %v5759, %v5779
        %v5796 = vadd.f32 %v5760, %v5780
        %v5797 = vadd.f32 %v5761, %v5781
        %v5798 = vadd.f32 %v5762, %v5782
        %v5799 = vadd.f32 %v5763, %v5783
        %v5800 = vadd.f32 %v5764, %v5784
        %v5801 = vadd.f32 %v5765, %v5785
        %v5802 = vadd.f32 %v5766, %v5786
        %v5803 = vadd.f32 %v5767, %v5787
        %v5804 = vadd.f32 %v5768, %v5788
        %v5805 = vadd.f32 %v5769, %v5789
        %v5806 = vadd.f32 %v5770, %v5790
        %v5807 = vadd.f32 %v5771, %v5791
        %v5808 = vadd.f32 %v5772, %v5792
        %v5809 = vlaneseq
        %v5810 = vshrl.u32 %v5809, 7
        %v5811 = vsub.s32 0, %v5810
        %v5812 = vrot.slane %v912, %v5811
        %v5813 = vmul.f32 %v928, %v5812
        %v5814 = vmul.f32 %v929, %v5812
        %v5815 = vmul.f32 %v931, %v5812
        %v5816 = vmul.f32 %v932, %v5812
        %v5817 = vmul.f32 %v934, %v5812
        %v5818 = vmul.f32 %v935, %v5812
        %v5819 = vmul.f32 %v937, %v5812
        %v5820 = vmul.f32 %v938, %v5812
        %v5821 = vmul.f32 %v940, %v5812
        %v5822 = vmul.f32 %v941, %v5812
        %v5823 = vmul.f32 %v952, %v5812
        %v5824 = vmul.f32 %v953, %v5812
        %v5825 = vmul.f32 %v955, %v5812
        %v5826 = vmul.f32 %v956, %v5812
        %v5827 = vmul.f32 %v958, %v5812
        %v5828 = vmul.f32 %v959, %v5812
        %v5829 = vadd.f32 %v5793, %v5813
        %v5830 = vadd.f32 %v5794, %v5814
        %v5831 = vadd.f32 %v5795, %v5815
        %v5832 = vadd.f32 %v5796, %v5816
        %v5833 = vadd.f32 %v5797, %v5817
        %v5834 = vadd.f32 %v5798, %v5818
        %v5835 = vadd.f32 %v5799, %v5819
        %v5836 = vadd.f32 %v5800, %v5820
        %v5837 = vadd.f32 %v5801, %v5821
        %v5838 = vadd.f32 %v5802, %v5822
        %v5839 = vadd.f32 %v5803, %v5823
        %v5840 = vadd.f32 %v5804, %v5824
        %v5841 = vadd.f32 %v5805, %v5825
        %v5842 = vadd.f32 %v5806, %v5826
        %v5843 = vadd.f32 %v5807, %v5827
        %v5844 = vadd.f32 %v5808, %v5828
        %v5845 = vlaneseq
        %v5846 = vshrl.u32 %v5845, 7
        %v5847 = vsub.s32 1, %v5846
        %v5848 = vrot.slane %v912, %v5847
        %v5849 = vmul.f32 %v928, %v5848
        %v5850 = vmul.f32 %v929, %v5848
        %v5851 = vmul.f32 %v930, %v5848
        %v5852 = vmul.f32 %v931, %v5848
        %v5853 = vmul.f32 %v932, %v5848
        %v5854 = vmul.f32 %v933, %v5848
        %v5855 = vmul.f32 %v934, %v5848
        %v5856 = vmul.f32 %v935, %v5848
        %v5857 = vmul.f32 %v936, %v5848
        %v5858 = vmul.f32 %v937, %v5848
        %v5859 = vmul.f32 %v938, %v5848
        %v5860 = vmul.f32 %v939, %v5848
        %v5861 = vmul.f32 %v940, %v5848
        %v5862 = vmul.f32 %v941, %v5848
        %v5863 = vmul.f32 %v942, %v5848
        %v5864 = vmul.f32 %v952, %v5848
        %v5865 = vmul.f32 %v953, %v5848
        %v5866 = vmul.f32 %v954, %v5848
        %v5867 = vmul.f32 %v955, %v5848
        %v5868 = vmul.f32 %v956, %v5848
        %v5869 = vmul.f32 %v957, %v5848
        %v5870 = vmul.f32 %v958, %v5848
        %v5871 = vmul.f32 %v959, %v5848
        %v5872 = vmul.f32 %v960, %v5848
        %v5897 = vrot.slane %v5849, 4
        %v5898 = vrot.slane %v5850, 4
        %v5899 = vsel %vm2691, %v5897, %v5898
        %v5900 = vrot.slane %v5851, 4
        %v5901 = vsel %vm2691, %v5898, %v5900
        %v5902 = vrot.slane %v5852, 4
        %v5903 = vrot.slane %v5853, 4
        %v5904 = vsel %vm2691, %v5902, %v5903
        %v5905 = vrot.slane %v5854, 4
        %v5906 = vsel %vm2691, %v5903, %v5905
        %v5907 = vrot.slane %v5855, 4
        %v5908 = vrot.slane %v5856, 4
        %v5909 = vsel %vm2691, %v5907, %v5908
        %v5910 = vrot.slane %v5857, 4
        %v5911 = vsel %vm2691, %v5908, %v5910
        %v5912 = vrot.slane %v5858, 4
        %v5913 = vrot.slane %v5859, 4
        %v5914 = vsel %vm2691, %v5912, %v5913
        %v5915 = vrot.slane %v5860, 4
        %v5916 = vsel %vm2691, %v5913, %v5915
        %v5917 = vrot.slane %v5861, 4
        %v5918 = vrot.slane %v5862, 4
        %v5919 = vsel %vm2691, %v5917, %v5918
        %v5920 = vrot.slane %v5863, 4
        %v5921 = vsel %vm2691, %v5918, %v5920
        %v5922 = vrot.slane %v5864, 4
        %v5923 = vrot.slane %v5865, 4
        %v5924 = vsel %vm2691, %v5922, %v5923
        %v5925 = vrot.slane %v5866, 4
        %v5926 = vsel %vm2691, %v5923, %v5925
        %v5927 = vrot.slane %v5867, 4
        %v5928 = vrot.slane %v5868, 4
        %v5929 = vsel %vm2691, %v5927, %v5928
        %v5930 = vrot.slane %v5869, 4
        %v5931 = vsel %vm2691, %v5928, %v5930
        %v5932 = vrot.slane %v5870, 4
        %v5933 = vrot.slane %v5871, 4
        %v5934 = vsel %vm2691, %v5932, %v5933
        %v5935 = vrot.slane %v5872, 4
        %v5936 = vsel %vm2691, %v5933, %v5935
        %v5953 = vadd.f32 %v5829, %v5899
        %v5954 = vadd.f32 %v5830, %v5901
        %v5955 = vadd.f32 %v5831, %v5904
        %v5956 = vadd.f32 %v5832, %v5906
        %v5957 = vadd.f32 %v5833, %v5909
        %v5958 = vadd.f32 %v5834, %v5911
        %v5959 = vadd.f32 %v5835, %v5914
        %v5960 = vadd.f32 %v5836, %v5916
        %v5961 = vadd.f32 %v5837, %v5919
        %v5962 = vadd.f32 %v5838, %v5921
        %v5963 = vadd.f32 %v5839, %v5924
        %v5964 = vadd.f32 %v5840, %v5926
        %v5965 = vadd.f32 %v5841, %v5929
        %v5966 = vadd.f32 %v5842, %v5931
        %v5967 = vadd.f32 %v5843, %v5934
        %v5968 = vadd.f32 %v5844, %v5936
        %v5969 = vlaneseq
        %v5970 = vshrl.u32 %v5969, 7
        %v5971 = vsub.s32 2, %v5970
        %v5972 = vrot.slane %v912, %v5971
        %v5973 = vmul.f32 %v929, %v5972
        %v5974 = vmul.f32 %v930, %v5972
        %v5975 = vmul.f32 %v932, %v5972
        %v5976 = vmul.f32 %v933, %v5972
        %v5977 = vmul.f32 %v935, %v5972
        %v5978 = vmul.f32 %v936, %v5972
        %v5979 = vmul.f32 %v938, %v5972
        %v5980 = vmul.f32 %v939, %v5972
        %v5981 = vmul.f32 %v941, %v5972
        %v5982 = vmul.f32 %v942, %v5972
        %v5983 = vmul.f32 %v953, %v5972
        %v5984 = vmul.f32 %v954, %v5972
        %v5985 = vmul.f32 %v956, %v5972
        %v5986 = vmul.f32 %v957, %v5972
        %v5987 = vmul.f32 %v959, %v5972
        %v5988 = vmul.f32 %v960, %v5972
        %v5989 = vadd.f32 %v5953, %v5973
        %v5990 = vadd.f32 %v5954, %v5974
        %v5991 = vadd.f32 %v5955, %v5975
        %v5992 = vadd.f32 %v5956, %v5976
        %v5993 = vadd.f32 %v5957, %v5977
        %v5994 = vadd.f32 %v5958, %v5978
        %v5995 = vadd.f32 %v5959, %v5979
        %v5996 = vadd.f32 %v5960, %v5980
        %v5997 = vadd.f32 %v5961, %v5981
        %v5998 = vadd.f32 %v5962, %v5982
        %v5999 = vadd.f32 %v5963, %v5983
        %v6000 = vadd.f32 %v5964, %v5984
        %v6001 = vadd.f32 %v5965, %v5985
        %v6002 = vadd.f32 %v5966, %v5986
        %v6003 = vadd.f32 %v5967, %v5987
        %v6004 = vadd.f32 %v5968, %v5988
        %v6005 = vpack.c.bf16 %v5990, %v5989
        %v6006 = vpack.c.bf16 %v5992, %v5991
        %v6007 = vpack.c.bf16 %v5994, %v5993
        %v6008 = vpack.c.bf16 %v5996, %v5995
        %v6009 = vpack.c.bf16 %v5998, %v5997
        %v6010 = vpack.c.bf16 %v6000, %v5999
        %v6011 = vpack.c.bf16 %v6002, %v6001
        %v6012 = vpack.c.bf16 %v6004, %v6003
        %s6013 = scalar_lea.vmem [#allocation8], 192
        %v6014 = vld [vmem:[%s6013] sm:$0xf]
        %v6015 = vld [vmem:[%s6013 + $0x4] sm:$0xf]
        %v6016 = vld [vmem:[%s6013 + $0x8] sm:$0xf]
        %v6017 = vld [vmem:[%s6013 + $0xc] sm:$0xf]
        %v6018 = vld [vmem:[%s6013 + $0x10] sm:$0xf]
        %v6019 = vld [vmem:[%s6013 + $0x14] sm:$0xf]
        %v6020 = vld [vmem:[%s6013 + $0x18] sm:$0xf]
        %v6021 = vld [vmem:[%s6013 + $0x1c] sm:$0xf]
        %v6022 = vld [vmem:[%s6013 + $0x20] sm:$0xf]
        %v6023 = vld [vmem:[%s6013 + $0x24] sm:$0xf]
        %v6024 = vld [vmem:[%s6013 + $0x28] sm:$0xf]
        %v6025 = vld [vmem:[%s6013 + $0x2c] sm:$0xf]
        %v6026 = vld [vmem:[%s6013 + $0x30] sm:$0xf]
        %v6027 = vld [vmem:[%s6013 + $0x34] sm:$0xf]
        %v6028 = vld [vmem:[%s6013 + $0x38] sm:$0xf]
        %v6029 = vld [vmem:[%s6013 + $0x3c] sm:$0xf]
        %v6030 = vlaneseq
        %v6031 = vshrl.u32 %v6030, 7
        %v6032 = vsub.s32 4, %v6031
        %v6033 = vrot.slane %v422, %v6032
        %v6050 = vunpack.c.l.b16 %v6014
        %v6051 = vunpack.c.l.b16 %v6015
        %v6052 = vunpack.c.l.b16 %v6016
        %v6053 = vunpack.c.l.b16 %v6017
        %v6054 = vunpack.c.l.b16 %v6018
        %v6055 = vunpack.c.l.b16 %v6019
        %v6056 = vunpack.c.l.b16 %v6020
        %v6057 = vunpack.c.l.b16 %v6021
        %v6058 = vunpack.c.l.b16 %v6022
        %v6059 = vunpack.c.l.b16 %v6023
        %v6060 = vunpack.c.l.b16 %v6024
        %v6061 = vunpack.c.l.b16 %v6025
        %v6062 = vunpack.c.l.b16 %v6026
        %v6063 = vunpack.c.l.b16 %v6027
        %v6064 = vunpack.c.l.b16 %v6028
        %v6065 = vunpack.c.l.b16 %v6029
        %v6066 = vpack.c.b16 %v6051, %v6050
        %v6067 = vpack.c.b16 %v6053, %v6052
        %v6068 = vpack.c.b16 %v6055, %v6054
        %v6069 = vpack.c.b16 %v6057, %v6056
        %v6070 = vpack.c.b16 %v6059, %v6058
        %v6071 = vpack.c.b16 %v6061, %v6060
        %v6072 = vpack.c.b16 %v6063, %v6062
        %v6073 = vpack.c.b16 %v6065, %v6064
        %6082 = vmatprep.subr.bf16.mxu0 0
        %6083 = vmatpush1.bf16.msra.mxu0 %v6066
        %6084 = vmatprep.subr.bf16.mxu0 0
        %6085 = vmatpush1.bf16.msra.mxu0 %v6067
        %6086 = vmatprep.subr.bf16.mxu0 0
        %6087 = vmatpush1.bf16.msra.mxu0 %v6068
        %6088 = vmatprep.subr.bf16.mxu0 0
        %6089 = vmatpush1.bf16.msra.mxu0 %v6069
        %6090 = vmatprep.subr.bf16.mxu0 0
        %6091 = vmatpush1.bf16.msra.mxu0 %v6070
        %6092 = vmatprep.subr.bf16.mxu0 0
        %6093 = vmatpush1.bf16.msra.mxu0 %v6071
        %6094 = vmatprep.subr.bf16.mxu0 0
        %6095 = vmatpush1.bf16.msra.mxu0 %v6072
        %6096 = vmatprep.subr.bf16.mxu0 0
        %6097 = vmatpush1.bf16.msra.mxu0 %v6073
        %6098 = vmatprep.subr.bf16.mxu0 0
        %6099 = vmatpush1.bf16.msra.mxu0 0
        %6100 = vmatprep.subr.bf16.mxu0 0
        %6101 = vmatpush1.bf16.msra.mxu0 0
        %6102 = vmatprep.subr.bf16.mxu0 0
        %6103 = vmatpush1.bf16.msra.mxu0 0
        %6104 = vmatprep.subr.bf16.mxu0 0
        %6105 = vmatpush1.bf16.msra.mxu0 0
        %6106 = vmatprep.subr.bf16.mxu0 0
        %6107 = vmatpush1.bf16.msra.mxu0 0
        %6108 = vmatprep.subr.bf16.mxu0 0
        %6109 = vmatpush1.bf16.msra.mxu0 0
        %6110 = vmatprep.subr.bf16.mxu0 0
        %6111 = vmatpush1.bf16.msra.mxu0 0
        %6112 = vmatprep.subr.bf16.mxu0 0
        %6113 = vmatpush1.bf16.msra.mxu0 0
        %6114 = vmatprep.mubr.bf16.mxu0 0
        %6115 = vmatmul.mubr.bf16.gmra.mrb[0].mxu0 %v6005
        %v6116 = vpop.f32.mrb[0].mxu0
        %v6117 = vadd.f32 %v6033, %v6116
        %v6118 = vpop.f32.mrb[0].mxu0
        %v6119 = vpop.f32.mrb[0].mxu0
        %v6120 = vadd.f32 %v6033, %v6119
        %v6121 = vpop.f32.mrb[0].mxu0
        %6122 = vmatprep.mubr.bf16.mxu0 0
        %6123 = vmatmul.mubr.bf16.gmra.mrb[0].mxu0 %v6006
        %v6124 = vpop.f32.mrb[0].mxu0
        %v6125 = vadd.f32 %v6033, %v6124
        %v6126 = vpop.f32.mrb[0].mxu0
        %v6127 = vpop.f32.mrb[0].mxu0
        %v6128 = vadd.f32 %v6033, %v6127
        %v6129 = vpop.f32.mrb[0].mxu0
        %6130 = vmatprep.mubr.bf16.mxu0 0
        %6131 = vmatmul.mubr.bf16.gmra.mrb[0].mxu0 %v6007
        %v6132 = vpop.f32.mrb[0].mxu0
        %v6133 = vadd.f32 %v6033, %v6132
        %v6134 = vpop.f32.mrb[0].mxu0
        %v6135 = vpop.f32.mrb[0].mxu0
        %v6136 = vadd.f32 %v6033, %v6135
        %v6137 = vpop.f32.mrb[0].mxu0
        %6138 = vmatprep.mubr.bf16.mxu0 0
        %6139 = vmatmul.mubr.bf16.gmra.mrb[0].mxu0 %v6008
        %v6140 = vpop.f32.mrb[0].mxu0
        %v6141 = vadd.f32 %v6033, %v6140
        %v6142 = vpop.f32.mrb[0].mxu0
        %v6143 = vpop.f32.mrb[0].mxu0
        %v6144 = vadd.f32 %v6033, %v6143
        %v6145 = vpop.f32.mrb[0].mxu0
        %6146 = vmatprep.mubr.bf16.mxu0 0
        %6147 = vmatmul.mubr.bf16.gmra.mrb[0].mxu0 %v6009
        %v6148 = vpop.f32.mrb[0].mxu0
        %v6149 = vadd.f32 %v6033, %v6148
        %v6150 = vpop.f32.mrb[0].mxu0
        %v6151 = vpop.f32.mrb[0].mxu0
        %v6152 = vadd.f32 %v6033, %v6151
        %v6153 = vpop.f32.mrb[0].mxu0
        %6154 = vmatprep.mubr.bf16.mxu0 0
        %6155 = vmatmul.mubr.bf16.gmra.mrb[0].mxu0 %v6010
        %v6156 = vpop.f32.mrb[0].mxu0
        %v6157 = vadd.f32 %v6033, %v6156
        %v6158 = vpop.f32.mrb[0].mxu0
        %v6159 = vpop.f32.mrb[0].mxu0
        %v6160 = vadd.f32 %v6033, %v6159
        %v6161 = vpop.f32.mrb[0].mxu0
        %6162 = vmatprep.mubr.bf16.mxu0 0
        %6163 = vmatmul.mubr.bf16.gmra.mrb[0].mxu0 %v6011
        %v6164 = vpop.f32.mrb[0].mxu0
        %v6165 = vadd.f32 %v6033, %v6164
        %v6166 = vpop.f32.mrb[0].mxu0
        %v6167 = vpop.f32.mrb[0].mxu0
        %v6168 = vadd.f32 %v6033, %v6167
        %v6169 = vpop.f32.mrb[0].mxu0
        %6170 = vmatprep.mubr.bf16.mxu0 0
        %6171 = vmatmul.mubr.bf16.gmra.mrb[0].mxu0 %v6012
        %v6172 = vpop.f32.mrb[0].mxu0
        %v6173 = vadd.f32 %v6033, %v6172
        %v6174 = vpop.f32.mrb[0].mxu0
        %v6175 = vpop.f32.mrb[0].mxu0
        %v6176 = vadd.f32 %v6033, %v6175
        %v6177 = vpop.f32.mrb[0].mxu0
        %6178 = vdwg.mxu0
        %v6179 = vmax.f32 %v6117, 0.0
        %v6180 = vmax.f32 %v6120, 0.0
        %v6181 = vmax.f32 %v6125, 0.0
        %v6182 = vmax.f32 %v6128, 0.0
        %v6183 = vmax.f32 %v6133, 0.0
        %v6184 = vmax.f32 %v6136, 0.0
        %v6185 = vmax.f32 %v6141, 0.0
        %v6186 = vmax.f32 %v6144, 0.0
        %v6187 = vmax.f32 %v6149, 0.0
        %v6188 = vmax.f32 %v6152, 0.0
        %v6189 = vmax.f32 %v6157, 0.0
        %v6190 = vmax.f32 %v6160, 0.0
        %v6191 = vmax.f32 %v6165, 0.0
        %v6192 = vmax.f32 %v6168, 0.0
        %v6193 = vmax.f32 %v6173, 0.0
        %v6194 = vmax.f32 %v6176, 0.0
        %v6195 = vld [vmem:[#allocation3] sm:$0xff]
        %v6196 = vld [vmem:[#allocation3 + $0x8] sm:$0xff]
        %v6197 = vld [vmem:[#allocation3 + $0x10] sm:$0xff]
        %v6198 = vld [vmem:[#allocation3 + $0x18] sm:$0xff]
        %v6199 = vld [vmem:[#allocation3 + $0x20] sm:$0xff]
        %v6200 = vld [vmem:[#allocation3 + $0x28] sm:$0xff]
        %v6201 = vld [vmem:[#allocation3 + $0x30] sm:$0xff]
        %v6202 = vld [vmem:[#allocation3 + $0x38] sm:$0xff]
        %v6203 = vld [vmem:[#allocation3 + $0x40] sm:$0xff]
        %v6204 = vld [vmem:[#allocation3 + $0x48] sm:$0xff]
        %v6205 = vld [vmem:[#allocation3 + $0x50] sm:$0xff]
        %v6206 = vld [vmem:[#allocation3 + $0x58] sm:$0xff]
        %v6207 = vld [vmem:[#allocation3 + $0x60] sm:$0xff]
        %v6208 = vld [vmem:[#allocation3 + $0x68] sm:$0xff]
        %v6209 = vld [vmem:[#allocation3 + $0x70] sm:$0xff]
        %v6210 = vld [vmem:[#allocation3 + $0x78] sm:$0xff]
        %v6211 = vpack.c.bf16 %v6180, %v6179
        %v6212 = vpack.c.bf16 %v6182, %v6181
        %v6213 = vpack.c.bf16 %v6184, %v6183
        %v6214 = vpack.c.bf16 %v6186, %v6185
        %v6215 = vpack.c.bf16 %v6188, %v6187
        %v6216 = vpack.c.bf16 %v6190, %v6189
        %v6217 = vpack.c.bf16 %v6192, %v6191
        %v6218 = vpack.c.bf16 %v6194, %v6193
        %s6219 = scalar_lea.vmem [#allocation10], 256
        %v6220 = vld [vmem:[%s6219] sm:$0xf]
        %v6221 = vld [vmem:[%s6219 + $0x4] sm:$0xf]
        %v6222 = vld [vmem:[%s6219 + $0x8] sm:$0xf]
        %v6223 = vld [vmem:[%s6219 + $0xc] sm:$0xf]
        %v6224 = vld [vmem:[%s6219 + $0x10] sm:$0xf]
        %v6225 = vld [vmem:[%s6219 + $0x14] sm:$0xf]
        %v6226 = vld [vmem:[%s6219 + $0x18] sm:$0xf]
        %v6227 = vld [vmem:[%s6219 + $0x1c] sm:$0xf]
        %v6228 = vld [vmem:[%s6219 + $0x20] sm:$0xf]
        %v6229 = vld [vmem:[%s6219 + $0x24] sm:$0xf]
        %v6230 = vld [vmem:[%s6219 + $0x28] sm:$0xf]
        %v6231 = vld [vmem:[%s6219 + $0x2c] sm:$0xf]
        %v6232 = vld [vmem:[%s6219 + $0x30] sm:$0xf]
        %v6233 = vld [vmem:[%s6219 + $0x34] sm:$0xf]
        %v6234 = vld [vmem:[%s6219 + $0x38] sm:$0xf]
        %v6235 = vld [vmem:[%s6219 + $0x3c] sm:$0xf]
        %v6252 = vunpack.c.l.b16 %v6220
        %v6253 = vunpack.c.l.b16 %v6221
        %v6254 = vunpack.c.l.b16 %v6222
        %v6255 = vunpack.c.l.b16 %v6223
        %v6256 = vunpack.c.l.b16 %v6224
        %v6257 = vunpack.c.l.b16 %v6225
        %v6258 = vunpack.c.l.b16 %v6226
        %v6259 = vunpack.c.l.b16 %v6227
        %v6260 = vunpack.c.l.b16 %v6228
        %v6261 = vunpack.c.l.b16 %v6229
        %v6262 = vunpack.c.l.b16 %v6230
        %v6263 = vunpack.c.l.b16 %v6231
        %v6264 = vunpack.c.l.b16 %v6232
        %v6265 = vunpack.c.l.b16 %v6233
        %v6266 = vunpack.c.l.b16 %v6234
        %v6267 = vunpack.c.l.b16 %v6235
        %v6268 = vpack.c.b16 %v6253, %v6252
        %v6269 = vpack.c.b16 %v6255, %v6254
        %v6270 = vpack.c.b16 %v6257, %v6256
        %v6271 = vpack.c.b16 %v6259, %v6258
        %v6272 = vpack.c.b16 %v6261, %v6260
        %v6273 = vpack.c.b16 %v6263, %v6262
        %v6274 = vpack.c.b16 %v6265, %v6264
        %v6275 = vpack.c.b16 %v6267, %v6266
        %6284 = vmatprep.subr.bf16.mxu0 0
        %6285 = vmatpush1.bf16.msra.mxu0 %v6268
        %6286 = vmatprep.subr.bf16.mxu0 0
        %6287 = vmatpush1.bf16.msra.mxu0 %v6269
        %6288 = vmatprep.subr.bf16.mxu0 0
        %6289 = vmatpush1.bf16.msra.mxu0 %v6270
        %6290 = vmatprep.subr.bf16.mxu0 0
        %6291 = vmatpush1.bf16.msra.mxu0 %v6271
        %6292 = vmatprep.subr.bf16.mxu0 0
        %6293 = vmatpush1.bf16.msra.mxu0 %v6272
        %6294 = vmatprep.subr.bf16.mxu0 0
        %6295 = vmatpush1.bf16.msra.mxu0 %v6273
        %6296 = vmatprep.subr.bf16.mxu0 0
        %6297 = vmatpush1.bf16.msra.mxu0 %v6274
        %6298 = vmatprep.subr.bf16.mxu0 0
        %6299 = vmatpush1.bf16.msra.mxu0 %v6275
        %6300 = vmatprep.subr.bf16.mxu0 0
        %6301 = vmatpush1.bf16.msra.mxu0 0
        %6302 = vmatprep.subr.bf16.mxu0 0
        %6303 = vmatpush1.bf16.msra.mxu0 0
        %6304 = vmatprep.subr.bf16.mxu0 0
        %6305 = vmatpush1.bf16.msra.mxu0 0
        %6306 = vmatprep.subr.bf16.mxu0 0
        %6307 = vmatpush1.bf16.msra.mxu0 0
        %6308 = vmatprep.subr.bf16.mxu0 0
        %6309 = vmatpush1.bf16.msra.mxu0 0
        %6310 = vmatprep.subr.bf16.mxu0 0
        %6311 = vmatpush1.bf16.msra.mxu0 0
        %6312 = vmatprep.subr.bf16.mxu0 0
        %6313 = vmatpush1.bf16.msra.mxu0 0
        %6314 = vmatprep.subr.bf16.mxu0 0
        %6315 = vmatpush1.bf16.msra.mxu0 0
        %6316 = vmatprep.mubr.bf16.mxu0 0
        %6317 = vmatmul.mubr.bf16.gmra.mrb[0].mxu0 %v6211
        %v6318 = vpop.f32.mrb[0].mxu0
        %v6319 = vadd.f32 0.0, %v6318
        %v6320 = vpop.f32.mrb[0].mxu0
        %v6321 = vpop.f32.mrb[0].mxu0
        %v6322 = vadd.f32 0.0, %v6321
        %v6323 = vpop.f32.mrb[0].mxu0
        %6324 = vmatprep.mubr.bf16.mxu0 0
        %6325 = vmatmul.mubr.bf16.gmra.mrb[0].mxu0 %v6212
        %v6326 = vpop.f32.mrb[0].mxu0
        %v6327 = vadd.f32 0.0, %v6326
        %v6328 = vpop.f32.mrb[0].mxu0
        %v6329 = vpop.f32.mrb[0].mxu0
        %v6330 = vadd.f32 0.0, %v6329
        %v6331 = vpop.f32.mrb[0].mxu0
        %6332 = vmatprep.mubr.bf16.mxu0 0
        %6333 = vmatmul.mubr.bf16.gmra.mrb[0].mxu0 %v6213
        %v6334 = vpop.f32.mrb[0].mxu0
        %v6335 = vadd.f32 0.0, %v6334
        %v6336 = vpop.f32.mrb[0].mxu0
        %v6337 = vpop.f32.mrb[0].mxu0
        %v6338 = vadd.f32 0.0, %v6337
        %v6339 = vpop.f32.mrb[0].mxu0
        %6340 = vmatprep.mubr.bf16.mxu0 0
        %6341 = vmatmul.mubr.bf16.gmra.mrb[0].mxu0 %v6214
        %v6342 = vpop.f32.mrb[0].mxu0
        %v6343 = vadd.f32 0.0, %v6342
        %v6344 = vpop.f32.mrb[0].mxu0
        %v6345 = vpop.f32.mrb[0].mxu0
        %v6346 = vadd.f32 0.0, %v6345
        %v6347 = vpop.f32.mrb[0].mxu0
        %6348 = vmatprep.mubr.bf16.mxu0 0
        %6349 = vmatmul.mubr.bf16.gmra.mrb[0].mxu0 %v6215
        %v6350 = vpop.f32.mrb[0].mxu0
        %v6351 = vadd.f32 0.0, %v6350
        %v6352 = vpop.f32.mrb[0].mxu0
        %v6353 = vpop.f32.mrb[0].mxu0
        %v6354 = vadd.f32 0.0, %v6353
        %v6355 = vpop.f32.mrb[0].mxu0
        %6356 = vmatprep.mubr.bf16.mxu0 0
        %6357 = vmatmul.mubr.bf16.gmra.mrb[0].mxu0 %v6216
        %v6358 = vpop.f32.mrb[0].mxu0
        %v6359 = vadd.f32 0.0, %v6358
        %v6360 = vpop.f32.mrb[0].mxu0
        %v6361 = vpop.f32.mrb[0].mxu0
        %v6362 = vadd.f32 0.0, %v6361
        %v6363 = vpop.f32.mrb[0].mxu0
        %6364 = vmatprep.mubr.bf16.mxu0 0
        %6365 = vmatmul.mubr.bf16.gmra.mrb[0].mxu0 %v6217
        %v6366 = vpop.f32.mrb[0].mxu0
        %v6367 = vadd.f32 0.0, %v6366
        %v6368 = vpop.f32.mrb[0].mxu0
        %v6369 = vpop.f32.mrb[0].mxu0
        %v6370 = vadd.f32 0.0, %v6369
        %v6371 = vpop.f32.mrb[0].mxu0
        %6372 = vmatprep.mubr.bf16.mxu0 0
        %6373 = vmatmul.mubr.bf16.gmra.mrb[0].mxu0 %v6218
        %v6374 = vpop.f32.mrb[0].mxu0
        %v6375 = vadd.f32 0.0, %v6374
        %v6376 = vpop.f32.mrb[0].mxu0
        %v6377 = vpop.f32.mrb[0].mxu0
        %v6378 = vadd.f32 0.0, %v6377
        %v6379 = vpop.f32.mrb[0].mxu0
        %6380 = vdwg.mxu0
        %v6381 = vadd.f32 %v6195, %v6319
        %v6382 = vadd.f32 %v6196, %v6322
        %v6383 = vadd.f32 %v6197, %v6327
        %v6384 = vadd.f32 %v6198, %v6330
        %v6385 = vadd.f32 %v6199, %v6335
        %v6386 = vadd.f32 %v6200, %v6338
        %v6387 = vadd.f32 %v6201, %v6343
        %v6388 = vadd.f32 %v6202, %v6346
        %v6389 = vadd.f32 %v6203, %v6351
        %v6390 = vadd.f32 %v6204, %v6354
        %v6391 = vadd.f32 %v6205, %v6359
        %v6392 = vadd.f32 %v6206, %v6362
        %v6393 = vadd.f32 %v6207, %v6367
        %v6394 = vadd.f32 %v6208, %v6370
        %v6395 = vadd.f32 %v6209, %v6375
        %v6396 = vadd.f32 %v6210, %v6378
        %6397 = vst [vmem:[#allocation3] sm:$0xff] %v6381
        %6398 = vst [vmem:[#allocation3 + $0x8] sm:$0xff] %v6382
        %6399 = vst [vmem:[#allocation3 + $0x10] sm:$0xff] %v6383
        %6400 = vst [vmem:[#allocation3 + $0x18] sm:$0xff] %v6384
        %6401 = vst [vmem:[#allocation3 + $0x20] sm:$0xff] %v6385
        %6402 = vst [vmem:[#allocation3 + $0x28] sm:$0xff] %v6386
        %6403 = vst [vmem:[#allocation3 + $0x30] sm:$0xff] %v6387
        %6404 = vst [vmem:[#allocation3 + $0x38] sm:$0xff] %v6388
        %6405 = vst [vmem:[#allocation3 + $0x40] sm:$0xff] %v6389
        %6406 = vst [vmem:[#allocation3 + $0x48] sm:$0xff] %v6390
        %6407 = vst [vmem:[#allocation3 + $0x50] sm:$0xff] %v6391
        %6408 = vst [vmem:[#allocation3 + $0x58] sm:$0xff] %v6392
        %6409 = vst [vmem:[#allocation3 + $0x60] sm:$0xff] %v6393
        %6410 = vst [vmem:[#allocation3 + $0x68] sm:$0xff] %v6394
        %6411 = vst [vmem:[#allocation3 + $0x70] sm:$0xff] %v6395
        %6412 = vst [vmem:[#allocation3 + $0x78] sm:$0xff] %v6396
        %v6413 = vld [vmem:[#allocation3] sm:$0xff]
        %v6414 = vld [vmem:[#allocation3 + $0x8] sm:$0xff]
        %v6415 = vld [vmem:[#allocation3 + $0x10] sm:$0xff]
        %v6416 = vld [vmem:[#allocation3 + $0x18] sm:$0xff]
        %v6417 = vld [vmem:[#allocation3 + $0x20] sm:$0xff]
        %v6418 = vld [vmem:[#allocation3 + $0x28] sm:$0xff]
        %v6419 = vld [vmem:[#allocation3 + $0x30] sm:$0xff]
        %v6420 = vld [vmem:[#allocation3 + $0x38] sm:$0xff]
        %v6421 = vld [vmem:[#allocation3 + $0x40] sm:$0xff]
        %v6422 = vld [vmem:[#allocation3 + $0x48] sm:$0xff]
        %v6423 = vld [vmem:[#allocation3 + $0x50] sm:$0xff]
        %v6424 = vld [vmem:[#allocation3 + $0x58] sm:$0xff]
        %v6425 = vld [vmem:[#allocation3 + $0x60] sm:$0xff]
        %v6426 = vld [vmem:[#allocation3 + $0x68] sm:$0xff]
        %v6427 = vld [vmem:[#allocation3 + $0x70] sm:$0xff]
        %v6428 = vld [vmem:[#allocation3 + $0x78] sm:$0xff]
        %v6429 = vld [vmem:[%s7] sm:$0x1]
        %v6431 = vlaneseq
        %v6432 = vshrl.u32 %v6431, 7
        %v6433 = vsub.s32 0, %v6432
        %v6434 = vrot.slane %v6429, %v6433
        %v6436 = vadd.f32 %v6413, %v6434
        %v6437 = vadd.f32 %v6414, %v6434
        %v6438 = vadd.f32 %v6415, %v6434
        %v6439 = vadd.f32 %v6416, %v6434
        %v6440 = vadd.f32 %v6417, %v6434
        %v6441 = vadd.f32 %v6418, %v6434
        %v6442 = vadd.f32 %v6419, %v6434
        %v6443 = vadd.f32 %v6420, %v6434
        %v6444 = vadd.f32 %v6421, %v6434
        %v6445 = vadd.f32 %v6422, %v6434
        %v6446 = vadd.f32 %v6423, %v6434
        %v6447 = vadd.f32 %v6424, %v6434
        %v6448 = vadd.f32 %v6425, %v6434
        %v6449 = vadd.f32 %v6426, %v6434
        %v6450 = vadd.f32 %v6427, %v6434
        %v6451 = vadd.f32 %v6428, %v6434
        %v6452 = vmax.f32 %v6436, 0.0
        %v6453 = vmax.f32 %v6437, 0.0
        %v6454 = vmax.f32 %v6438, 0.0
        %v6455 = vmax.f32 %v6439, 0.0
        %v6456 = vmax.f32 %v6440, 0.0
        %v6457 = vmax.f32 %v6441, 0.0
        %v6458 = vmax.f32 %v6442, 0.0
        %v6459 = vmax.f32 %v6443, 0.0
        %v6460 = vmax.f32 %v6444, 0.0
        %v6461 = vmax.f32 %v6445, 0.0
        %v6462 = vmax.f32 %v6446, 0.0
        %v6463 = vmax.f32 %v6447, 0.0
        %v6464 = vmax.f32 %v6448, 0.0
        %v6465 = vmax.f32 %v6449, 0.0
        %v6466 = vmax.f32 %v6450, 0.0
        %v6467 = vmax.f32 %v6451, 0.0
        %6468 = vst [vmem:[%s345] sm:$0xff] %v6452
        %6469 = vst [vmem:[%s345 + $0x8] sm:$0xff] %v6453
        %6470 = vst [vmem:[%s345 + $0x10] sm:$0xff] %v6454
        %6471 = vst [vmem:[%s345 + $0x18] sm:$0xff] %v6455
        %6472 = vst [vmem:[%s345 + $0x20] sm:$0xff] %v6456
        %6473 = vst [vmem:[%s345 + $0x28] sm:$0xff] %v6457
        %6474 = vst [vmem:[%s345 + $0x30] sm:$0xff] %v6458
        %6475 = vst [vmem:[%s345 + $0x38] sm:$0xff] %v6459
        %6476 = vst [vmem:[%s345 + $0x40] sm:$0xff] %v6460
        %6477 = vst [vmem:[%s345 + $0x48] sm:$0xff] %v6461
        %6478 = vst [vmem:[%s345 + $0x50] sm:$0xff] %v6462
        %6479 = vst [vmem:[%s345 + $0x58] sm:$0xff] %v6463
        %6480 = vst [vmem:[%s345 + $0x60] sm:$0xff] %v6464
        %6481 = vst [vmem:[%s345 + $0x68] sm:$0xff] %v6465
        %6482 = vst [vmem:[%s345 + $0x70] sm:$0xff] %v6466
        %6483 = vst [vmem:[%s345 + $0x78] sm:$0xff] %v6467
        %s6484 = sand.u32 %s202, 1
        %s6485 = scalar_lea.sflag [#allocation7], %s6484
        %s6486 = sand.u32 %s202, 1
        %s6487 = smul.addr %s6486, 128
        %s6488 = scalar_lea.vmem [#allocation11], %s6487
        // Predicated region
        $region77: #{tpu_custom_call.1} parent=47 // pred_check
          %p6489 = pneg %p212
        $region78: #{tpu_custom_call.1} parent=47 // pred_check_branch
          %6491 = sbr.rel (%p6489) target = $region80
        $region79: #{tpu_custom_call.1} parent=47 // pred_region
          %s6492 = smul.u32 8, %s31
          %s6494 = ssub.s32 2048, 2048
          %6495 = vsyncadd %s6485, %s6494
          %s6496 = smul.addr %s6492, 2
          %s6497 = smul.addr %s30, 32
          %s6498 = sadd.s32 %s6496, %s6497
          %s6499 = smul.addr %s6498, 128
          %s6500 = scalar_lea.hbm %s8, %s6499
          %s6501 = sshll.u32 %s6488, 4
          %s6502 = int_to_ptr.vmem [resolvable:$true] %s6501
          %6507 = dma.vmem_to_hbm [thread:$0]  %s6502, 2048, %s6500, %s6485, 128, 128, 8
        $region80: #{tpu_custom_call.1} parent=47 // pred_fallthru
          _
      $region48: #{tpu_custom_call.1} parent=5 // pred_fallthru
        _
      %p6508 = scmp.le.s32.totalorder 2, %s21
      // Predicated region
      $region81: #{tpu_custom_call.1} parent=5 // pred_check
        %p6509 = pneg %p6508
      $region82: #{tpu_custom_call.1} parent=5 // pred_check_branch
        %6511 = sbr.rel (%p6509) target = $region84
      $region83: #{tpu_custom_call.1} parent=5 // pred_region
        %s6512 = ssub.s32 %s21, 2
        // Predicated region
        $region85: #{tpu_custom_call.1} parent=83 // pred_check
          %p6513 = pneg %p218
        $region86: #{tpu_custom_call.1} parent=83 // pred_check_branch
          %6515 = sbr.rel (%p6513) target = $region88
        $region87: #{tpu_custom_call.1} parent=83 // pred_region
          %s6516 = sand.u32 %s203, 1
          %s6517 = scalar_lea.sflag [#allocation7], %s6516
          %s6518 = sand.u32 %s203, 1
          %s6519 = smul.addr %s6518, 128
          %s6520 = scalar_lea.vmem [#allocation11], %s6519
          %6521 = dma.done %s6517, 2048
        $region88: #{tpu_custom_call.1} parent=83 // pred_fallthru
          _
      $region84: #{tpu_custom_call.1} parent=5 // pred_fallthru
        _
    $region6: #{tpu_custom_call.1} parent=1 // loop_footer
      %s25 = sadd.s32 1, %s21
    $region7: #{tpu_custom_call.1} parent=1 // loop_footer_branch
      %20 = sbr.rel target = $region3
    $region8: #{tpu_custom_call.1} parent=1 // loop_exit
      _
    %6522 = vsyncpa [#allocation6], 1
    %s6523 = scalar_lea.sflag [#allocation6], 1
    %6524 = vsyncpa %s6523, 1
    %6525 = vsyncpa [#allocation9], 1
    %6526 = vsyncpa [#allocation7], 1
    %s6527 = scalar_lea.sflag [#allocation7], 1
    %6528 = vsyncpa %s6527, 1
  %6529 = vsyncmov [#allocation4]
  %s6530 = vpop.sfrf %6529
  %p6531 = scmp.eq.s32.totalorder %s6530, 0
  %p6532 = pneg %p6531
  %6534 = shalt.err (%p6532)
  %s6535 = scalar_lea.sflag [#allocation4], 1
  %6536 = vsyncmov %s6535
  %s6537 = vpop.sfrf %6536
  %p6538 = scmp.eq.s32.totalorder %s6537, 0
  %p6539 = pneg %p6538
  %6541 = shalt.err (%p6539)

</llo_original>
